<compile_context>
chip_gen: v6e
topology: v6e:2x2x1
jax: 0.10.0
libtpu: 0.0.40
codegen_flags: <defaults>
</compile_context>

<pallas_src>
import functools
import math

import jax
import jax.numpy as jnp
from jax import lax
from jax.experimental import pallas as pl
from jax.experimental.pallas import tpu as pltpu


# Fixed architecture hyper-parameters of CNN3D_Regression.
CH1, CH2 = 32, 48
K1, K2 = (5, 5, 5), (3, 3, 3)
S1, S2 = (2, 2, 2), (2, 2, 2)
BN_EPS = 1e-5


def conv3d_output_size(in_size, pad, kernel, stride):
    return tuple(
        (in_size[i] + 2 * pad[i] - kernel[i]) // stride[i] + 1 for i in range(3)
    )


def _round_up(x, m):
    return ((x + m - 1) // m) * m


# Whole-array-in-VMEM spec: total working set < 1 MiB, no grid needed.
_VMEM = pl.BlockSpec(memory_space=pltpu.MemorySpace.VMEM)


# ----------------------------------------------------------------------------
# Single fused kernel:
#   conv1(+BN1+ReLU) -> conv2(+BN2+ReLU) -> flatten -> fc1+ReLU -> fc2+ReLU -> fc3
#
# p1 rows are ordered (conv2_tap, conv2_pos, batch), so:
#   * conv1 is one big matmul (rows x 128) @ (128 x 32); bias/BN-shift folded
#     into the weight via the all-ones column of p1.
#   * conv2 is a sum over taps of aligned static row-slices of y1 against
#     per-tap (32,48) weight slices, accumulated in vregs.
#   * fc1 consumes the (pos, batch)-ordered conv2 output with weight rows
#     pre-reordered to (pos, channel), so the NCDHW flatten is just 8 slices.
# ----------------------------------------------------------------------------
def _fused_forward_kernel(p1_ref, w1_ref, w2_ref, s2_ref, w1fc_ref, b1_ref,
                          w2fc_ref, b2_ref, w3_ref, b3_ref, o_ref,
                          y1_ref, y2_ref,
                          *, n_taps, n_pos, batch, ch1, ch2, h1):
    rpt = n_pos * batch  # rows per conv2 tap (n_pos=8 => always a multiple of 8)

    # conv1 + bn1 + relu (conv bias & BN shift folded into w1 via ones column).
    y1_ref[...] = jnp.maximum(
        jnp.dot(p1_ref[...], w1_ref[...], preferred_element_type=jnp.float32),
        0.0)

    # conv2 + bn2 + relu: sum over the n_taps kernel taps (vreg accumulation).
    acc2 = jnp.zeros((rpt, ch2), jnp.float32)
    for t in range(n_taps):  # static, unrolled; all slices aligned
        acc2 = acc2 + jnp.dot(
            y1_ref[t * rpt:(t + 1) * rpt, :],
            w2_ref[t * ch1:(t + 1) * ch1, :],
            preferred_element_type=jnp.float32)
    y2_ref[...] = jnp.maximum(acc2 + s2_ref[...], 0.0)   # rows: (pos, batch)

    # fc1 over the NCDHW flatten, expressed as a sum over conv2 positions.
    acc1 = jnp.zeros((batch, h1), jnp.float32)
    for p in range(n_pos):  # static, unrolled
        acc1 = acc1 + jnp.dot(
            y2_ref[p * batch:(p + 1) * batch, :],
            w1fc_ref[p * ch2:(p + 1) * ch2, :],
            preferred_element_type=jnp.float32)
    x = jnp.maximum(acc1 + b1_ref[...], 0.0)              # (batch, h1)

    # fc2 + ReLU.
    x = jnp.maximum(
        jnp.dot(x, w2fc_ref[...], preferred_element_type=jnp.float32)
        + b2_ref[...], 0.0)                               # (batch, h2)

    # fc3 (single output): row-wise weighted lane reduction (avoids N=1 matmul).
    y3 = jnp.sum(x * w3_ref[...], axis=1, keepdims=True) + b3_ref[...]

    # Lane-dense store; wrapper slices [:, :1].
    o_ref[...] = jnp.broadcast_to(y3, o_ref.shape)


def fused_forward_call(p1_dup, prep, *, n_taps, n_pos, batch):
    h1 = prep["fc1_b"].shape[1]
    h2 = prep["fc2_b"].shape[1]
    rpt = n_pos * batch
    args = (p1_dup, prep["w1"], prep["w2"], prep["shift2"],
            prep["fc1_w"], prep["fc1_b"], prep["fc2_w"], prep["fc2_b"],
            prep["fc3_w"], prep["fc3_b"])
    flops = (2 * p1_dup.shape[0] * p1_dup.shape[1] * CH1
             + 2 * n_taps * rpt * CH1 * CH2
             + 2 * n_pos * batch * CH2 * h1
             + 2 * batch * h1 * h2
             + 2 * batch * h2)
    bytes_accessed = 4 * (sum(int(a.size) for a in args) + batch * 128)
    kernel = functools.partial(
        _fused_forward_kernel, n_taps=n_taps, n_pos=n_pos, batch=batch,
        ch1=CH1, ch2=CH2, h1=h1)
    return pl.pallas_call(
        kernel,
        out_shape=jax.ShapeDtypeStruct((batch, 128), jnp.float32),
        in_specs=[_VMEM] * len(args),
        out_specs=_VMEM,
        scratch_shapes=[
            pltpu.VMEM((n_taps * rpt, CH1), jnp.float32),   # y1 (post conv1+relu)
            pltpu.VMEM((rpt, CH2), jnp.float32),            # y2 (post conv2+relu)
        ],
        cost_estimate=pl.CostEstimate(
            flops=flops, transcendentals=0, bytes_accessed=bytes_accessed),
    )(*args)


# ----------------------------------------------------------------------------
# Parameter init (deterministic, PyTorch-default-like uniform bounds)
# ----------------------------------------------------------------------------
def init_params(key, t_dim, img_x, img_y, fc_hidden1, fc_hidden2):
    conv1_out = conv3d_output_size((t_dim, img_x, img_y), (0, 0, 0), K1, S1)
    conv2_out = conv3d_output_size(conv1_out, (0, 0, 0), K2, S2)
    flat = CH2 * conv2_out[0] * conv2_out[1] * conv2_out[2]

    keys = jax.random.split(key, 10)

    def uni(k, shape, fan_in):
        bound = 1.0 / math.sqrt(fan_in)
        return jax.random.uniform(k, shape, jnp.float32, -bound, bound)

    p = {}
    fan1 = 1 * math.prod(K1)
    p["conv1_w"] = uni(keys[0], (CH1, 1) + K1, fan1)
    p["conv1_b"] = uni(keys[1], (CH1,), fan1)
    p["bn1_gamma"] = jnp.ones((CH1,), jnp.float32)
    p["bn1_beta"] = jnp.zeros((CH1,), jnp.float32)
    p["bn1_mean"] = jnp.zeros((CH1,), jnp.float32)
    p["bn1_var"] = jnp.ones((CH1,), jnp.float32)

    fan2 = CH1 * math.prod(K2)
    p["conv2_w"] = uni(keys[2], (CH2, CH1) + K2, fan2)
    p["conv2_b"] = uni(keys[3], (CH2,), fan2)
    p["bn2_gamma"] = jnp.ones((CH2,), jnp.float32)
    p["bn2_beta"] = jnp.zeros((CH2,), jnp.float32)
    p["bn2_mean"] = jnp.zeros((CH2,), jnp.float32)
    p["bn2_var"] = jnp.ones((CH2,), jnp.float32)

    p["fc1_w"] = uni(keys[4], (fc_hidden1, flat), flat)
    p["fc1_b"] = uni(keys[5], (fc_hidden1,), flat)
    p["fc2_w"] = uni(keys[6], (fc_hidden2, fc_hidden1), fc_hidden1)
    p["fc2_b"] = uni(keys[7], (fc_hidden2,), fc_hidden1)
    p["fc3_w"] = uni(keys[8], (1, fc_hidden2), fc_hidden2)
    p["fc3_b"] = uni(keys[9], (1,), fc_hidden2)
    return p, conv1_out, conv2_out


# ----------------------------------------------------------------------------
# One-time inference prep: fold eval-mode BN (and the conv1 bias) into the
# weight matrices, transpose / reorder / zero-pad everything the kernel needs.
# ----------------------------------------------------------------------------
def prepare_inference_params(params, conv2_out, eps=BN_EPS):
    prep = {}

    # conv1: (Cout, Cin, kt, kh, kw) -> (K, Cout), BN scale folded into columns,
    # K padded to a lane multiple; row k1 carries the shift (bias+BN) and is hit
    # by the all-ones column appended to the patch matrix.
    k1 = 1 * math.prod(K1)
    pk1 = _round_up(k1 + 1, 128)
    scale1 = params["bn1_gamma"] / jnp.sqrt(params["bn1_var"] + eps)
    shift1 = scale1 * (params["conv1_b"] - params["bn1_mean"]) + params["bn1_beta"]
    w1mat = params["conv1_w"].reshape(CH1, k1).T * scale1[None, :]
    w1 = jnp.zeros((pk1, CH1), jnp.float32)
    prep["w1"] = w1.at[:k1, :].set(w1mat).at[k1, :].set(shift1)

    # conv2: per-tap (Cin, Cout) weight slices stacked tap-major; BN2 scale folded.
    n_taps = math.prod(K2)
    scale2 = params["bn2_gamma"] / jnp.sqrt(params["bn2_var"] + eps)
    shift2 = scale2 * (params["conv2_b"] - params["bn2_mean"]) + params["bn2_beta"]
    w2 = params["conv2_w"].transpose(2, 3, 4, 1, 0).reshape(n_taps * CH1, CH2)
    prep["w2"] = (w2 * scale2[None, :]).astype(jnp.float32)
    prep["shift2"] = shift2.reshape(1, CH2)

    # fc1: reorder input columns from PyTorch's NCDHW flatten (c, pos) to
    # (pos, c) so the (pos, batch)-ordered conv2 output feeds it without any
    # transpose, then transpose to (in, out).
    n_pos = math.prod(conv2_out)
    h1 = params["fc1_w"].shape[0]
    w1fc = params["fc1_w"].reshape(h1, CH2, n_pos)            # [j, c, pos]
    prep["fc1_w"] = w1fc.transpose(2, 1, 0).reshape(n_pos * CH2, h1)  # row = pos*CH2 + c
    prep["fc1_b"] = params["fc1_b"].reshape(1, h1)

    prep["fc2_w"] = params["fc2_w"].T                         # (h1, h2)
    prep["fc2_b"] = params["fc2_b"].reshape(1, -1)
    prep["fc3_w"] = params["fc3_w"].reshape(1, -1)            # (1, h2) row vector
    prep["fc3_b"] = params["fc3_b"].reshape(1, 1)
    return prep


# ----------------------------------------------------------------------------
# Forward pass (mirrors CNN3D_Regression.forward, inference mode, drop_p=0)
# ----------------------------------------------------------------------------
@jax.jit
def cnn3d_regression_forward(prep, x_3d):
    B, cin, T, H, W = x_3d.shape
    c1 = conv3d_output_size((T, H, W), (0, 0, 0), K1, S1)
    c2 = conv3d_output_size(c1, (0, 0, 0), K2, S2)
    n_taps = math.prod(K2)
    n_pos = math.prod(c2)
    k1 = cin * math.prod(K1)
    pk1 = prep["w1"].shape[0]

    # conv1 im2col as a single XLA op; patch features ordered (cin, kt, kh, kw),
    # matching the PyTorch weight flatten used in prepare_inference_params.
    p1 = lax.conv_general_dilated_patches(x_3d, K1, S1, "VALID")  # (B, k1, *c1)
    p1 = p1.transpose(0, 2, 3, 4, 1).reshape(B, math.prod(c1), k1)

    # Gather the conv1-output position each (conv2 tap, conv2 position) pair
    # needs, in (tap, pos2, batch) row order, so the conv2 taps and the NCDHW
    # flatten feeding fc1 become static aligned slices inside the kernel.
    idx = []
    for kt in range(K2[0]):
        for kh in range(K2[1]):
            for kw in range(K2[2]):
                for dt in range(c2[0]):
                    for dh in range(c2[1]):
                        for dw in range(c2[2]):
                            idx.append(
                                ((S2[0] * dt + kt) * c1[1] + (S2[1] * dh + kh))
                                * c1[2] + (S2[2] * dw + kw))
    idx = jnp.asarray(idx, dtype=jnp.int32)                   # (n_taps * n_pos,)

    p1_dup = jnp.take(p1, idx, axis=1)                        # (B, taps*pos, k1)
    p1_dup = p1_dup.transpose(1, 0, 2).reshape(n_taps * n_pos * B, k1)
    # Pad K to the lane multiple; first padded column is the all-ones bias column.
    pad = jnp.zeros((p1_dup.shape[0], pk1 - k1), jnp.float32).at[:, 0].set(1.0)
    p1_dup = jnp.concatenate([p1_dup, pad], axis=1)           # (taps*pos*B, pk1)

    out = fused_forward_call(p1_dup, prep, n_taps=n_taps, n_pos=n_pos, batch=B)
    return out[:, :1]


# ----------------------------------------------------------------------------
# Pure-JAX reference (mirrors the PyTorch module directly) for a sanity check.
# ----------------------------------------------------------------------------
def reference_forward(params, x_3d, eps=BN_EPS):
    def conv_bn_relu(x, w, b, gamma, beta, mean, var, stride):
        y = lax.conv_general_dilated(
            x, w, window_strides=stride, padding="VALID",
            dimension_numbers=("NCDHW", "OIDHW", "NCDHW"))
        y = y + b.reshape(1, -1, 1, 1, 1)
        inv = gamma / jnp.sqrt(var + eps)
        y = inv.reshape(1, -1, 1, 1, 1) * (y - mean.reshape(1, -1, 1, 1, 1)) \
            + beta.reshape(1, -1, 1, 1, 1)
        return jnp.maximum(y, 0.0)

    x = conv_bn_relu(x_3d, params["conv1_w"], params["conv1_b"],
                     params["bn1_gamma"], params["bn1_beta"],
                     params["bn1_mean"], params["bn1_var"], S1)
    x = conv_bn_relu(x, params["conv2_w"], params["conv2_b"],
                     params["bn2_gamma"], params["bn2_beta"],
                     params["bn2_mean"], params["bn2_var"], S2)
    x = x.reshape(x.shape[0], -1)
    x = jnp.maximum(x @ params["fc1_w"].T + params["fc1_b"], 0.0)
    x = jnp.maximum(x @ params["fc2_w"].T + params["fc2_b"], 0.0)
    return x @ params["fc3_w"].T + params["fc3_b"]


if __name__ == "__main__":
    # Small, consistent shapes: t_dim=14, img_x=16, img_y=16, fc_hidden=32, batch=2.
    B, t_dim, img_x, img_y = 2, 14, 16, 16
    fc_hidden1 = fc_hidden2 = 32

    key = jax.random.PRNGKey(0)
    k_param, k_input = jax.random.split(key)
    params, conv1_out, conv2_out = init_params(
        k_param, t_dim, img_x, img_y, fc_hidden1, fc_hidden2)
    prep = prepare_inference_params(params, conv2_out)

    # layout: NCDHW input, Cin=1 (same as the PyTorch module).
    x_3d = jax.random.normal(k_input, (B, 1, t_dim, img_x, img_y), jnp.float32)

    out = cnn3d_regression_forward(prep, x_3d)
    out = jax.block_until_ready(out)
    assert out.shape == (B, 1), out.shape
    assert bool(jnp.all(jnp.isfinite(out)))

    # Numerical sanity check against a pure-JAX implementation of the module
    # (tolerance tightened for the all-f32 path, per review).
    ref = jax.block_until_ready(reference_forward(params, x_3d))
    assert bool(jnp.allclose(out, ref, rtol=1e-4, atol=1e-4)), (out, ref)

    print("KERNEL_OK")
</pallas_src>

<mosaic_0001>
module attributes {stable_mosaic.version = 11 : i64} {
  func.func @_fused_forward_kernel(%arg0: memref<432x128xf32, #tpu.memory_space<vmem>>, %arg1: memref<128x32xf32, #tpu.memory_space<vmem>>, %arg2: memref<864x48xf32, #tpu.memory_space<vmem>>, %arg3: memref<1x48xf32, #tpu.memory_space<vmem>>, %arg4: memref<384x32xf32, #tpu.memory_space<vmem>>, %arg5: memref<1x32xf32, #tpu.memory_space<vmem>>, %arg6: memref<32x32xf32, #tpu.memory_space<vmem>>, %arg7: memref<1x32xf32, #tpu.memory_space<vmem>>, %arg8: memref<1x32xf32, #tpu.memory_space<vmem>>, %arg9: memref<1x1xf32, #tpu.memory_space<vmem>>, %arg10: memref<2x128xf32, #tpu.memory_space<vmem>>, %arg11: memref<432x32xf32, #tpu.memory_space<vmem>>, %arg12: memref<16x48xf32, #tpu.memory_space<vmem>>) attributes {dimension_semantics = [], scalar_prefetch = 0 : i64, scratch_operands = 2 : i64, tpu.core_type = #tpu.core_type<tc>} {
    %c0 = arith.constant 0 : index
    %c0_0 = arith.constant 0 : index
    %0 = vector.load %arg0[%c0, %c0_0] : memref<432x128xf32, #tpu.memory_space<vmem>>, vector<432x128xf32>
    %c0_1 = arith.constant 0 : index
    %c0_2 = arith.constant 0 : index
    %1 = vector.load %arg1[%c0_1, %c0_2] : memref<128x32xf32, #tpu.memory_space<vmem>>, vector<128x32xf32>
    %cst = arith.constant dense<0.000000e+00> : vector<432x32xf32>
    %2 = tpu.matmul %0, %1, %cst {dimension_numbers = #tpu.dot_dimension_numbers<[1], [0], [0], [1], [0, 0, 1, 1], [], []>} : vector<432x128xf32>, vector<128x32xf32>, vector<432x32xf32> -> vector<432x32xf32>
    %cst_3 = arith.constant 0.000000e+00 : f32
    %3 = vector.broadcast %cst_3 : f32 to vector<432x32xf32>
    %4 = arith.maximumf %2, %3 : vector<432x32xf32>
    %c0_4 = arith.constant 0 : index
    %c0_5 = arith.constant 0 : index
    %5 = vector.load %arg11[%c0_4, %c0_5] : memref<432x32xf32, #tpu.memory_space<vmem>>, vector<432x32xf32>
    tpu.vector_store %arg11[%c0_4, %c0_5], %4 {strides = array<i32>} : memref<432x32xf32, #tpu.memory_space<vmem>>, vector<432x32xf32>,
    %cst_6 = arith.constant 0.000000e+00 : f32
    %6 = vector.broadcast %cst_6 : f32 to vector<16x48xf32>
    %c0_7 = arith.constant 0 : index
    %c0_8 = arith.constant 0 : index
    %7 = vector.load %arg11[%c0_7, %c0_8] : memref<432x32xf32, #tpu.memory_space<vmem>>, vector<16x32xf32>
    %c0_9 = arith.constant 0 : index
    %c0_10 = arith.constant 0 : index
    %8 = vector.load %arg2[%c0_9, %c0_10] : memref<864x48xf32, #tpu.memory_space<vmem>>, vector<32x48xf32>
    %cst_11 = arith.constant dense<0.000000e+00> : vector<16x48xf32>
    %9 = tpu.matmul %7, %8, %cst_11 {dimension_numbers = #tpu.dot_dimension_numbers<[1], [0], [0], [1], [0, 0, 1, 1], [], []>} : vector<16x32xf32>, vector<32x48xf32>, vector<16x48xf32> -> vector<16x48xf32>
    %10 = arith.addf %6, %9 : vector<16x48xf32>
    %c16 = arith.constant 16 : index
    %c0_12 = arith.constant 0 : index
    %11 = vector.load %arg11[%c16, %c0_12] : memref<432x32xf32, #tpu.memory_space<vmem>>, vector<16x32xf32>
    %c32 = arith.constant 32 : index
    %c0_13 = arith.constant 0 : index
    %12 = vector.load %arg2[%c32, %c0_13] : memref<864x48xf32, #tpu.memory_space<vmem>>, vector<32x48xf32>
    %cst_14 = arith.constant dense<0.000000e+00> : vector<16x48xf32>
    %13 = tpu.matmul %11, %12, %cst_14 {dimension_numbers = #tpu.dot_dimension_numbers<[1], [0], [0], [1], [0, 0, 1, 1], [], []>} : vector<16x32xf32>, vector<32x48xf32>, vector<16x48xf32> -> vector<16x48xf32>
    %14 = arith.addf %10, %13 : vector<16x48xf32>
    %c32_15 = arith.constant 32 : index
    %c0_16 = arith.constant 0 : index
    %15 = vector.load %arg11[%c32_15, %c0_16] : memref<432x32xf32, #tpu.memory_space<vmem>>, vector<16x32xf32>
    %c64 = arith.constant 64 : index
    %c0_17 = arith.constant 0 : index
    %16 = vector.load %arg2[%c64, %c0_17] : memref<864x48xf32, #tpu.memory_space<vmem>>, vector<32x48xf32>
    %cst_18 = arith.constant dense<0.000000e+00> : vector<16x48xf32>
    %17 = tpu.matmul %15, %16, %cst_18 {dimension_numbers = #tpu.dot_dimension_numbers<[1], [0], [0], [1], [0, 0, 1, 1], [], []>} : vector<16x32xf32>, vector<32x48xf32>, vector<16x48xf32> -> vector<16x48xf32>
    %18 = arith.addf %14, %17 : vector<16x48xf32>
    %c48 = arith.constant 48 : index
    %c0_19 = arith.constant 0 : index
    %19 = vector.load %arg11[%c48, %c0_19] : memref<432x32xf32, #tpu.memory_space<vmem>>, vector<16x32xf32>
    %c96 = arith.constant 96 : index
    %c0_20 = arith.constant 0 : index
    %20 = vector.load %arg2[%c96, %c0_20] : memref<864x48xf32, #tpu.memory_space<vmem>>, vector<32x48xf32>
    %cst_21 = arith.constant dense<0.000000e+00> : vector<16x48xf32>
    %21 = tpu.matmul %19, %20, %cst_21 {dimension_numbers = #tpu.dot_dimension_numbers<[1], [0], [0], [1], [0, 0, 1, 1], [], []>} : vector<16x32xf32>, vector<32x48xf32>, vector<16x48xf32> -> vector<16x48xf32>
    %22 = arith.addf %18, %21 : vector<16x48xf32>
    %c64_22 = arith.constant 64 : index
    %c0_23 = arith.constant 0 : index
    %23 = vector.load %arg11[%c64_22, %c0_23] : memref<432x32xf32, #tpu.memory_space<vmem>>, vector<16x32xf32>
    %c128 = arith.constant 128 : index
    %c0_24 = arith.constant 0 : index
    %24 = vector.load %arg2[%c128, %c0_24] : memref<864x48xf32, #tpu.memory_space<vmem>>, vector<32x48xf32>
    %cst_25 = arith.constant dense<0.000000e+00> : vector<16x48xf32>
    %25 = tpu.matmul %23, %24, %cst_25 {dimension_numbers = #tpu.dot_dimension_numbers<[1], [0], [0], [1], [0, 0, 1, 1], [], []>} : vector<16x32xf32>, vector<32x48xf32>, vector<16x48xf32> -> vector<16x48xf32>
    %26 = arith.addf %22, %25 : vector<16x48xf32>
    %c80 = arith.constant 80 : index
    %c0_26 = arith.constant 0 : index
    %27 = vector.load %arg11[%c80, %c0_26] : memref<432x32xf32, #tpu.memory_space<vmem>>, vector<16x32xf32>
    %c160 = arith.constant 160 : index
    %c0_27 = arith.constant 0 : index
    %28 = vector.load %arg2[%c160, %c0_27] : memref<864x48xf32, #tpu.memory_space<vmem>>, vector<32x48xf32>
    %cst_28 = arith.constant dense<0.000000e+00> : vector<16x48xf32>
    %29 = tpu.matmul %27, %28, %cst_28 {dimension_numbers = #tpu.dot_dimension_numbers<[1], [0], [0], [1], [0, 0, 1, 1], [], []>} : vector<16x32xf32>, vector<32x48xf32>, vector<16x48xf32> -> vector<16x48xf32>
    %30 = arith.addf %26, %29 : vector<16x48xf32>
    %c96_29 = arith.constant 96 : index
    %c0_30 = arith.constant 0 : index
    %31 = vector.load %arg11[%c96_29, %c0_30] : memref<432x32xf32, #tpu.memory_space<vmem>>, vector<16x32xf32>
    %c192 = arith.constant 192 : index
    %c0_31 = arith.constant 0 : index
    %32 = vector.load %arg2[%c192, %c0_31] : memref<864x48xf32, #tpu.memory_space<vmem>>, vector<32x48xf32>
    %cst_32 = arith.constant dense<0.000000e+00> : vector<16x48xf32>
    %33 = tpu.matmul %31, %32, %cst_32 {dimension_numbers = #tpu.dot_dimension_numbers<[1], [0], [0], [1], [0, 0, 1, 1], [], []>} : vector<16x32xf32>, vector<32x48xf32>, vector<16x48xf32> -> vector<16x48xf32>
    %34 = arith.addf %30, %33 : vector<16x48xf32>
    %c112 = arith.constant 112 : index
    %c0_33 = arith.constant 0 : index
    %35 = vector.load %arg11[%c112, %c0_33] : memref<432x32xf32, #tpu.memory_space<vmem>>, vector<16x32xf32>
    %c224 = arith.constant 224 : index
    %c0_34 = arith.constant 0 : index
    %36 = vector.load %arg2[%c224, %c0_34] : memref<864x48xf32, #tpu.memory_space<vmem>>, vector<32x48xf32>
    %cst_35 = arith.constant dense<0.000000e+00> : vector<16x48xf32>
    %37 = tpu.matmul %35, %36, %cst_35 {dimension_numbers = #tpu.dot_dimension_numbers<[1], [0], [0], [1], [0, 0, 1, 1], [], []>} : vector<16x32xf32>, vector<32x48xf32>, vector<16x48xf32> -> vector<16x48xf32>
    %38 = arith.addf %34, %37 : vector<16x48xf32>
    %c128_36 = arith.constant 128 : index
    %c0_37 = arith.constant 0 : index
    %39 = vector.load %arg11[%c128_36, %c0_37] : memref<432x32xf32, #tpu.memory_space<vmem>>, vector<16x32xf32>
    %c256 = arith.constant 256 : index
    %c0_38 = arith.constant 0 : index
    %40 = vector.load %arg2[%c256, %c0_38] : memref<864x48xf32, #tpu.memory_space<vmem>>, vector<32x48xf32>
    %cst_39 = arith.constant dense<0.000000e+00> : vector<16x48xf32>
    %41 = tpu.matmul %39, %40, %cst_39 {dimension_numbers = #tpu.dot_dimension_numbers<[1], [0], [0], [1], [0, 0, 1, 1], [], []>} : vector<16x32xf32>, vector<32x48xf32>, vector<16x48xf32> -> vector<16x48xf32>
    %42 = arith.addf %38, %41 : vector<16x48xf32>
    %c144 = arith.constant 144 : index
    %c0_40 = arith.constant 0 : index
    %43 = vector.load %arg11[%c144, %c0_40] : memref<432x32xf32, #tpu.memory_space<vmem>>, vector<16x32xf32>
    %c288 = arith.constant 288 : index
    %c0_41 = arith.constant 0 : index
    %44 = vector.load %arg2[%c288, %c0_41] : memref<864x48xf32, #tpu.memory_space<vmem>>, vector<32x48xf32>
    %cst_42 = arith.constant dense<0.000000e+00> : vector<16x48xf32>
    %45 = tpu.matmul %43, %44, %cst_42 {dimension_numbers = #tpu.dot_dimension_numbers<[1], [0], [0], [1], [0, 0, 1, 1], [], []>} : vector<16x32xf32>, vector<32x48xf32>, vector<16x48xf32> -> vector<16x48xf32>
    %46 = arith.addf %42, %45 : vector<16x48xf32>
    %c160_43 = arith.constant 160 : index
    %c0_44 = arith.constant 0 : index
    %47 = vector.load %arg11[%c160_43, %c0_44] : memref<432x32xf32, #tpu.memory_space<vmem>>, vector<16x32xf32>
    %c320 = arith.constant 320 : index
    %c0_45 = arith.constant 0 : index
    %48 = vector.load %arg2[%c320, %c0_45] : memref<864x48xf32, #tpu.memory_space<vmem>>, vector<32x48xf32>
    %cst_46 = arith.constant dense<0.000000e+00> : vector<16x48xf32>
    %49 = tpu.matmul %47, %48, %cst_46 {dimension_numbers = #tpu.dot_dimension_numbers<[1], [0], [0], [1], [0, 0, 1, 1], [], []>} : vector<16x32xf32>, vector<32x48xf32>, vector<16x48xf32> -> vector<16x48xf32>
    %50 = arith.addf %46, %49 : vector<16x48xf32>
    %c176 = arith.constant 176 : index
    %c0_47 = arith.constant 0 : index
    %51 = vector.load %arg11[%c176, %c0_47] : memref<432x32xf32, #tpu.memory_space<vmem>>, vector<16x32xf32>
    %c352 = arith.constant 352 : index
    %c0_48 = arith.constant 0 : index
    %52 = vector.load %arg2[%c352, %c0_48] : memref<864x48xf32, #tpu.memory_space<vmem>>, vector<32x48xf32>
    %cst_49 = arith.constant dense<0.000000e+00> : vector<16x48xf32>
    %53 = tpu.matmul %51, %52, %cst_49 {dimension_numbers = #tpu.dot_dimension_numbers<[1], [0], [0], [1], [0, 0, 1, 1], [], []>} : vector<16x32xf32>, vector<32x48xf32>, vector<16x48xf32> -> vector<16x48xf32>
    %54 = arith.addf %50, %53 : vector<16x48xf32>
    %c192_50 = arith.constant 192 : index
    %c0_51 = arith.constant 0 : index
    %55 = vector.load %arg11[%c192_50, %c0_51] : memref<432x32xf32, #tpu.memory_space<vmem>>, vector<16x32xf32>
    %c384 = arith.constant 384 : index
    %c0_52 = arith.constant 0 : index
    %56 = vector.load %arg2[%c384, %c0_52] : memref<864x48xf32, #tpu.memory_space<vmem>>, vector<32x48xf32>
    %cst_53 = arith.constant dense<0.000000e+00> : vector<16x48xf32>
    %57 = tpu.matmul %55, %56, %cst_53 {dimension_numbers = #tpu.dot_dimension_numbers<[1], [0], [0], [1], [0, 0, 1, 1], [], []>} : vector<16x32xf32>, vector<32x48xf32>, vector<16x48xf32> -> vector<16x48xf32>
    %58 = arith.addf %54, %57 : vector<16x48xf32>
    %c208 = arith.constant 208 : index
    %c0_54 = arith.constant 0 : index
    %59 = vector.load %arg11[%c208, %c0_54] : memref<432x32xf32, #tpu.memory_space<vmem>>, vector<16x32xf32>
    %c416 = arith.constant 416 : index
    %c0_55 = arith.constant 0 : index
    %60 = vector.load %arg2[%c416, %c0_55] : memref<864x48xf32, #tpu.memory_space<vmem>>, vector<32x48xf32>
    %cst_56 = arith.constant dense<0.000000e+00> : vector<16x48xf32>
    %61 = tpu.matmul %59, %60, %cst_56 {dimension_numbers = #tpu.dot_dimension_numbers<[1], [0], [0], [1], [0, 0, 1, 1], [], []>} : vector<16x32xf32>, vector<32x48xf32>, vector<16x48xf32> -> vector<16x48xf32>
    %62 = arith.addf %58, %61 : vector<16x48xf32>
    %c224_57 = arith.constant 224 : index
    %c0_58 = arith.constant 0 : index
    %63 = vector.load %arg11[%c224_57, %c0_58] : memref<432x32xf32, #tpu.memory_space<vmem>>, vector<16x32xf32>
    %c448 = arith.constant 448 : index
    %c0_59 = arith.constant 0 : index
    %64 = vector.load %arg2[%c448, %c0_59] : memref<864x48xf32, #tpu.memory_space<vmem>>, vector<32x48xf32>
    %cst_60 = arith.constant dense<0.000000e+00> : vector<16x48xf32>
    %65 = tpu.matmul %63, %64, %cst_60 {dimension_numbers = #tpu.dot_dimension_numbers<[1], [0], [0], [1], [0, 0, 1, 1], [], []>} : vector<16x32xf32>, vector<32x48xf32>, vector<16x48xf32> -> vector<16x48xf32>
    %66 = arith.addf %62, %65 : vector<16x48xf32>
    %c240 = arith.constant 240 : index
    %c0_61 = arith.constant 0 : index
    %67 = vector.load %arg11[%c240, %c0_61] : memref<432x32xf32, #tpu.memory_space<vmem>>, vector<16x32xf32>
    %c480 = arith.constant 480 : index
    %c0_62 = arith.constant 0 : index
    %68 = vector.load %arg2[%c480, %c0_62] : memref<864x48xf32, #tpu.memory_space<vmem>>, vector<32x48xf32>
    %cst_63 = arith.constant dense<0.000000e+00> : vector<16x48xf32>
    %69 = tpu.matmul %67, %68, %cst_63 {dimension_numbers = #tpu.dot_dimension_numbers<[1], [0], [0], [1], [0, 0, 1, 1], [], []>} : vector<16x32xf32>, vector<32x48xf32>, vector<16x48xf32> -> vector<16x48xf32>
    %70 = arith.addf %66, %69 : vector<16x48xf32>
    %c256_64 = arith.constant 256 : index
    %c0_65 = arith.constant 0 : index
    %71 = vector.load %arg11[%c256_64, %c0_65] : memref<432x32xf32, #tpu.memory_space<vmem>>, vector<16x32xf32>
    %c512 = arith.constant 512 : index
    %c0_66 = arith.constant 0 : index
    %72 = vector.load %arg2[%c512, %c0_66] : memref<864x48xf32, #tpu.memory_space<vmem>>, vector<32x48xf32>
    %cst_67 = arith.constant dense<0.000000e+00> : vector<16x48xf32>
    %73 = tpu.matmul %71, %72, %cst_67 {dimension_numbers = #tpu.dot_dimension_numbers<[1], [0], [0], [1], [0, 0, 1, 1], [], []>} : vector<16x32xf32>, vector<32x48xf32>, vector<16x48xf32> -> vector<16x48xf32>
    %74 = arith.addf %70, %73 : vector<16x48xf32>
    %c272 = arith.constant 272 : index
    %c0_68 = arith.constant 0 : index
    %75 = vector.load %arg11[%c272, %c0_68] : memref<432x32xf32, #tpu.memory_space<vmem>>, vector<16x32xf32>
    %c544 = arith.constant 544 : index
    %c0_69 = arith.constant 0 : index
    %76 = vector.load %arg2[%c544, %c0_69] : memref<864x48xf32, #tpu.memory_space<vmem>>, vector<32x48xf32>
    %cst_70 = arith.constant dense<0.000000e+00> : vector<16x48xf32>
    %77 = tpu.matmul %75, %76, %cst_70 {dimension_numbers = #tpu.dot_dimension_numbers<[1], [0], [0], [1], [0, 0, 1, 1], [], []>} : vector<16x32xf32>, vector<32x48xf32>, vector<16x48xf32> -> vector<16x48xf32>
    %78 = arith.addf %74, %77 : vector<16x48xf32>
    %c288_71 = arith.constant 288 : index
    %c0_72 = arith.constant 0 : index
    %79 = vector.load %arg11[%c288_71, %c0_72] : memref<432x32xf32, #tpu.memory_space<vmem>>, vector<16x32xf32>
    %c576 = arith.constant 576 : index
    %c0_73 = arith.constant 0 : index
    %80 = vector.load %arg2[%c576, %c0_73] : memref<864x48xf32, #tpu.memory_space<vmem>>, vector<32x48xf32>
    %cst_74 = arith.constant dense<0.000000e+00> : vector<16x48xf32>
    %81 = tpu.matmul %79, %80, %cst_74 {dimension_numbers = #tpu.dot_dimension_numbers<[1], [0], [0], [1], [0, 0, 1, 1], [], []>} : vector<16x32xf32>, vector<32x48xf32>, vector<16x48xf32> -> vector<16x48xf32>
    %82 = arith.addf %78, %81 : vector<16x48xf32>
    %c304 = arith.constant 304 : index
    %c0_75 = arith.constant 0 : index
    %83 = vector.load %arg11[%c304, %c0_75] : memref<432x32xf32, #tpu.memory_space<vmem>>, vector<16x32xf32>
    %c608 = arith.constant 608 : index
    %c0_76 = arith.constant 0 : index
    %84 = vector.load %arg2[%c608, %c0_76] : memref<864x48xf32, #tpu.memory_space<vmem>>, vector<32x48xf32>
    %cst_77 = arith.constant dense<0.000000e+00> : vector<16x48xf32>
    %85 = tpu.matmul %83, %84, %cst_77 {dimension_numbers = #tpu.dot_dimension_numbers<[1], [0], [0], [1], [0, 0, 1, 1], [], []>} : vector<16x32xf32>, vector<32x48xf32>, vector<16x48xf32> -> vector<16x48xf32>
    %86 = arith.addf %82, %85 : vector<16x48xf32>
    %c320_78 = arith.constant 320 : index
    %c0_79 = arith.constant 0 : index
    %87 = vector.load %arg11[%c320_78, %c0_79] : memref<432x32xf32, #tpu.memory_space<vmem>>, vector<16x32xf32>
    %c640 = arith.constant 640 : index
    %c0_80 = arith.constant 0 : index
    %88 = vector.load %arg2[%c640, %c0_80] : memref<864x48xf32, #tpu.memory_space<vmem>>, vector<32x48xf32>
    %cst_81 = arith.constant dense<0.000000e+00> : vector<16x48xf32>
    %89 = tpu.matmul %87, %88, %cst_81 {dimension_numbers = #tpu.dot_dimension_numbers<[1], [0], [0], [1], [0, 0, 1, 1], [], []>} : vector<16x32xf32>, vector<32x48xf32>, vector<16x48xf32> -> vector<16x48xf32>
    %90 = arith.addf %86, %89 : vector<16x48xf32>
    %c336 = arith.constant 336 : index
    %c0_82 = arith.constant 0 : index
    %91 = vector.load %arg11[%c336, %c0_82] : memref<432x32xf32, #tpu.memory_space<vmem>>, vector<16x32xf32>
    %c672 = arith.constant 672 : index
    %c0_83 = arith.constant 0 : index
    %92 = vector.load %arg2[%c672, %c0_83] : memref<864x48xf32, #tpu.memory_space<vmem>>, vector<32x48xf32>
    %cst_84 = arith.constant dense<0.000000e+00> : vector<16x48xf32>
    %93 = tpu.matmul %91, %92, %cst_84 {dimension_numbers = #tpu.dot_dimension_numbers<[1], [0], [0], [1], [0, 0, 1, 1], [], []>} : vector<16x32xf32>, vector<32x48xf32>, vector<16x48xf32> -> vector<16x48xf32>
    %94 = arith.addf %90, %93 : vector<16x48xf32>
    %c352_85 = arith.constant 352 : index
    %c0_86 = arith.constant 0 : index
    %95 = vector.load %arg11[%c352_85, %c0_86] : memref<432x32xf32, #tpu.memory_space<vmem>>, vector<16x32xf32>
    %c704 = arith.constant 704 : index
    %c0_87 = arith.constant 0 : index
    %96 = vector.load %arg2[%c704, %c0_87] : memref<864x48xf32, #tpu.memory_space<vmem>>, vector<32x48xf32>
    %cst_88 = arith.constant dense<0.000000e+00> : vector<16x48xf32>
    %97 = tpu.matmul %95, %96, %cst_88 {dimension_numbers = #tpu.dot_dimension_numbers<[1], [0], [0], [1], [0, 0, 1, 1], [], []>} : vector<16x32xf32>, vector<32x48xf32>, vector<16x48xf32> -> vector<16x48xf32>
    %98 = arith.addf %94, %97 : vector<16x48xf32>
    %c368 = arith.constant 368 : index
    %c0_89 = arith.constant 0 : index
    %99 = vector.load %arg11[%c368, %c0_89] : memref<432x32xf32, #tpu.memory_space<vmem>>, vector<16x32xf32>
    %c736 = arith.constant 736 : index
    %c0_90 = arith.constant 0 : index
    %100 = vector.load %arg2[%c736, %c0_90] : memref<864x48xf32, #tpu.memory_space<vmem>>, vector<32x48xf32>
    %cst_91 = arith.constant dense<0.000000e+00> : vector<16x48xf32>
    %101 = tpu.matmul %99, %100, %cst_91 {dimension_numbers = #tpu.dot_dimension_numbers<[1], [0], [0], [1], [0, 0, 1, 1], [], []>} : vector<16x32xf32>, vector<32x48xf32>, vector<16x48xf32> -> vector<16x48xf32>
    %102 = arith.addf %98, %101 : vector<16x48xf32>
    %c384_92 = arith.constant 384 : index
    %c0_93 = arith.constant 0 : index
    %103 = vector.load %arg11[%c384_92, %c0_93] : memref<432x32xf32, #tpu.memory_space<vmem>>, vector<16x32xf32>
    %c768 = arith.constant 768 : index
    %c0_94 = arith.constant 0 : index
    %104 = vector.load %arg2[%c768, %c0_94] : memref<864x48xf32, #tpu.memory_space<vmem>>, vector<32x48xf32>
    %cst_95 = arith.constant dense<0.000000e+00> : vector<16x48xf32>
    %105 = tpu.matmul %103, %104, %cst_95 {dimension_numbers = #tpu.dot_dimension_numbers<[1], [0], [0], [1], [0, 0, 1, 1], [], []>} : vector<16x32xf32>, vector<32x48xf32>, vector<16x48xf32> -> vector<16x48xf32>
    %106 = arith.addf %102, %105 : vector<16x48xf32>
    %c400 = arith.constant 400 : index
    %c0_96 = arith.constant 0 : index
    %107 = vector.load %arg11[%c400, %c0_96] : memref<432x32xf32, #tpu.memory_space<vmem>>, vector<16x32xf32>
    %c800 = arith.constant 800 : index
    %c0_97 = arith.constant 0 : index
    %108 = vector.load %arg2[%c800, %c0_97] : memref<864x48xf32, #tpu.memory_space<vmem>>, vector<32x48xf32>
    %cst_98 = arith.constant dense<0.000000e+00> : vector<16x48xf32>
    %109 = tpu.matmul %107, %108, %cst_98 {dimension_numbers = #tpu.dot_dimension_numbers<[1], [0], [0], [1], [0, 0, 1, 1], [], []>} : vector<16x32xf32>, vector<32x48xf32>, vector<16x48xf32> -> vector<16x48xf32>
    %110 = arith.addf %106, %109 : vector<16x48xf32>
    %c416_99 = arith.constant 416 : index
    %c0_100 = arith.constant 0 : index
    %111 = vector.load %arg11[%c416_99, %c0_100] : memref<432x32xf32, #tpu.memory_space<vmem>>, vector<16x32xf32>
    %c832 = arith.constant 832 : index
    %c0_101 = arith.constant 0 : index
    %112 = vector.load %arg2[%c832, %c0_101] : memref<864x48xf32, #tpu.memory_space<vmem>>, vector<32x48xf32>
    %cst_102 = arith.constant dense<0.000000e+00> : vector<16x48xf32>
    %113 = tpu.matmul %111, %112, %cst_102 {dimension_numbers = #tpu.dot_dimension_numbers<[1], [0], [0], [1], [0, 0, 1, 1], [], []>} : vector<16x32xf32>, vector<32x48xf32>, vector<16x48xf32> -> vector<16x48xf32>
    %114 = arith.addf %110, %113 : vector<16x48xf32>
    %c0_103 = arith.constant 0 : index
    %c0_104 = arith.constant 0 : index
    %115 = vector.load %arg3[%c0_103, %c0_104] : memref<1x48xf32, #tpu.memory_space<vmem>>, vector<1x48xf32>
    %116 = vector.broadcast %115 : vector<1x48xf32> to vector<16x48xf32>
    %117 = arith.addf %114, %116 : vector<16x48xf32>
    %cst_105 = arith.constant 0.000000e+00 : f32
    %118 = vector.broadcast %cst_105 : f32 to vector<16x48xf32>
    %119 = arith.maximumf %117, %118 : vector<16x48xf32>
    %c0_106 = arith.constant 0 : index
    %c0_107 = arith.constant 0 : index
    %120 = vector.load %arg12[%c0_106, %c0_107] : memref<16x48xf32, #tpu.memory_space<vmem>>, vector<16x48xf32>
    tpu.vector_store %arg12[%c0_106, %c0_107], %119 {strides = array<i32>} : memref<16x48xf32, #tpu.memory_space<vmem>>, vector<16x48xf32>,
    %cst_108 = arith.constant 0.000000e+00 : f32
    %121 = vector.broadcast %cst_108 : f32 to vector<2x32xf32>
    %c0_109 = arith.constant 0 : index
    %c0_110 = arith.constant 0 : index
    %122 = vector.load %arg12[%c0_109, %c0_110] : memref<16x48xf32, #tpu.memory_space<vmem>>, vector<2x48xf32>
    %c0_111 = arith.constant 0 : index
    %c0_112 = arith.constant 0 : index
    %123 = vector.load %arg4[%c0_111, %c0_112] : memref<384x32xf32, #tpu.memory_space<vmem>>, vector<48x32xf32>
    %cst_113 = arith.constant dense<0.000000e+00> : vector<2x32xf32>
    %124 = tpu.matmul %122, %123, %cst_113 {dimension_numbers = #tpu.dot_dimension_numbers<[1], [0], [0], [1], [0, 0, 1, 1], [], []>} : vector<2x48xf32>, vector<48x32xf32>, vector<2x32xf32> -> vector<2x32xf32>
    %125 = arith.addf %121, %124 : vector<2x32xf32>
    %c2 = arith.constant 2 : index
    %c0_114 = arith.constant 0 : index
    %126 = vector.load %arg12[%c2, %c0_114] : memref<16x48xf32, #tpu.memory_space<vmem>>, vector<2x48xf32>
    %c48_115 = arith.constant 48 : index
    %c0_116 = arith.constant 0 : index
    %127 = vector.load %arg4[%c48_115, %c0_116] : memref<384x32xf32, #tpu.memory_space<vmem>>, vector<48x32xf32>
    %cst_117 = arith.constant dense<0.000000e+00> : vector<2x32xf32>
    %128 = tpu.matmul %126, %127, %cst_117 {dimension_numbers = #tpu.dot_dimension_numbers<[1], [0], [0], [1], [0, 0, 1, 1], [], []>} : vector<2x48xf32>, vector<48x32xf32>, vector<2x32xf32> -> vector<2x32xf32>
    %129 = arith.addf %125, %128 : vector<2x32xf32>
    %c4 = arith.constant 4 : index
    %c0_118 = arith.constant 0 : index
    %130 = vector.load %arg12[%c4, %c0_118] : memref<16x48xf32, #tpu.memory_space<vmem>>, vector<2x48xf32>
    %c96_119 = arith.constant 96 : index
    %c0_120 = arith.constant 0 : index
    %131 = vector.load %arg4[%c96_119, %c0_120] : memref<384x32xf32, #tpu.memory_space<vmem>>, vector<48x32xf32>
    %cst_121 = arith.constant dense<0.000000e+00> : vector<2x32xf32>
    %132 = tpu.matmul %130, %131, %cst_121 {dimension_numbers = #tpu.dot_dimension_numbers<[1], [0], [0], [1], [0, 0, 1, 1], [], []>} : vector<2x48xf32>, vector<48x32xf32>, vector<2x32xf32> -> vector<2x32xf32>
    %133 = arith.addf %129, %132 : vector<2x32xf32>
    %c6 = arith.constant 6 : index
    %c0_122 = arith.constant 0 : index
    %134 = vector.load %arg12[%c6, %c0_122] : memref<16x48xf32, #tpu.memory_space<vmem>>, vector<2x48xf32>
    %c144_123 = arith.constant 144 : index
    %c0_124 = arith.constant 0 : index
    %135 = vector.load %arg4[%c144_123, %c0_124] : memref<384x32xf32, #tpu.memory_space<vmem>>, vector<48x32xf32>
    %cst_125 = arith.constant dense<0.000000e+00> : vector<2x32xf32>
    %136 = tpu.matmul %134, %135, %cst_125 {dimension_numbers = #tpu.dot_dimension_numbers<[1], [0], [0], [1], [0, 0, 1, 1], [], []>} : vector<2x48xf32>, vector<48x32xf32>, vector<2x32xf32> -> vector<2x32xf32>
    %137 = arith.addf %133, %136 : vector<2x32xf32>
    %c8 = arith.constant 8 : index
    %c0_126 = arith.constant 0 : index
    %138 = vector.load %arg12[%c8, %c0_126] : memref<16x48xf32, #tpu.memory_space<vmem>>, vector<2x48xf32>
    %c192_127 = arith.constant 192 : index
    %c0_128 = arith.constant 0 : index
    %139 = vector.load %arg4[%c192_127, %c0_128] : memref<384x32xf32, #tpu.memory_space<vmem>>, vector<48x32xf32>
    %cst_129 = arith.constant dense<0.000000e+00> : vector<2x32xf32>
    %140 = tpu.matmul %138, %139, %cst_129 {dimension_numbers = #tpu.dot_dimension_numbers<[1], [0], [0], [1], [0, 0, 1, 1], [], []>} : vector<2x48xf32>, vector<48x32xf32>, vector<2x32xf32> -> vector<2x32xf32>
    %141 = arith.addf %137, %140 : vector<2x32xf32>
    %c10 = arith.constant 10 : index
    %c0_130 = arith.constant 0 : index
    %142 = vector.load %arg12[%c10, %c0_130] : memref<16x48xf32, #tpu.memory_space<vmem>>, vector<2x48xf32>
    %c240_131 = arith.constant 240 : index
    %c0_132 = arith.constant 0 : index
    %143 = vector.load %arg4[%c240_131, %c0_132] : memref<384x32xf32, #tpu.memory_space<vmem>>, vector<48x32xf32>
    %cst_133 = arith.constant dense<0.000000e+00> : vector<2x32xf32>
    %144 = tpu.matmul %142, %143, %cst_133 {dimension_numbers = #tpu.dot_dimension_numbers<[1], [0], [0], [1], [0, 0, 1, 1], [], []>} : vector<2x48xf32>, vector<48x32xf32>, vector<2x32xf32> -> vector<2x32xf32>
    %145 = arith.addf %141, %144 : vector<2x32xf32>
    %c12 = arith.constant 12 : index
    %c0_134 = arith.constant 0 : index
    %146 = vector.load %arg12[%c12, %c0_134] : memref<16x48xf32, #tpu.memory_space<vmem>>, vector<2x48xf32>
    %c288_135 = arith.constant 288 : index
    %c0_136 = arith.constant 0 : index
    %147 = vector.load %arg4[%c288_135, %c0_136] : memref<384x32xf32, #tpu.memory_space<vmem>>, vector<48x32xf32>
    %cst_137 = arith.constant dense<0.000000e+00> : vector<2x32xf32>
    %148 = tpu.matmul %146, %147, %cst_137 {dimension_numbers = #tpu.dot_dimension_numbers<[1], [0], [0], [1], [0, 0, 1, 1], [], []>} : vector<2x48xf32>, vector<48x32xf32>, vector<2x32xf32> -> vector<2x32xf32>
    %149 = arith.addf %145, %148 : vector<2x32xf32>
    %c14 = arith.constant 14 : index
    %c0_138 = arith.constant 0 : index
    %150 = vector.load %arg12[%c14, %c0_138] : memref<16x48xf32, #tpu.memory_space<vmem>>, vector<2x48xf32>
    %c336_139 = arith.constant 336 : index
    %c0_140 = arith.constant 0 : index
    %151 = vector.load %arg4[%c336_139, %c0_140] : memref<384x32xf32, #tpu.memory_space<vmem>>, vector<48x32xf32>
    %cst_141 = arith.constant dense<0.000000e+00> : vector<2x32xf32>
    %152 = tpu.matmul %150, %151, %cst_141 {dimension_numbers = #tpu.dot_dimension_numbers<[1], [0], [0], [1], [0, 0, 1, 1], [], []>} : vector<2x48xf32>, vector<48x32xf32>, vector<2x32xf32> -> vector<2x32xf32>
    %153 = arith.addf %149, %152 : vector<2x32xf32>
    %c0_142 = arith.constant 0 : index
    %c0_143 = arith.constant 0 : index
    %154 = vector.load %arg5[%c0_142, %c0_143] : memref<1x32xf32, #tpu.memory_space<vmem>>, vector<1x32xf32>
    %155 = vector.broadcast %154 : vector<1x32xf32> to vector<2x32xf32>
    %156 = arith.addf %153, %155 : vector<2x32xf32>
    %cst_144 = arith.constant 0.000000e+00 : f32
    %157 = vector.broadcast %cst_144 : f32 to vector<2x32xf32>
    %158 = arith.maximumf %156, %157 : vector<2x32xf32>
    %c0_145 = arith.constant 0 : index
    %c0_146 = arith.constant 0 : index
    %159 = vector.load %arg6[%c0_145, %c0_146] : memref<32x32xf32, #tpu.memory_space<vmem>>, vector<32x32xf32>
    %cst_147 = arith.constant dense<0.000000e+00> : vector<2x32xf32>
    %160 = tpu.matmul %158, %159, %cst_147 {dimension_numbers = #tpu.dot_dimension_numbers<[1], [0], [0], [1], [0, 0, 1, 1], [], []>} : vector<2x32xf32>, vector<32x32xf32>, vector<2x32xf32> -> vector<2x32xf32>
    %c0_148 = arith.constant 0 : index
    %c0_149 = arith.constant 0 : index
    %161 = vector.load %arg7[%c0_148, %c0_149] : memref<1x32xf32, #tpu.memory_space<vmem>>, vector<1x32xf32>
    %162 = vector.broadcast %161 : vector<1x32xf32> to vector<2x32xf32>
    %163 = arith.addf %160, %162 : vector<2x32xf32>
    %cst_150 = arith.constant 0.000000e+00 : f32
    %164 = vector.broadcast %cst_150 : f32 to vector<2x32xf32>
    %165 = arith.maximumf %163, %164 : vector<2x32xf32>
    %c0_151 = arith.constant 0 : index
    %c0_152 = arith.constant 0 : index
    %166 = vector.load %arg8[%c0_151, %c0_152] : memref<1x32xf32, #tpu.memory_space<vmem>>, vector<1x32xf32>
    %167 = vector.broadcast %166 : vector<1x32xf32> to vector<2x32xf32>
    %168 = arith.mulf %165, %167 : vector<2x32xf32>
    %cst_153 = arith.constant dense<0.000000e+00> : vector<2xf32>
    %169 = vector.multi_reduction <add>, %168, %cst_153 [1] : vector<2x32xf32> to vector<2xf32>
    %170 = vector.shape_cast %169 : vector<2xf32> to vector<2x1xf32>
    %c0_154 = arith.constant 0 : index
    %c0_155 = arith.constant 0 : index
    %171 = vector.load %arg9[%c0_154, %c0_155] : memref<1x1xf32, #tpu.memory_space<vmem>>, vector<1x1xf32>
    %172 = vector.broadcast %171 : vector<1x1xf32> to vector<2x1xf32>
    %173 = arith.addf %170, %172 : vector<2x1xf32>
    %174 = vector.shape_cast %173 : vector<2x1xf32> to vector<2x1xf32>
    %175 = vector.broadcast %174 : vector<2x1xf32> to vector<2x128xf32>
    %c0_156 = arith.constant 0 : index
    %c0_157 = arith.constant 0 : index
    %176 = vector.load %arg10[%c0_156, %c0_157] : memref<2x128xf32, #tpu.memory_space<vmem>>, vector<2x128xf32>
    tpu.vector_store %arg10[%c0_156, %c0_157], %175 {strides = array<i32>} : memref<2x128xf32, #tpu.memory_space<vmem>>, vector<2x128xf32>,
    return
  }
}

</mosaic_0001>

<llo_original>
// kernel: cnn3d_regression_forward.1
$region0: #{cnn3d_regression_forward.1}
  #allocation0 [shape = 'u32[]', space=smem, size = 0x4, offset = 0x4, fixed_abs, tag = 'smem constant byte address 0x4 - core index']
  #allocation1 [shape = 'u32[144,128]{1,0:T(1,128)}', space=vmem, size = 0x12000, scoped, tag = 'internal scratch']
  #allocation2 [shape = 'f32[432,32]{1,0:T(8,128)}', space=vmem, size = 0x36000, scoped, tag = 'scratch operand']
  #allocation3 [shape = 'f32[16,48]{1,0:T(8,128)}', space=vmem, size = 0x2000, scoped, tag = 'scratch operand']
  #allocation4 [shape = 'f32[1,1]{1,0:T(1,128)S(1)}', space=vmem, size = 0x200, scoped, tag = 'scoped memory for cnn3d_regression_forward.1']
  %s0 = inlined_call_operand.vmem [shape: f32[432,128], index: 0, kind: input, shape index: {}]
  %s1 = inlined_call_operand.vmem [shape: f32[128,32], index: 1, kind: input, shape index: {}]
  %s2 = inlined_call_operand.vmem [shape: f32[864,48], index: 2, kind: input, shape index: {}]
  %s3 = inlined_call_operand.vmem [shape: f32[1,48], index: 3, kind: input, shape index: {}]
  %s4 = inlined_call_operand.vmem [shape: f32[384,32], index: 4, kind: input, shape index: {}]
  %s5 = inlined_call_operand.vmem [shape: f32[1,32], index: 5, kind: input, shape index: {}]
  %s6 = inlined_call_operand.vmem [shape: f32[32,32], index: 6, kind: input, shape index: {}]
  %s7 = inlined_call_operand.vmem [shape: f32[1,32], index: 7, kind: input, shape index: {}]
  %s8 = inlined_call_operand.vmem [shape: f32[1,32], index: 8, kind: input, shape index: {}]
  %s9 = inlined_call_operand.<no memory space> [shape: f32[1,1], index: 9, kind: input, shape index: {}]
  %s10 = inlined_call_operand.vmem [shape: f32[2,128], index: 10, kind: output, shape index: {}]
  %s11 = sld [smem:[#allocation0]]
  $region50: #{cnn3d_regression_forward.1} parent=0
    _
  %s13 = ssub.s32 1, %s11
  %s14 = scalar_select 0, %s13, %s11
  %v15 = vstv %s9
  %16 = vst [vmem:[#allocation4] sm:$0x1] %v15
  // Predicated region
  $region2: #{cnn3d_regression_forward.1} parent=0 // pred_check
    _
  $region3: #{cnn3d_regression_forward.1} parent=0 // pred_check_branch
    %18 = sbr.rel (0) target = $region5
  $region4: #{cnn3d_regression_forward.1} parent=0 // pred_region
    _
  $region5: #{cnn3d_regression_forward.1} parent=0 // pred_fallthru
    _
  // Predicated region
  $region6: #{cnn3d_regression_forward.1} parent=0 // pred_check
    _
  $region7: #{cnn3d_regression_forward.1} parent=0 // pred_check_branch
    %20 = sbr.rel (0) target = $region9
  $region8: #{cnn3d_regression_forward.1} parent=0 // pred_region
    _
  $region9: #{cnn3d_regression_forward.1} parent=0 // pred_fallthru
    _
  // Predicated region
  $region10: #{cnn3d_regression_forward.1} parent=0 // pred_check
    _
  $region11: #{cnn3d_regression_forward.1} parent=0 // pred_check_branch
    %22 = sbr.rel (0) target = $region13
  $region12: #{cnn3d_regression_forward.1} parent=0 // pred_region
    _
  $region13: #{cnn3d_regression_forward.1} parent=0 // pred_fallthru
    _
  // Predicated region
  $region14: #{cnn3d_regression_forward.1} parent=0 // pred_check
    _
  $region15: #{cnn3d_regression_forward.1} parent=0 // pred_check_branch
    %24 = sbr.rel (0) target = $region17
  $region16: #{cnn3d_regression_forward.1} parent=0 // pred_region
    _
  $region17: #{cnn3d_regression_forward.1} parent=0 // pred_fallthru
    _
  // Predicated region
  $region18: #{cnn3d_regression_forward.1} parent=0 // pred_check
    _
  $region19: #{cnn3d_regression_forward.1} parent=0 // pred_check_branch
    %26 = sbr.rel (0) target = $region21
  $region20: #{cnn3d_regression_forward.1} parent=0 // pred_region
    _
  $region21: #{cnn3d_regression_forward.1} parent=0 // pred_fallthru
    _
  // Predicated region
  $region22: #{cnn3d_regression_forward.1} parent=0 // pred_check
    _
  $region23: #{cnn3d_regression_forward.1} parent=0 // pred_check_branch
    %28 = sbr.rel (0) target = $region25
  $region24: #{cnn3d_regression_forward.1} parent=0 // pred_region
    _
  $region25: #{cnn3d_regression_forward.1} parent=0 // pred_fallthru
    _
  // Predicated region
  $region26: #{cnn3d_regression_forward.1} parent=0 // pred_check
    _
  $region27: #{cnn3d_regression_forward.1} parent=0 // pred_check_branch
    %30 = sbr.rel (0) target = $region29
  $region28: #{cnn3d_regression_forward.1} parent=0 // pred_region
    _
  $region29: #{cnn3d_regression_forward.1} parent=0 // pred_fallthru
    _
  // Predicated region
  $region30: #{cnn3d_regression_forward.1} parent=0 // pred_check
    _
  $region31: #{cnn3d_regression_forward.1} parent=0 // pred_check_branch
    %32 = sbr.rel (0) target = $region33
  $region32: #{cnn3d_regression_forward.1} parent=0 // pred_region
    _
  $region33: #{cnn3d_regression_forward.1} parent=0 // pred_fallthru
    _
  // Predicated region
  $region34: #{cnn3d_regression_forward.1} parent=0 // pred_check
    _
  $region35: #{cnn3d_regression_forward.1} parent=0 // pred_check_branch
    %34 = sbr.rel (0) target = $region37
  $region36: #{cnn3d_regression_forward.1} parent=0 // pred_region
    _
  $region37: #{cnn3d_regression_forward.1} parent=0 // pred_fallthru
    _
  // Predicated region
  $region38: #{cnn3d_regression_forward.1} parent=0 // pred_check
    _
  $region39: #{cnn3d_regression_forward.1} parent=0 // pred_check_branch
    %36 = sbr.rel (0) target = $region41
  $region40: #{cnn3d_regression_forward.1} parent=0 // pred_region
    _
  $region41: #{cnn3d_regression_forward.1} parent=0 // pred_fallthru
    _
  %v37 = vld [vmem:[%s0] sm:$0xff]
  %v38 = vld [vmem:[%s0 + $0x8] sm:$0xff]
  %v39 = vld [vmem:[%s0 + $0x10] sm:$0xff]
  %v40 = vld [vmem:[%s0 + $0x18] sm:$0xff]
  %v41 = vld [vmem:[%s0 + $0x20] sm:$0xff]
  %v42 = vld [vmem:[%s0 + $0x28] sm:$0xff]
  %v43 = vld [vmem:[%s0 + $0x30] sm:$0xff]
  %v44 = vld [vmem:[%s0 + $0x38] sm:$0xff]
  %v45 = vld [vmem:[%s0 + $0x40] sm:$0xff]
  %v46 = vld [vmem:[%s0 + $0x48] sm:$0xff]
  %v47 = vld [vmem:[%s0 + $0x50] sm:$0xff]
  %v48 = vld [vmem:[%s0 + $0x58] sm:$0xff]
  %v49 = vld [vmem:[%s0 + $0x60] sm:$0xff]
  %v50 = vld [vmem:[%s0 + $0x68] sm:$0xff]
  %v51 = vld [vmem:[%s0 + $0x70] sm:$0xff]
  %v52 = vld [vmem:[%s0 + $0x78] sm:$0xff]
  %v53 = vld [vmem:[%s0 + $0x80] sm:$0xff]
  %v54 = vld [vmem:[%s0 + $0x88] sm:$0xff]
  %v55 = vld [vmem:[%s0 + $0x90] sm:$0xff]
  %v56 = vld [vmem:[%s0 + $0x98] sm:$0xff]
  %v57 = vld [vmem:[%s0 + $0xa0] sm:$0xff]
  %v58 = vld [vmem:[%s0 + $0xa8] sm:$0xff]
  %v59 = vld [vmem:[%s0 + $0xb0] sm:$0xff]
  %v60 = vld [vmem:[%s0 + $0xb8] sm:$0xff]
  %v61 = vld [vmem:[%s0 + $0xc0] sm:$0xff]
  %v62 = vld [vmem:[%s0 + $0xc8] sm:$0xff]
  %v63 = vld [vmem:[%s0 + $0xd0] sm:$0xff]
  %v64 = vld [vmem:[%s0 + $0xd8] sm:$0xff]
  %v65 = vld [vmem:[%s0 + $0xe0] sm:$0xff]
  %v66 = vld [vmem:[%s0 + $0xe8] sm:$0xff]
  %v67 = vld [vmem:[%s0 + $0xf0] sm:$0xff]
  %v68 = vld [vmem:[%s0 + $0xf8] sm:$0xff]
  %v69 = vld [vmem:[%s0 + $0x100] sm:$0xff]
  %v70 = vld [vmem:[%s0 + $0x108] sm:$0xff]
  %v71 = vld [vmem:[%s0 + $0x110] sm:$0xff]
  %v72 = vld [vmem:[%s0 + $0x118] sm:$0xff]
  %v73 = vld [vmem:[%s0 + $0x120] sm:$0xff]
  %v74 = vld [vmem:[%s0 + $0x128] sm:$0xff]
  %v75 = vld [vmem:[%s0 + $0x130] sm:$0xff]
  %v76 = vld [vmem:[%s0 + $0x138] sm:$0xff]
  %v77 = vld [vmem:[%s0 + $0x140] sm:$0xff]
  %v78 = vld [vmem:[%s0 + $0x148] sm:$0xff]
  %v79 = vld [vmem:[%s0 + $0x150] sm:$0xff]
  %v80 = vld [vmem:[%s0 + $0x158] sm:$0xff]
  %v81 = vld [vmem:[%s0 + $0x160] sm:$0xff]
  %v82 = vld [vmem:[%s0 + $0x168] sm:$0xff]
  %v83 = vld [vmem:[%s0 + $0x170] sm:$0xff]
  %v84 = vld [vmem:[%s0 + $0x178] sm:$0xff]
  %v85 = vld [vmem:[%s0 + $0x180] sm:$0xff]
  %v86 = vld [vmem:[%s0 + $0x188] sm:$0xff]
  %v87 = vld [vmem:[%s0 + $0x190] sm:$0xff]
  %v88 = vld [vmem:[%s0 + $0x198] sm:$0xff]
  %v89 = vld [vmem:[%s0 + $0x1a0] sm:$0xff]
  %v90 = vld [vmem:[%s0 + $0x1a8] sm:$0xff]
  %v91 = vld [vmem:[%s1] sm:$0xff]
  %v92 = vld [vmem:[%s1 + $0x8] sm:$0xff]
  %v93 = vld [vmem:[%s1 + $0x10] sm:$0xff]
  %v94 = vld [vmem:[%s1 + $0x18] sm:$0xff]
  %v95 = vld [vmem:[%s1 + $0x20] sm:$0xff]
  %v96 = vld [vmem:[%s1 + $0x28] sm:$0xff]
  %v97 = vld [vmem:[%s1 + $0x30] sm:$0xff]
  %v98 = vld [vmem:[%s1 + $0x38] sm:$0xff]
  %v99 = vld [vmem:[%s1 + $0x40] sm:$0xff]
  %v100 = vld [vmem:[%s1 + $0x48] sm:$0xff]
  %v101 = vld [vmem:[%s1 + $0x50] sm:$0xff]
  %v102 = vld [vmem:[%s1 + $0x58] sm:$0xff]
  %v103 = vld [vmem:[%s1 + $0x60] sm:$0xff]
  %v104 = vld [vmem:[%s1 + $0x68] sm:$0xff]
  %v105 = vld [vmem:[%s1 + $0x70] sm:$0xff]
  %v106 = vld [vmem:[%s1 + $0x78] sm:$0xff]
  %107 = vmatprep.subr.mxu0 0.0
  %108 = vmatpush1.msra.mxu0 %v106
  %109 = vmatprep.subr.mxu0 0.0
  %110 = vmatpush1.msra.mxu0 %v105
  %111 = vmatprep.subr.mxu0 0.0
  %112 = vmatpush1.msra.mxu0 %v104
  %113 = vmatprep.subr.mxu0 0.0
  %114 = vmatpush1.msra.mxu0 %v103
  %115 = vmatprep.subr.mxu0 0.0
  %116 = vmatpush1.msra.mxu0 %v102
  %117 = vmatprep.subr.mxu0 0.0
  %118 = vmatpush1.msra.mxu0 %v101
  %119 = vmatprep.subr.mxu0 0.0
  %120 = vmatpush1.msra.mxu0 %v100
  %121 = vmatprep.subr.mxu0 0.0
  %122 = vmatpush1.msra.mxu0 %v99
  %123 = vmatprep.subr.mxu0 0.0
  %124 = vmatpush1.msra.mxu0 %v98
  %125 = vmatprep.subr.mxu0 0.0
  %126 = vmatpush1.msra.mxu0 %v97
  %127 = vmatprep.subr.mxu0 0.0
  %128 = vmatpush1.msra.mxu0 %v96
  %129 = vmatprep.subr.mxu0 0.0
  %130 = vmatpush1.msra.mxu0 %v95
  %131 = vmatprep.subr.mxu0 0.0
  %132 = vmatpush1.msra.mxu0 %v94
  %133 = vmatprep.subr.mxu0 0.0
  %134 = vmatpush1.msra.mxu0 %v93
  %135 = vmatprep.subr.mxu0 0.0
  %136 = vmatpush1.msra.mxu0 %v92
  %137 = vmatprep.subr.mxu0 0.0
  %138 = vmatpush1.msra.mxu0 %v91
  %139 = vmatprep.subr.mxu0 0.0
  %140 = vmatpush2.msra.mxu0 0.0
  %141 = vmatprep.subr.mxu0 0.0
  %142 = vmatpush2.msra.mxu0 0.0
  %143 = vmatprep.subr.mxu0 0.0
  %144 = vmatpush2.msra.mxu0 0.0
  %145 = vmatprep.subr.mxu0 0.0
  %146 = vmatpush2.msra.mxu0 0.0
  %147 = vmatprep.subr.mxu0 0.0
  %148 = vmatpush2.msra.mxu0 0.0
  %149 = vmatprep.subr.mxu0 0.0
  %150 = vmatpush2.msra.mxu0 0.0
  %151 = vmatprep.subr.mxu0 0.0
  %152 = vmatpush2.msra.mxu0 0.0
  %153 = vmatprep.subr.mxu0 0.0
  %154 = vmatpush2.msra.mxu0 0.0
  %155 = vmatprep.subr.mxu0 0.0
  %156 = vmatpush2.msra.mxu0 0.0
  %157 = vmatprep.subr.mxu0 0.0
  %158 = vmatpush2.msra.mxu0 0.0
  %159 = vmatprep.subr.mxu0 0.0
  %160 = vmatpush2.msra.mxu0 0.0
  %161 = vmatprep.subr.mxu0 0.0
  %162 = vmatpush2.msra.mxu0 0.0
  %163 = vmatprep.subr.mxu0 0.0
  %164 = vmatpush2.msra.mxu0 0.0
  %165 = vmatprep.subr.mxu0 0.0
  %166 = vmatpush2.msra.mxu0 0.0
  %167 = vmatprep.subr.mxu0 0.0
  %168 = vmatpush2.msra.mxu0 0.0
  %169 = vmatprep.subr.mxu0 0.0
  %170 = vmatpush2.msra.mxu0 0.0
  %171 = vmatprep.mubr.f32.mxu0 0.0
  %172 = vmatmul.mubr.f32.gmra.mxu0 %v37
  %v173 = vpop.f32.mrf.mxu0
  %v174 = vadd.f32 0.0, %v173
  %v175 = vpop.f32.mrf.mxu0
  %176 = vmatprep.mubr.f32.mxu0 0.0
  %177 = vmatmul.mubr.f32.gmra.mxu0 %v38
  %v178 = vpop.f32.mrf.mxu0
  %v179 = vadd.f32 0.0, %v178
  %v180 = vpop.f32.mrf.mxu0
  %181 = vmatprep.mubr.f32.mxu0 0.0
  %182 = vmatmul.mubr.f32.gmra.mxu0 %v39
  %v183 = vpop.f32.mrf.mxu0
  %v184 = vadd.f32 0.0, %v183
  %v185 = vpop.f32.mrf.mxu0
  %186 = vmatprep.mubr.f32.mxu0 0.0
  %187 = vmatmul.mubr.f32.gmra.mxu0 %v40
  %v188 = vpop.f32.mrf.mxu0
  %v189 = vadd.f32 0.0, %v188
  %v190 = vpop.f32.mrf.mxu0
  %191 = vmatprep.mubr.f32.mxu0 0.0
  %192 = vmatmul.mubr.f32.gmra.mxu0 %v41
  %v193 = vpop.f32.mrf.mxu0
  %v194 = vadd.f32 0.0, %v193
  %v195 = vpop.f32.mrf.mxu0
  %196 = vmatprep.mubr.f32.mxu0 0.0
  %197 = vmatmul.mubr.f32.gmra.mxu0 %v42
  %v198 = vpop.f32.mrf.mxu0
  %v199 = vadd.f32 0.0, %v198
  %v200 = vpop.f32.mrf.mxu0
  %201 = vmatprep.mubr.f32.mxu0 0.0
  %202 = vmatmul.mubr.f32.gmra.mxu0 %v43
  %v203 = vpop.f32.mrf.mxu0
  %v204 = vadd.f32 0.0, %v203
  %v205 = vpop.f32.mrf.mxu0
  %206 = vmatprep.mubr.f32.mxu0 0.0
  %207 = vmatmul.mubr.f32.gmra.mxu0 %v44
  %v208 = vpop.f32.mrf.mxu0
  %v209 = vadd.f32 0.0, %v208
  %v210 = vpop.f32.mrf.mxu0
  %211 = vmatprep.mubr.f32.mxu0 0.0
  %212 = vmatmul.mubr.f32.gmra.mxu0 %v45
  %v213 = vpop.f32.mrf.mxu0
  %v214 = vadd.f32 0.0, %v213
  %v215 = vpop.f32.mrf.mxu0
  %216 = vmatprep.mubr.f32.mxu0 0.0
  %217 = vmatmul.mubr.f32.gmra.mxu0 %v46
  %v218 = vpop.f32.mrf.mxu0
  %v219 = vadd.f32 0.0, %v218
  %v220 = vpop.f32.mrf.mxu0
  %221 = vmatprep.mubr.f32.mxu0 0.0
  %222 = vmatmul.mubr.f32.gmra.mxu0 %v47
  %v223 = vpop.f32.mrf.mxu0
  %v224 = vadd.f32 0.0, %v223
  %v225 = vpop.f32.mrf.mxu0
  %226 = vmatprep.mubr.f32.mxu0 0.0
  %227 = vmatmul.mubr.f32.gmra.mxu0 %v48
  %v228 = vpop.f32.mrf.mxu0
  %v229 = vadd.f32 0.0, %v228
  %v230 = vpop.f32.mrf.mxu0
  %231 = vmatprep.mubr.f32.mxu0 0.0
  %232 = vmatmul.mubr.f32.gmra.mxu0 %v49
  %v233 = vpop.f32.mrf.mxu0
  %v234 = vadd.f32 0.0, %v233
  %v235 = vpop.f32.mrf.mxu0
  %236 = vmatprep.mubr.f32.mxu0 0.0
  %237 = vmatmul.mubr.f32.gmra.mxu0 %v50
  %v238 = vpop.f32.mrf.mxu0
  %v239 = vadd.f32 0.0, %v238
  %v240 = vpop.f32.mrf.mxu0
  %241 = vmatprep.mubr.f32.mxu0 0.0
  %242 = vmatmul.mubr.f32.gmra.mxu0 %v51
  %v243 = vpop.f32.mrf.mxu0
  %v244 = vadd.f32 0.0, %v243
  %v245 = vpop.f32.mrf.mxu0
  %246 = vmatprep.mubr.f32.mxu0 0.0
  %247 = vmatmul.mubr.f32.gmra.mxu0 %v52
  %v248 = vpop.f32.mrf.mxu0
  %v249 = vadd.f32 0.0, %v248
  %v250 = vpop.f32.mrf.mxu0
  %251 = vmatprep.mubr.f32.mxu0 0.0
  %252 = vmatmul.mubr.f32.gmra.mxu0 %v53
  %v253 = vpop.f32.mrf.mxu0
  %v254 = vadd.f32 0.0, %v253
  %v255 = vpop.f32.mrf.mxu0
  %256 = vmatprep.mubr.f32.mxu0 0.0
  %257 = vmatmul.mubr.f32.gmra.mxu0 %v54
  %v258 = vpop.f32.mrf.mxu0
  %v259 = vadd.f32 0.0, %v258
  %v260 = vpop.f32.mrf.mxu0
  %261 = vmatprep.mubr.f32.mxu0 0.0
  %262 = vmatmul.mubr.f32.gmra.mxu0 %v55
  %v263 = vpop.f32.mrf.mxu0
  %v264 = vadd.f32 0.0, %v263
  %v265 = vpop.f32.mrf.mxu0
  %266 = vmatprep.mubr.f32.mxu0 0.0
  %267 = vmatmul.mubr.f32.gmra.mxu0 %v56
  %v268 = vpop.f32.mrf.mxu0
  %v269 = vadd.f32 0.0, %v268
  %v270 = vpop.f32.mrf.mxu0
  %271 = vmatprep.mubr.f32.mxu0 0.0
  %272 = vmatmul.mubr.f32.gmra.mxu0 %v57
  %v273 = vpop.f32.mrf.mxu0
  %v274 = vadd.f32 0.0, %v273
  %v275 = vpop.f32.mrf.mxu0
  %276 = vmatprep.mubr.f32.mxu0 0.0
  %277 = vmatmul.mubr.f32.gmra.mxu0 %v58
  %v278 = vpop.f32.mrf.mxu0
  %v279 = vadd.f32 0.0, %v278
  %v280 = vpop.f32.mrf.mxu0
  %281 = vmatprep.mubr.f32.mxu0 0.0
  %282 = vmatmul.mubr.f32.gmra.mxu0 %v59
  %v283 = vpop.f32.mrf.mxu0
  %v284 = vadd.f32 0.0, %v283
  %v285 = vpop.f32.mrf.mxu0
  %286 = vmatprep.mubr.f32.mxu0 0.0
  %287 = vmatmul.mubr.f32.gmra.mxu0 %v60
  %v288 = vpop.f32.mrf.mxu0
  %v289 = vadd.f32 0.0, %v288
  %v290 = vpop.f32.mrf.mxu0
  %291 = vmatprep.mubr.f32.mxu0 0.0
  %292 = vmatmul.mubr.f32.gmra.mxu0 %v61
  %v293 = vpop.f32.mrf.mxu0
  %v294 = vadd.f32 0.0, %v293
  %v295 = vpop.f32.mrf.mxu0
  %296 = vmatprep.mubr.f32.mxu0 0.0
  %297 = vmatmul.mubr.f32.gmra.mxu0 %v62
  %v298 = vpop.f32.mrf.mxu0
  %v299 = vadd.f32 0.0, %v298
  %v300 = vpop.f32.mrf.mxu0
  %301 = vmatprep.mubr.f32.mxu0 0.0
  %302 = vmatmul.mubr.f32.gmra.mxu0 %v63
  %v303 = vpop.f32.mrf.mxu0
  %v304 = vadd.f32 0.0, %v303
  %v305 = vpop.f32.mrf.mxu0
  %306 = vmatprep.mubr.f32.mxu0 0.0
  %307 = vmatmul.mubr.f32.gmra.mxu0 %v64
  %v308 = vpop.f32.mrf.mxu0
  %v309 = vadd.f32 0.0, %v308
  %v310 = vpop.f32.mrf.mxu0
  %311 = vmatprep.mubr.f32.mxu0 0.0
  %312 = vmatmul.mubr.f32.gmra.mxu0 %v65
  %v313 = vpop.f32.mrf.mxu0
  %v314 = vadd.f32 0.0, %v313
  %v315 = vpop.f32.mrf.mxu0
  %316 = vmatprep.mubr.f32.mxu0 0.0
  %317 = vmatmul.mubr.f32.gmra.mxu0 %v66
  %v318 = vpop.f32.mrf.mxu0
  %v319 = vadd.f32 0.0, %v318
  %v320 = vpop.f32.mrf.mxu0
  %321 = vmatprep.mubr.f32.mxu0 0.0
  %322 = vmatmul.mubr.f32.gmra.mxu0 %v67
  %v323 = vpop.f32.mrf.mxu0
  %v324 = vadd.f32 0.0, %v323
  %v325 = vpop.f32.mrf.mxu0
  %326 = vmatprep.mubr.f32.mxu0 0.0
  %327 = vmatmul.mubr.f32.gmra.mxu0 %v68
  %v328 = vpop.f32.mrf.mxu0
  %v329 = vadd.f32 0.0, %v328
  %v330 = vpop.f32.mrf.mxu0
  %331 = vmatprep.mubr.f32.mxu0 0.0
  %332 = vmatmul.mubr.f32.gmra.mxu0 %v69
  %v333 = vpop.f32.mrf.mxu0
  %v334 = vadd.f32 0.0, %v333
  %v335 = vpop.f32.mrf.mxu0
  %336 = vmatprep.mubr.f32.mxu0 0.0
  %337 = vmatmul.mubr.f32.gmra.mxu0 %v70
  %v338 = vpop.f32.mrf.mxu0
  %v339 = vadd.f32 0.0, %v338
  %v340 = vpop.f32.mrf.mxu0
  %341 = vmatprep.mubr.f32.mxu0 0.0
  %342 = vmatmul.mubr.f32.gmra.mxu0 %v71
  %v343 = vpop.f32.mrf.mxu0
  %v344 = vadd.f32 0.0, %v343
  %v345 = vpop.f32.mrf.mxu0
  %346 = vmatprep.mubr.f32.mxu0 0.0
  %347 = vmatmul.mubr.f32.gmra.mxu0 %v72
  %v348 = vpop.f32.mrf.mxu0
  %v349 = vadd.f32 0.0, %v348
  %v350 = vpop.f32.mrf.mxu0
  %351 = vmatprep.mubr.f32.mxu0 0.0
  %352 = vmatmul.mubr.f32.gmra.mxu0 %v73
  %v353 = vpop.f32.mrf.mxu0
  %v354 = vadd.f32 0.0, %v353
  %v355 = vpop.f32.mrf.mxu0
  %356 = vmatprep.mubr.f32.mxu0 0.0
  %357 = vmatmul.mubr.f32.gmra.mxu0 %v74
  %v358 = vpop.f32.mrf.mxu0
  %v359 = vadd.f32 0.0, %v358
  %v360 = vpop.f32.mrf.mxu0
  %361 = vmatprep.mubr.f32.mxu0 0.0
  %362 = vmatmul.mubr.f32.gmra.mxu0 %v75
  %v363 = vpop.f32.mrf.mxu0
  %v364 = vadd.f32 0.0, %v363
  %v365 = vpop.f32.mrf.mxu0
  %366 = vmatprep.mubr.f32.mxu0 0.0
  %367 = vmatmul.mubr.f32.gmra.mxu0 %v76
  %v368 = vpop.f32.mrf.mxu0
  %v369 = vadd.f32 0.0, %v368
  %v370 = vpop.f32.mrf.mxu0
  %371 = vmatprep.mubr.f32.mxu0 0.0
  %372 = vmatmul.mubr.f32.gmra.mxu0 %v77
  %v373 = vpop.f32.mrf.mxu0
  %v374 = vadd.f32 0.0, %v373
  %v375 = vpop.f32.mrf.mxu0
  %376 = vmatprep.mubr.f32.mxu0 0.0
  %377 = vmatmul.mubr.f32.gmra.mxu0 %v78
  %v378 = vpop.f32.mrf.mxu0
  %v379 = vadd.f32 0.0, %v378
  %v380 = vpop.f32.mrf.mxu0
  %381 = vmatprep.mubr.f32.mxu0 0.0
  %382 = vmatmul.mubr.f32.gmra.mxu0 %v79
  %v383 = vpop.f32.mrf.mxu0
  %v384 = vadd.f32 0.0, %v383
  %v385 = vpop.f32.mrf.mxu0
  %386 = vmatprep.mubr.f32.mxu0 0.0
  %387 = vmatmul.mubr.f32.gmra.mxu0 %v80
  %v388 = vpop.f32.mrf.mxu0
  %v389 = vadd.f32 0.0, %v388
  %v390 = vpop.f32.mrf.mxu0
  %391 = vmatprep.mubr.f32.mxu0 0.0
  %392 = vmatmul.mubr.f32.gmra.mxu0 %v81
  %v393 = vpop.f32.mrf.mxu0
  %v394 = vadd.f32 0.0, %v393
  %v395 = vpop.f32.mrf.mxu0
  %396 = vmatprep.mubr.f32.mxu0 0.0
  %397 = vmatmul.mubr.f32.gmra.mxu0 %v82
  %v398 = vpop.f32.mrf.mxu0
  %v399 = vadd.f32 0.0, %v398
  %v400 = vpop.f32.mrf.mxu0
  %401 = vmatprep.mubr.f32.mxu0 0.0
  %402 = vmatmul.mubr.f32.gmra.mxu0 %v83
  %v403 = vpop.f32.mrf.mxu0
  %v404 = vadd.f32 0.0, %v403
  %v405 = vpop.f32.mrf.mxu0
  %406 = vmatprep.mubr.f32.mxu0 0.0
  %407 = vmatmul.mubr.f32.gmra.mxu0 %v84
  %v408 = vpop.f32.mrf.mxu0
  %v409 = vadd.f32 0.0, %v408
  %v410 = vpop.f32.mrf.mxu0
  %411 = vmatprep.mubr.f32.mxu0 0.0
  %412 = vmatmul.mubr.f32.gmra.mxu0 %v85
  %v413 = vpop.f32.mrf.mxu0
  %v414 = vadd.f32 0.0, %v413
  %v415 = vpop.f32.mrf.mxu0
  %416 = vmatprep.mubr.f32.mxu0 0.0
  %417 = vmatmul.mubr.f32.gmra.mxu0 %v86
  %v418 = vpop.f32.mrf.mxu0
  %v419 = vadd.f32 0.0, %v418
  %v420 = vpop.f32.mrf.mxu0
  %421 = vmatprep.mubr.f32.mxu0 0.0
  %422 = vmatmul.mubr.f32.gmra.mxu0 %v87
  %v423 = vpop.f32.mrf.mxu0
  %v424 = vadd.f32 0.0, %v423
  %v425 = vpop.f32.mrf.mxu0
  %426 = vmatprep.mubr.f32.mxu0 0.0
  %427 = vmatmul.mubr.f32.gmra.mxu0 %v88
  %v428 = vpop.f32.mrf.mxu0
  %v429 = vadd.f32 0.0, %v428
  %v430 = vpop.f32.mrf.mxu0
  %431 = vmatprep.mubr.f32.mxu0 0.0
  %432 = vmatmul.mubr.f32.gmra.mxu0 %v89
  %v433 = vpop.f32.mrf.mxu0
  %v434 = vadd.f32 0.0, %v433
  %v435 = vpop.f32.mrf.mxu0
  %436 = vmatprep.mubr.f32.mxu0 0.0
  %437 = vmatmul.mubr.f32.gmra.mxu0 %v90
  %v438 = vpop.f32.mrf.mxu0
  %v439 = vadd.f32 0.0, %v438
  %v440 = vpop.f32.mrf.mxu0
  %441 = vdwg.mxu0
  %v442 = vmax.f32 %v174, 0.0
  %v443 = vmax.f32 %v179, 0.0
  %v444 = vmax.f32 %v184, 0.0
  %v445 = vmax.f32 %v189, 0.0
  %v446 = vmax.f32 %v194, 0.0
  %v447 = vmax.f32 %v199, 0.0
  %v448 = vmax.f32 %v204, 0.0
  %v449 = vmax.f32 %v209, 0.0
  %v450 = vmax.f32 %v214, 0.0
  %v451 = vmax.f32 %v219, 0.0
  %v452 = vmax.f32 %v224, 0.0
  %v453 = vmax.f32 %v229, 0.0
  %v454 = vmax.f32 %v234, 0.0
  %v455 = vmax.f32 %v239, 0.0
  %v456 = vmax.f32 %v244, 0.0
  %v457 = vmax.f32 %v249, 0.0
  %v458 = vmax.f32 %v254, 0.0
  %v459 = vmax.f32 %v259, 0.0
  %v460 = vmax.f32 %v264, 0.0
  %v461 = vmax.f32 %v269, 0.0
  %v462 = vmax.f32 %v274, 0.0
  %v463 = vmax.f32 %v279, 0.0
  %v464 = vmax.f32 %v284, 0.0
  %v465 = vmax.f32 %v289, 0.0
  %v466 = vmax.f32 %v294, 0.0
  %v467 = vmax.f32 %v299, 0.0
  %v468 = vmax.f32 %v304, 0.0
  %v469 = vmax.f32 %v309, 0.0
  %v470 = vmax.f32 %v314, 0.0
  %v471 = vmax.f32 %v319, 0.0
  %v472 = vmax.f32 %v324, 0.0
  %v473 = vmax.f32 %v329, 0.0
  %v474 = vmax.f32 %v334, 0.0
  %v475 = vmax.f32 %v339, 0.0
  %v476 = vmax.f32 %v344, 0.0
  %v477 = vmax.f32 %v349, 0.0
  %v478 = vmax.f32 %v354, 0.0
  %v479 = vmax.f32 %v359, 0.0
  %v480 = vmax.f32 %v364, 0.0
  %v481 = vmax.f32 %v369, 0.0
  %v482 = vmax.f32 %v374, 0.0
  %v483 = vmax.f32 %v379, 0.0
  %v484 = vmax.f32 %v384, 0.0
  %v485 = vmax.f32 %v389, 0.0
  %v486 = vmax.f32 %v394, 0.0
  %v487 = vmax.f32 %v399, 0.0
  %v488 = vmax.f32 %v404, 0.0
  %v489 = vmax.f32 %v409, 0.0
  %v490 = vmax.f32 %v414, 0.0
  %v491 = vmax.f32 %v419, 0.0
  %v492 = vmax.f32 %v424, 0.0
  %v493 = vmax.f32 %v429, 0.0
  %v494 = vmax.f32 %v434, 0.0
  %v495 = vmax.f32 %v439, 0.0
  %vm496 = vcmask 261120
  %497 = vst.msk [vmem:[#allocation2] sm:$0xff] %vm496, %v442
  %498 = vst.msk [vmem:[#allocation2 + $0x8] sm:$0xff] %vm496, %v443
  %499 = vst.msk [vmem:[#allocation2 + $0x10] sm:$0xff] %vm496, %v444
  %500 = vst.msk [vmem:[#allocation2 + $0x18] sm:$0xff] %vm496, %v445
  %501 = vst.msk [vmem:[#allocation2 + $0x20] sm:$0xff] %vm496, %v446
  %502 = vst.msk [vmem:[#allocation2 + $0x28] sm:$0xff] %vm496, %v447
  %503 = vst.msk [vmem:[#allocation2 + $0x30] sm:$0xff] %vm496, %v448
  %504 = vst.msk [vmem:[#allocation2 + $0x38] sm:$0xff] %vm496, %v449
  %505 = vst.msk [vmem:[#allocation2 + $0x40] sm:$0xff] %vm496, %v450
  %506 = vst.msk [vmem:[#allocation2 + $0x48] sm:$0xff] %vm496, %v451
  %507 = vst.msk [vmem:[#allocation2 + $0x50] sm:$0xff] %vm496, %v452
  %508 = vst.msk [vmem:[#allocation2 + $0x58] sm:$0xff] %vm496, %v453
  %509 = vst.msk [vmem:[#allocation2 + $0x60] sm:$0xff] %vm496, %v454
  %510 = vst.msk [vmem:[#allocation2 + $0x68] sm:$0xff] %vm496, %v455
  %511 = vst.msk [vmem:[#allocation2 + $0x70] sm:$0xff] %vm496, %v456
  %512 = vst.msk [vmem:[#allocation2 + $0x78] sm:$0xff] %vm496, %v457
  %513 = vst.msk [vmem:[#allocation2 + $0x80] sm:$0xff] %vm496, %v458
  %514 = vst.msk [vmem:[#allocation2 + $0x88] sm:$0xff] %vm496, %v459
  %515 = vst.msk [vmem:[#allocation2 + $0x90] sm:$0xff] %vm496, %v460
  %516 = vst.msk [vmem:[#allocation2 + $0x98] sm:$0xff] %vm496, %v461
  %517 = vst.msk [vmem:[#allocation2 + $0xa0] sm:$0xff] %vm496, %v462
  %518 = vst.msk [vmem:[#allocation2 + $0xa8] sm:$0xff] %vm496, %v463
  %519 = vst.msk [vmem:[#allocation2 + $0xb0] sm:$0xff] %vm496, %v464
  %520 = vst.msk [vmem:[#allocation2 + $0xb8] sm:$0xff] %vm496, %v465
  %521 = vst.msk [vmem:[#allocation2 + $0xc0] sm:$0xff] %vm496, %v466
  %522 = vst.msk [vmem:[#allocation2 + $0xc8] sm:$0xff] %vm496, %v467
  %523 = vst.msk [vmem:[#allocation2 + $0xd0] sm:$0xff] %vm496, %v468
  %524 = vst.msk [vmem:[#allocation2 + $0xd8] sm:$0xff] %vm496, %v469
  %525 = vst.msk [vmem:[#allocation2 + $0xe0] sm:$0xff] %vm496, %v470
  %526 = vst.msk [vmem:[#allocation2 + $0xe8] sm:$0xff] %vm496, %v471
  %527 = vst.msk [vmem:[#allocation2 + $0xf0] sm:$0xff] %vm496, %v472
  %528 = vst.msk [vmem:[#allocation2 + $0xf8] sm:$0xff] %vm496, %v473
  %529 = vst.msk [vmem:[#allocation2 + $0x100] sm:$0xff] %vm496, %v474
  %530 = vst.msk [vmem:[#allocation2 + $0x108] sm:$0xff] %vm496, %v475
  %531 = vst.msk [vmem:[#allocation2 + $0x110] sm:$0xff] %vm496, %v476
  %532 = vst.msk [vmem:[#allocation2 + $0x118] sm:$0xff] %vm496, %v477
  %533 = vst.msk [vmem:[#allocation2 + $0x120] sm:$0xff] %vm496, %v478
  %534 = vst.msk [vmem:[#allocation2 + $0x128] sm:$0xff] %vm496, %v479
  %535 = vst.msk [vmem:[#allocation2 + $0x130] sm:$0xff] %vm496, %v480
  %536 = vst.msk [vmem:[#allocation2 + $0x138] sm:$0xff] %vm496, %v481
  %537 = vst.msk [vmem:[#allocation2 + $0x140] sm:$0xff] %vm496, %v482
  %538 = vst.msk [vmem:[#allocation2 + $0x148] sm:$0xff] %vm496, %v483
  %539 = vst.msk [vmem:[#allocation2 + $0x150] sm:$0xff] %vm496, %v484
  %540 = vst.msk [vmem:[#allocation2 + $0x158] sm:$0xff] %vm496, %v485
  %541 = vst.msk [vmem:[#allocation2 + $0x160] sm:$0xff] %vm496, %v486
  %542 = vst.msk [vmem:[#allocation2 + $0x168] sm:$0xff] %vm496, %v487
  %543 = vst.msk [vmem:[#allocation2 + $0x170] sm:$0xff] %vm496, %v488
  %544 = vst.msk [vmem:[#allocation2 + $0x178] sm:$0xff] %vm496, %v489
  %545 = vst.msk [vmem:[#allocation2 + $0x180] sm:$0xff] %vm496, %v490
  %546 = vst.msk [vmem:[#allocation2 + $0x188] sm:$0xff] %vm496, %v491
  %547 = vst.msk [vmem:[#allocation2 + $0x190] sm:$0xff] %vm496, %v492
  %548 = vst.msk [vmem:[#allocation2 + $0x198] sm:$0xff] %vm496, %v493
  %549 = vst.msk [vmem:[#allocation2 + $0x1a0] sm:$0xff] %vm496, %v494
  %550 = vst.msk [vmem:[#allocation2 + $0x1a8] sm:$0xff] %vm496, %v495
  %v551 = vld [vmem:[#allocation2] sm:$0xff]
  %v552 = vld [vmem:[#allocation2 + $0x8] sm:$0xff]
  %v553 = vld [vmem:[%s2] sm:$0xff]
  %v554 = vld [vmem:[%s2 + $0x8] sm:$0xff]
  %v555 = vld [vmem:[%s2 + $0x10] sm:$0xff]
  %v556 = vld [vmem:[%s2 + $0x18] sm:$0xff]
  %v557 = vld [vmem:[#allocation2 + $0x10] sm:$0xff]
  %v558 = vld [vmem:[#allocation2 + $0x18] sm:$0xff]
  %v559 = vld [vmem:[%s2 + $0x20] sm:$0xff]
  %v560 = vld [vmem:[%s2 + $0x28] sm:$0xff]
  %v561 = vld [vmem:[%s2 + $0x30] sm:$0xff]
  %v562 = vld [vmem:[%s2 + $0x38] sm:$0xff]
  %v564 = vsel %vm496, %v557, 0
  %v567 = vsel %vm496, %v558, 0
  %569 = vmatprep.subr.mxu0 0.0
  %570 = vmatpush1.msra.mxu0 0.0
  %571 = vmatprep.subr.mxu0 0.0
  %572 = vmatpush1.msra.mxu0 0.0
  %573 = vmatprep.subr.mxu0 0.0
  %574 = vmatpush1.msra.mxu0 0.0
  %575 = vmatprep.subr.mxu0 0.0
  %576 = vmatpush1.msra.mxu0 0.0
  %577 = vmatprep.subr.mxu0 0.0
  %578 = vmatpush1.msra.mxu0 0.0
  %579 = vmatprep.subr.mxu0 0.0
  %580 = vmatpush1.msra.mxu0 0.0
  %581 = vmatprep.subr.mxu0 0.0
  %582 = vmatpush1.msra.mxu0 0.0
  %583 = vmatprep.subr.mxu0 0.0
  %584 = vmatpush1.msra.mxu0 0.0
  %585 = vmatprep.subr.mxu0 0.0
  %586 = vmatpush1.msra.mxu0 0.0
  %587 = vmatprep.subr.mxu0 0.0
  %588 = vmatpush1.msra.mxu0 0.0
  %589 = vmatprep.subr.mxu0 0.0
  %590 = vmatpush1.msra.mxu0 0.0
  %591 = vmatprep.subr.mxu0 0.0
  %592 = vmatpush1.msra.mxu0 0.0
  %593 = vmatprep.subr.mxu0 0.0
  %594 = vmatpush1.msra.mxu0 %v562
  %595 = vmatprep.subr.mxu0 0.0
  %596 = vmatpush1.msra.mxu0 %v561
  %597 = vmatprep.subr.mxu0 0.0
  %598 = vmatpush1.msra.mxu0 %v560
  %599 = vmatprep.subr.mxu0 0.0
  %600 = vmatpush1.msra.mxu0 %v559
  %601 = vmatprep.subr.mxu0 0.0
  %602 = vmatpush2.msra.mxu0 0.0
  %603 = vmatprep.subr.mxu0 0.0
  %604 = vmatpush2.msra.mxu0 0.0
  %605 = vmatprep.subr.mxu0 0.0
  %606 = vmatpush2.msra.mxu0 0.0
  %607 = vmatprep.subr.mxu0 0.0
  %608 = vmatpush2.msra.mxu0 0.0
  %609 = vmatprep.subr.mxu0 0.0
  %610 = vmatpush2.msra.mxu0 0.0
  %611 = vmatprep.subr.mxu0 0.0
  %612 = vmatpush2.msra.mxu0 0.0
  %613 = vmatprep.subr.mxu0 0.0
  %614 = vmatpush2.msra.mxu0 0.0
  %615 = vmatprep.subr.mxu0 0.0
  %616 = vmatpush2.msra.mxu0 0.0
  %617 = vmatprep.subr.mxu0 0.0
  %618 = vmatpush2.msra.mxu0 0.0
  %619 = vmatprep.subr.mxu0 0.0
  %620 = vmatpush2.msra.mxu0 0.0
  %621 = vmatprep.subr.mxu0 0.0
  %622 = vmatpush2.msra.mxu0 0.0
  %623 = vmatprep.subr.mxu0 0.0
  %624 = vmatpush2.msra.mxu0 0.0
  %625 = vmatprep.subr.mxu0 0.0
  %626 = vmatpush2.msra.mxu0 0.0
  %627 = vmatprep.subr.mxu0 0.0
  %628 = vmatpush2.msra.mxu0 0.0
  %629 = vmatprep.subr.mxu0 0.0
  %630 = vmatpush2.msra.mxu0 0.0
  %631 = vmatprep.subr.mxu0 0.0
  %632 = vmatpush2.msra.mxu0 0.0
  %633 = vmatprep.mubr.f32.mxu0 0.0
  %634 = vmatmul.mubr.f32.gmra.mxu0 %v564
  %v635 = vpop.f32.mrf.mxu0
  %v636 = vadd.f32 0.0, %v635
  %v637 = vpop.f32.mrf.mxu0
  %638 = vmatprep.mubr.f32.mxu0 0.0
  %639 = vmatmul.mubr.f32.gmra.mxu0 %v567
  %v640 = vpop.f32.mrf.mxu0
  %v641 = vadd.f32 0.0, %v640
  %v642 = vpop.f32.mrf.mxu0
  %643 = vdwg.mxu0
  %v645 = vsel %vm496, %v551, 0
  %v648 = vsel %vm496, %v552, 0
  %650 = vmatprep.subr.mxu0 0.0
  %651 = vmatpush1.msra.mxu0 0.0
  %652 = vmatprep.subr.mxu0 0.0
  %653 = vmatpush1.msra.mxu0 0.0
  %654 = vmatprep.subr.mxu0 0.0
  %655 = vmatpush1.msra.mxu0 0.0
  %656 = vmatprep.subr.mxu0 0.0
  %657 = vmatpush1.msra.mxu0 0.0
  %658 = vmatprep.subr.mxu0 0.0
  %659 = vmatpush1.msra.mxu0 0.0
  %660 = vmatprep.subr.mxu0 0.0
  %661 = vmatpush1.msra.mxu0 0.0
  %662 = vmatprep.subr.mxu0 0.0
  %663 = vmatpush1.msra.mxu0 0.0
  %664 = vmatprep.subr.mxu0 0.0
  %665 = vmatpush1.msra.mxu0 0.0
  %666 = vmatprep.subr.mxu0 0.0
  %667 = vmatpush1.msra.mxu0 0.0
  %668 = vmatprep.subr.mxu0 0.0
  %669 = vmatpush1.msra.mxu0 0.0
  %670 = vmatprep.subr.mxu0 0.0
  %671 = vmatpush1.msra.mxu0 0.0
  %672 = vmatprep.subr.mxu0 0.0
  %673 = vmatpush1.msra.mxu0 0.0
  %674 = vmatprep.subr.mxu0 0.0
  %675 = vmatpush1.msra.mxu0 %v556
  %676 = vmatprep.subr.mxu0 0.0
  %677 = vmatpush1.msra.mxu0 %v555
  %678 = vmatprep.subr.mxu0 0.0
  %679 = vmatpush1.msra.mxu0 %v554
  %680 = vmatprep.subr.mxu0 0.0
  %681 = vmatpush1.msra.mxu0 %v553
  %682 = vmatprep.subr.mxu0 0.0
  %683 = vmatpush2.msra.mxu0 0.0
  %684 = vmatprep.subr.mxu0 0.0
  %685 = vmatpush2.msra.mxu0 0.0
  %686 = vmatprep.subr.mxu0 0.0
  %687 = vmatpush2.msra.mxu0 0.0
  %688 = vmatprep.subr.mxu0 0.0
  %689 = vmatpush2.msra.mxu0 0.0
  %690 = vmatprep.subr.mxu0 0.0
  %691 = vmatpush2.msra.mxu0 0.0
  %692 = vmatprep.subr.mxu0 0.0
  %693 = vmatpush2.msra.mxu0 0.0
  %694 = vmatprep.subr.mxu0 0.0
  %695 = vmatpush2.msra.mxu0 0.0
  %696 = vmatprep.subr.mxu0 0.0
  %697 = vmatpush2.msra.mxu0 0.0
  %698 = vmatprep.subr.mxu0 0.0
  %699 = vmatpush2.msra.mxu0 0.0
  %700 = vmatprep.subr.mxu0 0.0
  %701 = vmatpush2.msra.mxu0 0.0
  %702 = vmatprep.subr.mxu0 0.0
  %703 = vmatpush2.msra.mxu0 0.0
  %704 = vmatprep.subr.mxu0 0.0
  %705 = vmatpush2.msra.mxu0 0.0
  %706 = vmatprep.subr.mxu0 0.0
  %707 = vmatpush2.msra.mxu0 0.0
  %708 = vmatprep.subr.mxu0 0.0
  %709 = vmatpush2.msra.mxu0 0.0
  %710 = vmatprep.subr.mxu0 0.0
  %711 = vmatpush2.msra.mxu0 0.0
  %712 = vmatprep.subr.mxu0 0.0
  %713 = vmatpush2.msra.mxu0 0.0
  %714 = vmatprep.mubr.f32.mxu0 0.0
  %715 = vmatmul.mubr.f32.gmra.mxu0 %v645
  %v716 = vpop.f32.mrf.mxu0
  %v717 = vadd.f32 %v636, %v716
  %v718 = vpop.f32.mrf.mxu0
  %719 = vmatprep.mubr.f32.mxu0 0.0
  %720 = vmatmul.mubr.f32.gmra.mxu0 %v648
  %v721 = vpop.f32.mrf.mxu0
  %v722 = vadd.f32 %v641, %v721
  %v723 = vpop.f32.mrf.mxu0
  %724 = vdwg.mxu0
  %v725 = vld [vmem:[#allocation2 + $0x20] sm:$0xff]
  %v726 = vld [vmem:[#allocation2 + $0x28] sm:$0xff]
  %v727 = vld [vmem:[%s2 + $0x40] sm:$0xff]
  %v728 = vld [vmem:[%s2 + $0x48] sm:$0xff]
  %v729 = vld [vmem:[%s2 + $0x50] sm:$0xff]
  %v730 = vld [vmem:[%s2 + $0x58] sm:$0xff]
  %v732 = vsel %vm496, %v725, 0
  %v735 = vsel %vm496, %v726, 0
  %737 = vmatprep.subr.mxu0 0.0
  %738 = vmatpush1.msra.mxu0 0.0
  %739 = vmatprep.subr.mxu0 0.0
  %740 = vmatpush1.msra.mxu0 0.0
  %741 = vmatprep.subr.mxu0 0.0
  %742 = vmatpush1.msra.mxu0 0.0
  %743 = vmatprep.subr.mxu0 0.0
  %744 = vmatpush1.msra.mxu0 0.0
  %745 = vmatprep.subr.mxu0 0.0
  %746 = vmatpush1.msra.mxu0 0.0
  %747 = vmatprep.subr.mxu0 0.0
  %748 = vmatpush1.msra.mxu0 0.0
  %749 = vmatprep.subr.mxu0 0.0
  %750 = vmatpush1.msra.mxu0 0.0
  %751 = vmatprep.subr.mxu0 0.0
  %752 = vmatpush1.msra.mxu0 0.0
  %753 = vmatprep.subr.mxu0 0.0
  %754 = vmatpush1.msra.mxu0 0.0
  %755 = vmatprep.subr.mxu0 0.0
  %756 = vmatpush1.msra.mxu0 0.0
  %757 = vmatprep.subr.mxu0 0.0
  %758 = vmatpush1.msra.mxu0 0.0
  %759 = vmatprep.subr.mxu0 0.0
  %760 = vmatpush1.msra.mxu0 0.0
  %761 = vmatprep.subr.mxu0 0.0
  %762 = vmatpush1.msra.mxu0 %v730
  %763 = vmatprep.subr.mxu0 0.0
  %764 = vmatpush1.msra.mxu0 %v729
  %765 = vmatprep.subr.mxu0 0.0
  %766 = vmatpush1.msra.mxu0 %v728
  %767 = vmatprep.subr.mxu0 0.0
  %768 = vmatpush1.msra.mxu0 %v727
  %769 = vmatprep.subr.mxu0 0.0
  %770 = vmatpush2.msra.mxu0 0.0
  %771 = vmatprep.subr.mxu0 0.0
  %772 = vmatpush2.msra.mxu0 0.0
  %773 = vmatprep.subr.mxu0 0.0
  %774 = vmatpush2.msra.mxu0 0.0
  %775 = vmatprep.subr.mxu0 0.0
  %776 = vmatpush2.msra.mxu0 0.0
  %777 = vmatprep.subr.mxu0 0.0
  %778 = vmatpush2.msra.mxu0 0.0
  %779 = vmatprep.subr.mxu0 0.0
  %780 = vmatpush2.msra.mxu0 0.0
  %781 = vmatprep.subr.mxu0 0.0
  %782 = vmatpush2.msra.mxu0 0.0
  %783 = vmatprep.subr.mxu0 0.0
  %784 = vmatpush2.msra.mxu0 0.0
  %785 = vmatprep.subr.mxu0 0.0
  %786 = vmatpush2.msra.mxu0 0.0
  %787 = vmatprep.subr.mxu0 0.0
  %788 = vmatpush2.msra.mxu0 0.0
  %789 = vmatprep.subr.mxu0 0.0
  %790 = vmatpush2.msra.mxu0 0.0
  %791 = vmatprep.subr.mxu0 0.0
  %792 = vmatpush2.msra.mxu0 0.0
  %793 = vmatprep.subr.mxu0 0.0
  %794 = vmatpush2.msra.mxu0 0.0
  %795 = vmatprep.subr.mxu0 0.0
  %796 = vmatpush2.msra.mxu0 0.0
  %797 = vmatprep.subr.mxu0 0.0
  %798 = vmatpush2.msra.mxu0 0.0
  %799 = vmatprep.subr.mxu0 0.0
  %800 = vmatpush2.msra.mxu0 0.0
  %801 = vmatprep.mubr.f32.mxu0 0.0
  %802 = vmatmul.mubr.f32.gmra.mxu0 %v732
  %v803 = vpop.f32.mrf.mxu0
  %v804 = vadd.f32 0.0, %v803
  %v805 = vpop.f32.mrf.mxu0
  %806 = vmatprep.mubr.f32.mxu0 0.0
  %807 = vmatmul.mubr.f32.gmra.mxu0 %v735
  %v808 = vpop.f32.mrf.mxu0
  %v809 = vadd.f32 0.0, %v808
  %v810 = vpop.f32.mrf.mxu0
  %811 = vdwg.mxu0
  %v812 = vadd.f32 %v717, %v804
  %v813 = vadd.f32 %v722, %v809
  %v814 = vld [vmem:[#allocation2 + $0x30] sm:$0xff]
  %v815 = vld [vmem:[#allocation2 + $0x38] sm:$0xff]
  %v816 = vld [vmem:[%s2 + $0x60] sm:$0xff]
  %v817 = vld [vmem:[%s2 + $0x68] sm:$0xff]
  %v818 = vld [vmem:[%s2 + $0x70] sm:$0xff]
  %v819 = vld [vmem:[%s2 + $0x78] sm:$0xff]
  %v821 = vsel %vm496, %v814, 0
  %v824 = vsel %vm496, %v815, 0
  %826 = vmatprep.subr.mxu0 0.0
  %827 = vmatpush1.msra.mxu0 0.0
  %828 = vmatprep.subr.mxu0 0.0
  %829 = vmatpush1.msra.mxu0 0.0
  %830 = vmatprep.subr.mxu0 0.0
  %831 = vmatpush1.msra.mxu0 0.0
  %832 = vmatprep.subr.mxu0 0.0
  %833 = vmatpush1.msra.mxu0 0.0
  %834 = vmatprep.subr.mxu0 0.0
  %835 = vmatpush1.msra.mxu0 0.0
  %836 = vmatprep.subr.mxu0 0.0
  %837 = vmatpush1.msra.mxu0 0.0
  %838 = vmatprep.subr.mxu0 0.0
  %839 = vmatpush1.msra.mxu0 0.0
  %840 = vmatprep.subr.mxu0 0.0
  %841 = vmatpush1.msra.mxu0 0.0
  %842 = vmatprep.subr.mxu0 0.0
  %843 = vmatpush1.msra.mxu0 0.0
  %844 = vmatprep.subr.mxu0 0.0
  %845 = vmatpush1.msra.mxu0 0.0
  %846 = vmatprep.subr.mxu0 0.0
  %847 = vmatpush1.msra.mxu0 0.0
  %848 = vmatprep.subr.mxu0 0.0
  %849 = vmatpush1.msra.mxu0 0.0
  %850 = vmatprep.subr.mxu0 0.0
  %851 = vmatpush1.msra.mxu0 %v819
  %852 = vmatprep.subr.mxu0 0.0
  %853 = vmatpush1.msra.mxu0 %v818
  %854 = vmatprep.subr.mxu0 0.0
  %855 = vmatpush1.msra.mxu0 %v817
  %856 = vmatprep.subr.mxu0 0.0
  %857 = vmatpush1.msra.mxu0 %v816
  %858 = vmatprep.subr.mxu0 0.0
  %859 = vmatpush2.msra.mxu0 0.0
  %860 = vmatprep.subr.mxu0 0.0
  %861 = vmatpush2.msra.mxu0 0.0
  %862 = vmatprep.subr.mxu0 0.0
  %863 = vmatpush2.msra.mxu0 0.0
  %864 = vmatprep.subr.mxu0 0.0
  %865 = vmatpush2.msra.mxu0 0.0
  %866 = vmatprep.subr.mxu0 0.0
  %867 = vmatpush2.msra.mxu0 0.0
  %868 = vmatprep.subr.mxu0 0.0
  %869 = vmatpush2.msra.mxu0 0.0
  %870 = vmatprep.subr.mxu0 0.0
  %871 = vmatpush2.msra.mxu0 0.0
  %872 = vmatprep.subr.mxu0 0.0
  %873 = vmatpush2.msra.mxu0 0.0
  %874 = vmatprep.subr.mxu0 0.0
  %875 = vmatpush2.msra.mxu0 0.0
  %876 = vmatprep.subr.mxu0 0.0
  %877 = vmatpush2.msra.mxu0 0.0
  %878 = vmatprep.subr.mxu0 0.0
  %879 = vmatpush2.msra.mxu0 0.0
  %880 = vmatprep.subr.mxu0 0.0
  %881 = vmatpush2.msra.mxu0 0.0
  %882 = vmatprep.subr.mxu0 0.0
  %883 = vmatpush2.msra.mxu0 0.0
  %884 = vmatprep.subr.mxu0 0.0
  %885 = vmatpush2.msra.mxu0 0.0
  %886 = vmatprep.subr.mxu0 0.0
  %887 = vmatpush2.msra.mxu0 0.0
  %888 = vmatprep.subr.mxu0 0.0
  %889 = vmatpush2.msra.mxu0 0.0
  %890 = vmatprep.mubr.f32.mxu0 0.0
  %891 = vmatmul.mubr.f32.gmra.mxu0 %v821
  %v892 = vpop.f32.mrf.mxu0
  %v893 = vadd.f32 0.0, %v892
  %v894 = vpop.f32.mrf.mxu0
  %895 = vmatprep.mubr.f32.mxu0 0.0
  %896 = vmatmul.mubr.f32.gmra.mxu0 %v824
  %v897 = vpop.f32.mrf.mxu0
  %v898 = vadd.f32 0.0, %v897
  %v899 = vpop.f32.mrf.mxu0
  %900 = vdwg.mxu0
  %v901 = vadd.f32 %v812, %v893
  %v902 = vadd.f32 %v813, %v898
  %v903 = vld [vmem:[#allocation2 + $0x40] sm:$0xff]
  %v904 = vld [vmem:[#allocation2 + $0x48] sm:$0xff]
  %v905 = vld [vmem:[%s2 + $0x80] sm:$0xff]
  %v906 = vld [vmem:[%s2 + $0x88] sm:$0xff]
  %v907 = vld [vmem:[%s2 + $0x90] sm:$0xff]
  %v908 = vld [vmem:[%s2 + $0x98] sm:$0xff]
  %v910 = vsel %vm496, %v903, 0
  %v913 = vsel %vm496, %v904, 0
  %915 = vmatprep.subr.mxu0 0.0
  %916 = vmatpush1.msra.mxu0 0.0
  %917 = vmatprep.subr.mxu0 0.0
  %918 = vmatpush1.msra.mxu0 0.0
  %919 = vmatprep.subr.mxu0 0.0
  %920 = vmatpush1.msra.mxu0 0.0
  %921 = vmatprep.subr.mxu0 0.0
  %922 = vmatpush1.msra.mxu0 0.0
  %923 = vmatprep.subr.mxu0 0.0
  %924 = vmatpush1.msra.mxu0 0.0
  %925 = vmatprep.subr.mxu0 0.0
  %926 = vmatpush1.msra.mxu0 0.0
  %927 = vmatprep.subr.mxu0 0.0
  %928 = vmatpush1.msra.mxu0 0.0
  %929 = vmatprep.subr.mxu0 0.0
  %930 = vmatpush1.msra.mxu0 0.0
  %931 = vmatprep.subr.mxu0 0.0
  %932 = vmatpush1.msra.mxu0 0.0
  %933 = vmatprep.subr.mxu0 0.0
  %934 = vmatpush1.msra.mxu0 0.0
  %935 = vmatprep.subr.mxu0 0.0
  %936 = vmatpush1.msra.mxu0 0.0
  %937 = vmatprep.subr.mxu0 0.0
  %938 = vmatpush1.msra.mxu0 0.0
  %939 = vmatprep.subr.mxu0 0.0
  %940 = vmatpush1.msra.mxu0 %v908
  %941 = vmatprep.subr.mxu0 0.0
  %942 = vmatpush1.msra.mxu0 %v907
  %943 = vmatprep.subr.mxu0 0.0
  %944 = vmatpush1.msra.mxu0 %v906
  %945 = vmatprep.subr.mxu0 0.0
  %946 = vmatpush1.msra.mxu0 %v905
  %947 = vmatprep.subr.mxu0 0.0
  %948 = vmatpush2.msra.mxu0 0.0
  %949 = vmatprep.subr.mxu0 0.0
  %950 = vmatpush2.msra.mxu0 0.0
  %951 = vmatprep.subr.mxu0 0.0
  %952 = vmatpush2.msra.mxu0 0.0
  %953 = vmatprep.subr.mxu0 0.0
  %954 = vmatpush2.msra.mxu0 0.0
  %955 = vmatprep.subr.mxu0 0.0
  %956 = vmatpush2.msra.mxu0 0.0
  %957 = vmatprep.subr.mxu0 0.0
  %958 = vmatpush2.msra.mxu0 0.0
  %959 = vmatprep.subr.mxu0 0.0
  %960 = vmatpush2.msra.mxu0 0.0
  %961 = vmatprep.subr.mxu0 0.0
  %962 = vmatpush2.msra.mxu0 0.0
  %963 = vmatprep.subr.mxu0 0.0
  %964 = vmatpush2.msra.mxu0 0.0
  %965 = vmatprep.subr.mxu0 0.0
  %966 = vmatpush2.msra.mxu0 0.0
  %967 = vmatprep.subr.mxu0 0.0
  %968 = vmatpush2.msra.mxu0 0.0
  %969 = vmatprep.subr.mxu0 0.0
  %970 = vmatpush2.msra.mxu0 0.0
  %971 = vmatprep.subr.mxu0 0.0
  %972 = vmatpush2.msra.mxu0 0.0
  %973 = vmatprep.subr.mxu0 0.0
  %974 = vmatpush2.msra.mxu0 0.0
  %975 = vmatprep.subr.mxu0 0.0
  %976 = vmatpush2.msra.mxu0 0.0
  %977 = vmatprep.subr.mxu0 0.0
  %978 = vmatpush2.msra.mxu0 0.0
  %979 = vmatprep.mubr.f32.mxu0 0.0
  %980 = vmatmul.mubr.f32.gmra.mxu0 %v910
  %v981 = vpop.f32.mrf.mxu0
  %v982 = vadd.f32 0.0, %v981
  %v983 = vpop.f32.mrf.mxu0
  %984 = vmatprep.mubr.f32.mxu0 0.0
  %985 = vmatmul.mubr.f32.gmra.mxu0 %v913
  %v986 = vpop.f32.mrf.mxu0
  %v987 = vadd.f32 0.0, %v986
  %v988 = vpop.f32.mrf.mxu0
  %989 = vdwg.mxu0
  %v990 = vadd.f32 %v901, %v982
  %v991 = vadd.f32 %v902, %v987
  %v992 = vld [vmem:[#allocation2 + $0x50] sm:$0xff]
  %v993 = vld [vmem:[#allocation2 + $0x58] sm:$0xff]
  %v994 = vld [vmem:[%s2 + $0xa0] sm:$0xff]
  %v995 = vld [vmem:[%s2 + $0xa8] sm:$0xff]
  %v996 = vld [vmem:[%s2 + $0xb0] sm:$0xff]
  %v997 = vld [vmem:[%s2 + $0xb8] sm:$0xff]
  %v999 = vsel %vm496, %v992, 0
  %v1002 = vsel %vm496, %v993, 0
  %1004 = vmatprep.subr.mxu0 0.0
  %1005 = vmatpush1.msra.mxu0 0.0
  %1006 = vmatprep.subr.mxu0 0.0
  %1007 = vmatpush1.msra.mxu0 0.0
  %1008 = vmatprep.subr.mxu0 0.0
  %1009 = vmatpush1.msra.mxu0 0.0
  %1010 = vmatprep.subr.mxu0 0.0
  %1011 = vmatpush1.msra.mxu0 0.0
  %1012 = vmatprep.subr.mxu0 0.0
  %1013 = vmatpush1.msra.mxu0 0.0
  %1014 = vmatprep.subr.mxu0 0.0
  %1015 = vmatpush1.msra.mxu0 0.0
  %1016 = vmatprep.subr.mxu0 0.0
  %1017 = vmatpush1.msra.mxu0 0.0
  %1018 = vmatprep.subr.mxu0 0.0
  %1019 = vmatpush1.msra.mxu0 0.0
  %1020 = vmatprep.subr.mxu0 0.0
  %1021 = vmatpush1.msra.mxu0 0.0
  %1022 = vmatprep.subr.mxu0 0.0
  %1023 = vmatpush1.msra.mxu0 0.0
  %1024 = vmatprep.subr.mxu0 0.0
  %1025 = vmatpush1.msra.mxu0 0.0
  %1026 = vmatprep.subr.mxu0 0.0
  %1027 = vmatpush1.msra.mxu0 0.0
  %1028 = vmatprep.subr.mxu0 0.0
  %1029 = vmatpush1.msra.mxu0 %v997
  %1030 = vmatprep.subr.mxu0 0.0
  %1031 = vmatpush1.msra.mxu0 %v996
  %1032 = vmatprep.subr.mxu0 0.0
  %1033 = vmatpush1.msra.mxu0 %v995
  %1034 = vmatprep.subr.mxu0 0.0
  %1035 = vmatpush1.msra.mxu0 %v994
  %1036 = vmatprep.subr.mxu0 0.0
  %1037 = vmatpush2.msra.mxu0 0.0
  %1038 = vmatprep.subr.mxu0 0.0
  %1039 = vmatpush2.msra.mxu0 0.0
  %1040 = vmatprep.subr.mxu0 0.0
  %1041 = vmatpush2.msra.mxu0 0.0
  %1042 = vmatprep.subr.mxu0 0.0
  %1043 = vmatpush2.msra.mxu0 0.0
  %1044 = vmatprep.subr.mxu0 0.0
  %1045 = vmatpush2.msra.mxu0 0.0
  %1046 = vmatprep.subr.mxu0 0.0
  %1047 = vmatpush2.msra.mxu0 0.0
  %1048 = vmatprep.subr.mxu0 0.0
  %1049 = vmatpush2.msra.mxu0 0.0
  %1050 = vmatprep.subr.mxu0 0.0
  %1051 = vmatpush2.msra.mxu0 0.0
  %1052 = vmatprep.subr.mxu0 0.0
  %1053 = vmatpush2.msra.mxu0 0.0
  %1054 = vmatprep.subr.mxu0 0.0
  %1055 = vmatpush2.msra.mxu0 0.0
  %1056 = vmatprep.subr.mxu0 0.0
  %1057 = vmatpush2.msra.mxu0 0.0
  %1058 = vmatprep.subr.mxu0 0.0
  %1059 = vmatpush2.msra.mxu0 0.0
  %1060 = vmatprep.subr.mxu0 0.0
  %1061 = vmatpush2.msra.mxu0 0.0
  %1062 = vmatprep.subr.mxu0 0.0
  %1063 = vmatpush2.msra.mxu0 0.0
  %1064 = vmatprep.subr.mxu0 0.0
  %1065 = vmatpush2.msra.mxu0 0.0
  %1066 = vmatprep.subr.mxu0 0.0
  %1067 = vmatpush2.msra.mxu0 0.0
  %1068 = vmatprep.mubr.f32.mxu0 0.0
  %1069 = vmatmul.mubr.f32.gmra.mxu0 %v999
  %v1070 = vpop.f32.mrf.mxu0
  %v1071 = vadd.f32 0.0, %v1070
  %v1072 = vpop.f32.mrf.mxu0
  %1073 = vmatprep.mubr.f32.mxu0 0.0
  %1074 = vmatmul.mubr.f32.gmra.mxu0 %v1002
  %v1075 = vpop.f32.mrf.mxu0
  %v1076 = vadd.f32 0.0, %v1075
  %v1077 = vpop.f32.mrf.mxu0
  %1078 = vdwg.mxu0
  %v1079 = vadd.f32 %v990, %v1071
  %v1080 = vadd.f32 %v991, %v1076
  %v1081 = vld [vmem:[#allocation2 + $0x60] sm:$0xff]
  %v1082 = vld [vmem:[#allocation2 + $0x68] sm:$0xff]
  %v1083 = vld [vmem:[%s2 + $0xc0] sm:$0xff]
  %v1084 = vld [vmem:[%s2 + $0xc8] sm:$0xff]
  %v1085 = vld [vmem:[%s2 + $0xd0] sm:$0xff]
  %v1086 = vld [vmem:[%s2 + $0xd8] sm:$0xff]
  %v1088 = vsel %vm496, %v1081, 0
  %v1091 = vsel %vm496, %v1082, 0
  %1093 = vmatprep.subr.mxu0 0.0
  %1094 = vmatpush1.msra.mxu0 0.0
  %1095 = vmatprep.subr.mxu0 0.0
  %1096 = vmatpush1.msra.mxu0 0.0
  %1097 = vmatprep.subr.mxu0 0.0
  %1098 = vmatpush1.msra.mxu0 0.0
  %1099 = vmatprep.subr.mxu0 0.0
  %1100 = vmatpush1.msra.mxu0 0.0
  %1101 = vmatprep.subr.mxu0 0.0
  %1102 = vmatpush1.msra.mxu0 0.0
  %1103 = vmatprep.subr.mxu0 0.0
  %1104 = vmatpush1.msra.mxu0 0.0
  %1105 = vmatprep.subr.mxu0 0.0
  %1106 = vmatpush1.msra.mxu0 0.0
  %1107 = vmatprep.subr.mxu0 0.0
  %1108 = vmatpush1.msra.mxu0 0.0
  %1109 = vmatprep.subr.mxu0 0.0
  %1110 = vmatpush1.msra.mxu0 0.0
  %1111 = vmatprep.subr.mxu0 0.0
  %1112 = vmatpush1.msra.mxu0 0.0
  %1113 = vmatprep.subr.mxu0 0.0
  %1114 = vmatpush1.msra.mxu0 0.0
  %1115 = vmatprep.subr.mxu0 0.0
  %1116 = vmatpush1.msra.mxu0 0.0
  %1117 = vmatprep.subr.mxu0 0.0
  %1118 = vmatpush1.msra.mxu0 %v1086
  %1119 = vmatprep.subr.mxu0 0.0
  %1120 = vmatpush1.msra.mxu0 %v1085
  %1121 = vmatprep.subr.mxu0 0.0
  %1122 = vmatpush1.msra.mxu0 %v1084
  %1123 = vmatprep.subr.mxu0 0.0
  %1124 = vmatpush1.msra.mxu0 %v1083
  %1125 = vmatprep.subr.mxu0 0.0
  %1126 = vmatpush2.msra.mxu0 0.0
  %1127 = vmatprep.subr.mxu0 0.0
  %1128 = vmatpush2.msra.mxu0 0.0
  %1129 = vmatprep.subr.mxu0 0.0
  %1130 = vmatpush2.msra.mxu0 0.0
  %1131 = vmatprep.subr.mxu0 0.0
  %1132 = vmatpush2.msra.mxu0 0.0
  %1133 = vmatprep.subr.mxu0 0.0
  %1134 = vmatpush2.msra.mxu0 0.0
  %1135 = vmatprep.subr.mxu0 0.0
  %1136 = vmatpush2.msra.mxu0 0.0
  %1137 = vmatprep.subr.mxu0 0.0
  %1138 = vmatpush2.msra.mxu0 0.0
  %1139 = vmatprep.subr.mxu0 0.0
  %1140 = vmatpush2.msra.mxu0 0.0
  %1141 = vmatprep.subr.mxu0 0.0
  %1142 = vmatpush2.msra.mxu0 0.0
  %1143 = vmatprep.subr.mxu0 0.0
  %1144 = vmatpush2.msra.mxu0 0.0
  %1145 = vmatprep.subr.mxu0 0.0
  %1146 = vmatpush2.msra.mxu0 0.0
  %1147 = vmatprep.subr.mxu0 0.0
  %1148 = vmatpush2.msra.mxu0 0.0
  %1149 = vmatprep.subr.mxu0 0.0
  %1150 = vmatpush2.msra.mxu0 0.0
  %1151 = vmatprep.subr.mxu0 0.0
  %1152 = vmatpush2.msra.mxu0 0.0
  %1153 = vmatprep.subr.mxu0 0.0
  %1154 = vmatpush2.msra.mxu0 0.0
  %1155 = vmatprep.subr.mxu0 0.0
  %1156 = vmatpush2.msra.mxu0 0.0
  %1157 = vmatprep.mubr.f32.mxu0 0.0
  %1158 = vmatmul.mubr.f32.gmra.mxu0 %v1088
  %v1159 = vpop.f32.mrf.mxu0
  %v1160 = vadd.f32 0.0, %v1159
  %v1161 = vpop.f32.mrf.mxu0
  %1162 = vmatprep.mubr.f32.mxu0 0.0
  %1163 = vmatmul.mubr.f32.gmra.mxu0 %v1091
  %v1164 = vpop.f32.mrf.mxu0
  %v1165 = vadd.f32 0.0, %v1164
  %v1166 = vpop.f32.mrf.mxu0
  %1167 = vdwg.mxu0
  %v1168 = vadd.f32 %v1079, %v1160
  %v1169 = vadd.f32 %v1080, %v1165
  %v1170 = vld [vmem:[#allocation2 + $0x70] sm:$0xff]
  %v1171 = vld [vmem:[#allocation2 + $0x78] sm:$0xff]
  %v1172 = vld [vmem:[%s2 + $0xe0] sm:$0xff]
  %v1173 = vld [vmem:[%s2 + $0xe8] sm:$0xff]
  %v1174 = vld [vmem:[%s2 + $0xf0] sm:$0xff]
  %v1175 = vld [vmem:[%s2 + $0xf8] sm:$0xff]
  %v1177 = vsel %vm496, %v1170, 0
  %v1180 = vsel %vm496, %v1171, 0
  %1182 = vmatprep.subr.mxu0 0.0
  %1183 = vmatpush1.msra.mxu0 0.0
  %1184 = vmatprep.subr.mxu0 0.0
  %1185 = vmatpush1.msra.mxu0 0.0
  %1186 = vmatprep.subr.mxu0 0.0
  %1187 = vmatpush1.msra.mxu0 0.0
  %1188 = vmatprep.subr.mxu0 0.0
  %1189 = vmatpush1.msra.mxu0 0.0
  %1190 = vmatprep.subr.mxu0 0.0
  %1191 = vmatpush1.msra.mxu0 0.0
  %1192 = vmatprep.subr.mxu0 0.0
  %1193 = vmatpush1.msra.mxu0 0.0
  %1194 = vmatprep.subr.mxu0 0.0
  %1195 = vmatpush1.msra.mxu0 0.0
  %1196 = vmatprep.subr.mxu0 0.0
  %1197 = vmatpush1.msra.mxu0 0.0
  %1198 = vmatprep.subr.mxu0 0.0
  %1199 = vmatpush1.msra.mxu0 0.0
  %1200 = vmatprep.subr.mxu0 0.0
  %1201 = vmatpush1.msra.mxu0 0.0
  %1202 = vmatprep.subr.mxu0 0.0
  %1203 = vmatpush1.msra.mxu0 0.0
  %1204 = vmatprep.subr.mxu0 0.0
  %1205 = vmatpush1.msra.mxu0 0.0
  %1206 = vmatprep.subr.mxu0 0.0
  %1207 = vmatpush1.msra.mxu0 %v1175
  %1208 = vmatprep.subr.mxu0 0.0
  %1209 = vmatpush1.msra.mxu0 %v1174
  %1210 = vmatprep.subr.mxu0 0.0
  %1211 = vmatpush1.msra.mxu0 %v1173
  %1212 = vmatprep.subr.mxu0 0.0
  %1213 = vmatpush1.msra.mxu0 %v1172
  %1214 = vmatprep.subr.mxu0 0.0
  %1215 = vmatpush2.msra.mxu0 0.0
  %1216 = vmatprep.subr.mxu0 0.0
  %1217 = vmatpush2.msra.mxu0 0.0
  %1218 = vmatprep.subr.mxu0 0.0
  %1219 = vmatpush2.msra.mxu0 0.0
  %1220 = vmatprep.subr.mxu0 0.0
  %1221 = vmatpush2.msra.mxu0 0.0
  %1222 = vmatprep.subr.mxu0 0.0
  %1223 = vmatpush2.msra.mxu0 0.0
  %1224 = vmatprep.subr.mxu0 0.0
  %1225 = vmatpush2.msra.mxu0 0.0
  %1226 = vmatprep.subr.mxu0 0.0
  %1227 = vmatpush2.msra.mxu0 0.0
  %1228 = vmatprep.subr.mxu0 0.0
  %1229 = vmatpush2.msra.mxu0 0.0
  %1230 = vmatprep.subr.mxu0 0.0
  %1231 = vmatpush2.msra.mxu0 0.0
  %1232 = vmatprep.subr.mxu0 0.0
  %1233 = vmatpush2.msra.mxu0 0.0
  %1234 = vmatprep.subr.mxu0 0.0
  %1235 = vmatpush2.msra.mxu0 0.0
  %1236 = vmatprep.subr.mxu0 0.0
  %1237 = vmatpush2.msra.mxu0 0.0
  %1238 = vmatprep.subr.mxu0 0.0
  %1239 = vmatpush2.msra.mxu0 0.0
  %1240 = vmatprep.subr.mxu0 0.0
  %1241 = vmatpush2.msra.mxu0 0.0
  %1242 = vmatprep.subr.mxu0 0.0
  %1243 = vmatpush2.msra.mxu0 0.0
  %1244 = vmatprep.subr.mxu0 0.0
  %1245 = vmatpush2.msra.mxu0 0.0
  %1246 = vmatprep.mubr.f32.mxu0 0.0
  %1247 = vmatmul.mubr.f32.gmra.mxu0 %v1177
  %v1248 = vpop.f32.mrf.mxu0
  %v1249 = vadd.f32 0.0, %v1248
  %v1250 = vpop.f32.mrf.mxu0
  %1251 = vmatprep.mubr.f32.mxu0 0.0
  %1252 = vmatmul.mubr.f32.gmra.mxu0 %v1180
  %v1253 = vpop.f32.mrf.mxu0
  %v1254 = vadd.f32 0.0, %v1253
  %v1255 = vpop.f32.mrf.mxu0
  %1256 = vdwg.mxu0
  %v1257 = vadd.f32 %v1168, %v1249
  %v1258 = vadd.f32 %v1169, %v1254
  %v1259 = vld [vmem:[#allocation2 + $0x80] sm:$0xff]
  %v1260 = vld [vmem:[#allocation2 + $0x88] sm:$0xff]
  %v1261 = vld [vmem:[%s2 + $0x100] sm:$0xff]
  %v1262 = vld [vmem:[%s2 + $0x108] sm:$0xff]
  %v1263 = vld [vmem:[%s2 + $0x110] sm:$0xff]
  %v1264 = vld [vmem:[%s2 + $0x118] sm:$0xff]
  %v1266 = vsel %vm496, %v1259, 0
  %v1269 = vsel %vm496, %v1260, 0
  %1271 = vmatprep.subr.mxu0 0.0
  %1272 = vmatpush1.msra.mxu0 0.0
  %1273 = vmatprep.subr.mxu0 0.0
  %1274 = vmatpush1.msra.mxu0 0.0
  %1275 = vmatprep.subr.mxu0 0.0
  %1276 = vmatpush1.msra.mxu0 0.0
  %1277 = vmatprep.subr.mxu0 0.0
  %1278 = vmatpush1.msra.mxu0 0.0
  %1279 = vmatprep.subr.mxu0 0.0
  %1280 = vmatpush1.msra.mxu0 0.0
  %1281 = vmatprep.subr.mxu0 0.0
  %1282 = vmatpush1.msra.mxu0 0.0
  %1283 = vmatprep.subr.mxu0 0.0
  %1284 = vmatpush1.msra.mxu0 0.0
  %1285 = vmatprep.subr.mxu0 0.0
  %1286 = vmatpush1.msra.mxu0 0.0
  %1287 = vmatprep.subr.mxu0 0.0
  %1288 = vmatpush1.msra.mxu0 0.0
  %1289 = vmatprep.subr.mxu0 0.0
  %1290 = vmatpush1.msra.mxu0 0.0
  %1291 = vmatprep.subr.mxu0 0.0
  %1292 = vmatpush1.msra.mxu0 0.0
  %1293 = vmatprep.subr.mxu0 0.0
  %1294 = vmatpush1.msra.mxu0 0.0
  %1295 = vmatprep.subr.mxu0 0.0
  %1296 = vmatpush1.msra.mxu0 %v1264
  %1297 = vmatprep.subr.mxu0 0.0
  %1298 = vmatpush1.msra.mxu0 %v1263
  %1299 = vmatprep.subr.mxu0 0.0
  %1300 = vmatpush1.msra.mxu0 %v1262
  %1301 = vmatprep.subr.mxu0 0.0
  %1302 = vmatpush1.msra.mxu0 %v1261
  %1303 = vmatprep.subr.mxu0 0.0
  %1304 = vmatpush2.msra.mxu0 0.0
  %1305 = vmatprep.subr.mxu0 0.0
  %1306 = vmatpush2.msra.mxu0 0.0
  %1307 = vmatprep.subr.mxu0 0.0
  %1308 = vmatpush2.msra.mxu0 0.0
  %1309 = vmatprep.subr.mxu0 0.0
  %1310 = vmatpush2.msra.mxu0 0.0
  %1311 = vmatprep.subr.mxu0 0.0
  %1312 = vmatpush2.msra.mxu0 0.0
  %1313 = vmatprep.subr.mxu0 0.0
  %1314 = vmatpush2.msra.mxu0 0.0
  %1315 = vmatprep.subr.mxu0 0.0
  %1316 = vmatpush2.msra.mxu0 0.0
  %1317 = vmatprep.subr.mxu0 0.0
  %1318 = vmatpush2.msra.mxu0 0.0
  %1319 = vmatprep.subr.mxu0 0.0
  %1320 = vmatpush2.msra.mxu0 0.0
  %1321 = vmatprep.subr.mxu0 0.0
  %1322 = vmatpush2.msra.mxu0 0.0
  %1323 = vmatprep.subr.mxu0 0.0
  %1324 = vmatpush2.msra.mxu0 0.0
  %1325 = vmatprep.subr.mxu0 0.0
  %1326 = vmatpush2.msra.mxu0 0.0
  %1327 = vmatprep.subr.mxu0 0.0
  %1328 = vmatpush2.msra.mxu0 0.0
  %1329 = vmatprep.subr.mxu0 0.0
  %1330 = vmatpush2.msra.mxu0 0.0
  %1331 = vmatprep.subr.mxu0 0.0
  %1332 = vmatpush2.msra.mxu0 0.0
  %1333 = vmatprep.subr.mxu0 0.0
  %1334 = vmatpush2.msra.mxu0 0.0
  %1335 = vmatprep.mubr.f32.mxu0 0.0
  %1336 = vmatmul.mubr.f32.gmra.mxu0 %v1266
  %v1337 = vpop.f32.mrf.mxu0
  %v1338 = vadd.f32 0.0, %v1337
  %v1339 = vpop.f32.mrf.mxu0
  %1340 = vmatprep.mubr.f32.mxu0 0.0
  %1341 = vmatmul.mubr.f32.gmra.mxu0 %v1269
  %v1342 = vpop.f32.mrf.mxu0
  %v1343 = vadd.f32 0.0, %v1342
  %v1344 = vpop.f32.mrf.mxu0
  %1345 = vdwg.mxu0
  %v1346 = vadd.f32 %v1257, %v1338
  %v1347 = vadd.f32 %v1258, %v1343
  %v1348 = vld [vmem:[#allocation2 + $0x90] sm:$0xff]
  %v1349 = vld [vmem:[#allocation2 + $0x98] sm:$0xff]
  %v1350 = vld [vmem:[%s2 + $0x120] sm:$0xff]
  %v1351 = vld [vmem:[%s2 + $0x128] sm:$0xff]
  %v1352 = vld [vmem:[%s2 + $0x130] sm:$0xff]
  %v1353 = vld [vmem:[%s2 + $0x138] sm:$0xff]
  %v1355 = vsel %vm496, %v1348, 0
  %v1358 = vsel %vm496, %v1349, 0
  %1360 = vmatprep.subr.mxu0 0.0
  %1361 = vmatpush1.msra.mxu0 0.0
  %1362 = vmatprep.subr.mxu0 0.0
  %1363 = vmatpush1.msra.mxu0 0.0
  %1364 = vmatprep.subr.mxu0 0.0
  %1365 = vmatpush1.msra.mxu0 0.0
  %1366 = vmatprep.subr.mxu0 0.0
  %1367 = vmatpush1.msra.mxu0 0.0
  %1368 = vmatprep.subr.mxu0 0.0
  %1369 = vmatpush1.msra.mxu0 0.0
  %1370 = vmatprep.subr.mxu0 0.0
  %1371 = vmatpush1.msra.mxu0 0.0
  %1372 = vmatprep.subr.mxu0 0.0
  %1373 = vmatpush1.msra.mxu0 0.0
  %1374 = vmatprep.subr.mxu0 0.0
  %1375 = vmatpush1.msra.mxu0 0.0
  %1376 = vmatprep.subr.mxu0 0.0
  %1377 = vmatpush1.msra.mxu0 0.0
  %1378 = vmatprep.subr.mxu0 0.0
  %1379 = vmatpush1.msra.mxu0 0.0
  %1380 = vmatprep.subr.mxu0 0.0
  %1381 = vmatpush1.msra.mxu0 0.0
  %1382 = vmatprep.subr.mxu0 0.0
  %1383 = vmatpush1.msra.mxu0 0.0
  %1384 = vmatprep.subr.mxu0 0.0
  %1385 = vmatpush1.msra.mxu0 %v1353
  %1386 = vmatprep.subr.mxu0 0.0
  %1387 = vmatpush1.msra.mxu0 %v1352
  %1388 = vmatprep.subr.mxu0 0.0
  %1389 = vmatpush1.msra.mxu0 %v1351
  %1390 = vmatprep.subr.mxu0 0.0
  %1391 = vmatpush1.msra.mxu0 %v1350
  %1392 = vmatprep.subr.mxu0 0.0
  %1393 = vmatpush2.msra.mxu0 0.0
  %1394 = vmatprep.subr.mxu0 0.0
  %1395 = vmatpush2.msra.mxu0 0.0
  %1396 = vmatprep.subr.mxu0 0.0
  %1397 = vmatpush2.msra.mxu0 0.0
  %1398 = vmatprep.subr.mxu0 0.0
  %1399 = vmatpush2.msra.mxu0 0.0
  %1400 = vmatprep.subr.mxu0 0.0
  %1401 = vmatpush2.msra.mxu0 0.0
  %1402 = vmatprep.subr.mxu0 0.0
  %1403 = vmatpush2.msra.mxu0 0.0
  %1404 = vmatprep.subr.mxu0 0.0
  %1405 = vmatpush2.msra.mxu0 0.0
  %1406 = vmatprep.subr.mxu0 0.0
  %1407 = vmatpush2.msra.mxu0 0.0
  %1408 = vmatprep.subr.mxu0 0.0
  %1409 = vmatpush2.msra.mxu0 0.0
  %1410 = vmatprep.subr.mxu0 0.0
  %1411 = vmatpush2.msra.mxu0 0.0
  %1412 = vmatprep.subr.mxu0 0.0
  %1413 = vmatpush2.msra.mxu0 0.0
  %1414 = vmatprep.subr.mxu0 0.0
  %1415 = vmatpush2.msra.mxu0 0.0
  %1416 = vmatprep.subr.mxu0 0.0
  %1417 = vmatpush2.msra.mxu0 0.0
  %1418 = vmatprep.subr.mxu0 0.0
  %1419 = vmatpush2.msra.mxu0 0.0
  %1420 = vmatprep.subr.mxu0 0.0
  %1421 = vmatpush2.msra.mxu0 0.0
  %1422 = vmatprep.subr.mxu0 0.0
  %1423 = vmatpush2.msra.mxu0 0.0
  %1424 = vmatprep.mubr.f32.mxu0 0.0
  %1425 = vmatmul.mubr.f32.gmra.mxu0 %v1355
  %v1426 = vpop.f32.mrf.mxu0
  %v1427 = vadd.f32 0.0, %v1426
  %v1428 = vpop.f32.mrf.mxu0
  %1429 = vmatprep.mubr.f32.mxu0 0.0
  %1430 = vmatmul.mubr.f32.gmra.mxu0 %v1358
  %v1431 = vpop.f32.mrf.mxu0
  %v1432 = vadd.f32 0.0, %v1431
  %v1433 = vpop.f32.mrf.mxu0
  %1434 = vdwg.mxu0
  %v1435 = vadd.f32 %v1346, %v1427
  %v1436 = vadd.f32 %v1347, %v1432
  %v1437 = vld [vmem:[#allocation2 + $0xa0] sm:$0xff]
  %v1438 = vld [vmem:[#allocation2 + $0xa8] sm:$0xff]
  %v1439 = vld [vmem:[%s2 + $0x140] sm:$0xff]
  %v1440 = vld [vmem:[%s2 + $0x148] sm:$0xff]
  %v1441 = vld [vmem:[%s2 + $0x150] sm:$0xff]
  %v1442 = vld [vmem:[%s2 + $0x158] sm:$0xff]
  %v1444 = vsel %vm496, %v1437, 0
  %v1447 = vsel %vm496, %v1438, 0
  %1449 = vmatprep.subr.mxu0 0.0
  %1450 = vmatpush1.msra.mxu0 0.0
  %1451 = vmatprep.subr.mxu0 0.0
  %1452 = vmatpush1.msra.mxu0 0.0
  %1453 = vmatprep.subr.mxu0 0.0
  %1454 = vmatpush1.msra.mxu0 0.0
  %1455 = vmatprep.subr.mxu0 0.0
  %1456 = vmatpush1.msra.mxu0 0.0
  %1457 = vmatprep.subr.mxu0 0.0
  %1458 = vmatpush1.msra.mxu0 0.0
  %1459 = vmatprep.subr.mxu0 0.0
  %1460 = vmatpush1.msra.mxu0 0.0
  %1461 = vmatprep.subr.mxu0 0.0
  %1462 = vmatpush1.msra.mxu0 0.0
  %1463 = vmatprep.subr.mxu0 0.0
  %1464 = vmatpush1.msra.mxu0 0.0
  %1465 = vmatprep.subr.mxu0 0.0
  %1466 = vmatpush1.msra.mxu0 0.0
  %1467 = vmatprep.subr.mxu0 0.0
  %1468 = vmatpush1.msra.mxu0 0.0
  %1469 = vmatprep.subr.mxu0 0.0
  %1470 = vmatpush1.msra.mxu0 0.0
  %1471 = vmatprep.subr.mxu0 0.0
  %1472 = vmatpush1.msra.mxu0 0.0
  %1473 = vmatprep.subr.mxu0 0.0
  %1474 = vmatpush1.msra.mxu0 %v1442
  %1475 = vmatprep.subr.mxu0 0.0
  %1476 = vmatpush1.msra.mxu0 %v1441
  %1477 = vmatprep.subr.mxu0 0.0
  %1478 = vmatpush1.msra.mxu0 %v1440
  %1479 = vmatprep.subr.mxu0 0.0
  %1480 = vmatpush1.msra.mxu0 %v1439
  %1481 = vmatprep.subr.mxu0 0.0
  %1482 = vmatpush2.msra.mxu0 0.0
  %1483 = vmatprep.subr.mxu0 0.0
  %1484 = vmatpush2.msra.mxu0 0.0
  %1485 = vmatprep.subr.mxu0 0.0
  %1486 = vmatpush2.msra.mxu0 0.0
  %1487 = vmatprep.subr.mxu0 0.0
  %1488 = vmatpush2.msra.mxu0 0.0
  %1489 = vmatprep.subr.mxu0 0.0
  %1490 = vmatpush2.msra.mxu0 0.0
  %1491 = vmatprep.subr.mxu0 0.0
  %1492 = vmatpush2.msra.mxu0 0.0
  %1493 = vmatprep.subr.mxu0 0.0
  %1494 = vmatpush2.msra.mxu0 0.0
  %1495 = vmatprep.subr.mxu0 0.0
  %1496 = vmatpush2.msra.mxu0 0.0
  %1497 = vmatprep.subr.mxu0 0.0
  %1498 = vmatpush2.msra.mxu0 0.0
  %1499 = vmatprep.subr.mxu0 0.0
  %1500 = vmatpush2.msra.mxu0 0.0
  %1501 = vmatprep.subr.mxu0 0.0
  %1502 = vmatpush2.msra.mxu0 0.0
  %1503 = vmatprep.subr.mxu0 0.0
  %1504 = vmatpush2.msra.mxu0 0.0
  %1505 = vmatprep.subr.mxu0 0.0
  %1506 = vmatpush2.msra.mxu0 0.0
  %1507 = vmatprep.subr.mxu0 0.0
  %1508 = vmatpush2.msra.mxu0 0.0
  %1509 = vmatprep.subr.mxu0 0.0
  %1510 = vmatpush2.msra.mxu0 0.0
  %1511 = vmatprep.subr.mxu0 0.0
  %1512 = vmatpush2.msra.mxu0 0.0
  %1513 = vmatprep.mubr.f32.mxu0 0.0
  %1514 = vmatmul.mubr.f32.gmra.mxu0 %v1444
  %v1515 = vpop.f32.mrf.mxu0
  %v1516 = vadd.f32 0.0, %v1515
  %v1517 = vpop.f32.mrf.mxu0
  %1518 = vmatprep.mubr.f32.mxu0 0.0
  %1519 = vmatmul.mubr.f32.gmra.mxu0 %v1447
  %v1520 = vpop.f32.mrf.mxu0
  %v1521 = vadd.f32 0.0, %v1520
  %v1522 = vpop.f32.mrf.mxu0
  %1523 = vdwg.mxu0
  %v1524 = vadd.f32 %v1435, %v1516
  %v1525 = vadd.f32 %v1436, %v1521
  %v1526 = vld [vmem:[#allocation2 + $0xb0] sm:$0xff]
  %v1527 = vld [vmem:[#allocation2 + $0xb8] sm:$0xff]
  %v1528 = vld [vmem:[%s2 + $0x160] sm:$0xff]
  %v1529 = vld [vmem:[%s2 + $0x168] sm:$0xff]
  %v1530 = vld [vmem:[%s2 + $0x170] sm:$0xff]
  %v1531 = vld [vmem:[%s2 + $0x178] sm:$0xff]
  %v1533 = vsel %vm496, %v1526, 0
  %v1536 = vsel %vm496, %v1527, 0
  %1538 = vmatprep.subr.mxu0 0.0
  %1539 = vmatpush1.msra.mxu0 0.0
  %1540 = vmatprep.subr.mxu0 0.0
  %1541 = vmatpush1.msra.mxu0 0.0
  %1542 = vmatprep.subr.mxu0 0.0
  %1543 = vmatpush1.msra.mxu0 0.0
  %1544 = vmatprep.subr.mxu0 0.0
  %1545 = vmatpush1.msra.mxu0 0.0
  %1546 = vmatprep.subr.mxu0 0.0
  %1547 = vmatpush1.msra.mxu0 0.0
  %1548 = vmatprep.subr.mxu0 0.0
  %1549 = vmatpush1.msra.mxu0 0.0
  %1550 = vmatprep.subr.mxu0 0.0
  %1551 = vmatpush1.msra.mxu0 0.0
  %1552 = vmatprep.subr.mxu0 0.0
  %1553 = vmatpush1.msra.mxu0 0.0
  %1554 = vmatprep.subr.mxu0 0.0
  %1555 = vmatpush1.msra.mxu0 0.0
  %1556 = vmatprep.subr.mxu0 0.0
  %1557 = vmatpush1.msra.mxu0 0.0
  %1558 = vmatprep.subr.mxu0 0.0
  %1559 = vmatpush1.msra.mxu0 0.0
  %1560 = vmatprep.subr.mxu0 0.0
  %1561 = vmatpush1.msra.mxu0 0.0
  %1562 = vmatprep.subr.mxu0 0.0
  %1563 = vmatpush1.msra.mxu0 %v1531
  %1564 = vmatprep.subr.mxu0 0.0
  %1565 = vmatpush1.msra.mxu0 %v1530
  %1566 = vmatprep.subr.mxu0 0.0
  %1567 = vmatpush1.msra.mxu0 %v1529
  %1568 = vmatprep.subr.mxu0 0.0
  %1569 = vmatpush1.msra.mxu0 %v1528
  %1570 = vmatprep.subr.mxu0 0.0
  %1571 = vmatpush2.msra.mxu0 0.0
  %1572 = vmatprep.subr.mxu0 0.0
  %1573 = vmatpush2.msra.mxu0 0.0
  %1574 = vmatprep.subr.mxu0 0.0
  %1575 = vmatpush2.msra.mxu0 0.0
  %1576 = vmatprep.subr.mxu0 0.0
  %1577 = vmatpush2.msra.mxu0 0.0
  %1578 = vmatprep.subr.mxu0 0.0
  %1579 = vmatpush2.msra.mxu0 0.0
  %1580 = vmatprep.subr.mxu0 0.0
  %1581 = vmatpush2.msra.mxu0 0.0
  %1582 = vmatprep.subr.mxu0 0.0
  %1583 = vmatpush2.msra.mxu0 0.0
  %1584 = vmatprep.subr.mxu0 0.0
  %1585 = vmatpush2.msra.mxu0 0.0
  %1586 = vmatprep.subr.mxu0 0.0
  %1587 = vmatpush2.msra.mxu0 0.0
  %1588 = vmatprep.subr.mxu0 0.0
  %1589 = vmatpush2.msra.mxu0 0.0
  %1590 = vmatprep.subr.mxu0 0.0
  %1591 = vmatpush2.msra.mxu0 0.0
  %1592 = vmatprep.subr.mxu0 0.0
  %1593 = vmatpush2.msra.mxu0 0.0
  %1594 = vmatprep.subr.mxu0 0.0
  %1595 = vmatpush2.msra.mxu0 0.0
  %1596 = vmatprep.subr.mxu0 0.0
  %1597 = vmatpush2.msra.mxu0 0.0
  %1598 = vmatprep.subr.mxu0 0.0
  %1599 = vmatpush2.msra.mxu0 0.0
  %1600 = vmatprep.subr.mxu0 0.0
  %1601 = vmatpush2.msra.mxu0 0.0
  %1602 = vmatprep.mubr.f32.mxu0 0.0
  %1603 = vmatmul.mubr.f32.gmra.mxu0 %v1533
  %v1604 = vpop.f32.mrf.mxu0
  %v1605 = vadd.f32 0.0, %v1604
  %v1606 = vpop.f32.mrf.mxu0
  %1607 = vmatprep.mubr.f32.mxu0 0.0
  %1608 = vmatmul.mubr.f32.gmra.mxu0 %v1536
  %v1609 = vpop.f32.mrf.mxu0
  %v1610 = vadd.f32 0.0, %v1609
  %v1611 = vpop.f32.mrf.mxu0
  %1612 = vdwg.mxu0
  %v1613 = vadd.f32 %v1524, %v1605
  %v1614 = vadd.f32 %v1525, %v1610
  %v1615 = vld [vmem:[#allocation2 + $0xc0] sm:$0xff]
  %v1616 = vld [vmem:[#allocation2 + $0xc8] sm:$0xff]
  %v1617 = vld [vmem:[%s2 + $0x180] sm:$0xff]
  %v1618 = vld [vmem:[%s2 + $0x188] sm:$0xff]
  %v1619 = vld [vmem:[%s2 + $0x190] sm:$0xff]
  %v1620 = vld [vmem:[%s2 + $0x198] sm:$0xff]
  %v1622 = vsel %vm496, %v1615, 0
  %v1625 = vsel %vm496, %v1616, 0
  %1627 = vmatprep.subr.mxu0 0.0
  %1628 = vmatpush1.msra.mxu0 0.0
  %1629 = vmatprep.subr.mxu0 0.0
  %1630 = vmatpush1.msra.mxu0 0.0
  %1631 = vmatprep.subr.mxu0 0.0
  %1632 = vmatpush1.msra.mxu0 0.0
  %1633 = vmatprep.subr.mxu0 0.0
  %1634 = vmatpush1.msra.mxu0 0.0
  %1635 = vmatprep.subr.mxu0 0.0
  %1636 = vmatpush1.msra.mxu0 0.0
  %1637 = vmatprep.subr.mxu0 0.0
  %1638 = vmatpush1.msra.mxu0 0.0
  %1639 = vmatprep.subr.mxu0 0.0
  %1640 = vmatpush1.msra.mxu0 0.0
  %1641 = vmatprep.subr.mxu0 0.0
  %1642 = vmatpush1.msra.mxu0 0.0
  %1643 = vmatprep.subr.mxu0 0.0
  %1644 = vmatpush1.msra.mxu0 0.0
  %1645 = vmatprep.subr.mxu0 0.0
  %1646 = vmatpush1.msra.mxu0 0.0
  %1647 = vmatprep.subr.mxu0 0.0
  %1648 = vmatpush1.msra.mxu0 0.0
  %1649 = vmatprep.subr.mxu0 0.0
  %1650 = vmatpush1.msra.mxu0 0.0
  %1651 = vmatprep.subr.mxu0 0.0
  %1652 = vmatpush1.msra.mxu0 %v1620
  %1653 = vmatprep.subr.mxu0 0.0
  %1654 = vmatpush1.msra.mxu0 %v1619
  %1655 = vmatprep.subr.mxu0 0.0
  %1656 = vmatpush1.msra.mxu0 %v1618
  %1657 = vmatprep.subr.mxu0 0.0
  %1658 = vmatpush1.msra.mxu0 %v1617
  %1659 = vmatprep.subr.mxu0 0.0
  %1660 = vmatpush2.msra.mxu0 0.0
  %1661 = vmatprep.subr.mxu0 0.0
  %1662 = vmatpush2.msra.mxu0 0.0
  %1663 = vmatprep.subr.mxu0 0.0
  %1664 = vmatpush2.msra.mxu0 0.0
  %1665 = vmatprep.subr.mxu0 0.0
  %1666 = vmatpush2.msra.mxu0 0.0
  %1667 = vmatprep.subr.mxu0 0.0
  %1668 = vmatpush2.msra.mxu0 0.0
  %1669 = vmatprep.subr.mxu0 0.0
  %1670 = vmatpush2.msra.mxu0 0.0
  %1671 = vmatprep.subr.mxu0 0.0
  %1672 = vmatpush2.msra.mxu0 0.0
  %1673 = vmatprep.subr.mxu0 0.0
  %1674 = vmatpush2.msra.mxu0 0.0
  %1675 = vmatprep.subr.mxu0 0.0
  %1676 = vmatpush2.msra.mxu0 0.0
  %1677 = vmatprep.subr.mxu0 0.0
  %1678 = vmatpush2.msra.mxu0 0.0
  %1679 = vmatprep.subr.mxu0 0.0
  %1680 = vmatpush2.msra.mxu0 0.0
  %1681 = vmatprep.subr.mxu0 0.0
  %1682 = vmatpush2.msra.mxu0 0.0
  %1683 = vmatprep.subr.mxu0 0.0
  %1684 = vmatpush2.msra.mxu0 0.0
  %1685 = vmatprep.subr.mxu0 0.0
  %1686 = vmatpush2.msra.mxu0 0.0
  %1687 = vmatprep.subr.mxu0 0.0
  %1688 = vmatpush2.msra.mxu0 0.0
  %1689 = vmatprep.subr.mxu0 0.0
  %1690 = vmatpush2.msra.mxu0 0.0
  %1691 = vmatprep.mubr.f32.mxu0 0.0
  %1692 = vmatmul.mubr.f32.gmra.mxu0 %v1622
  %v1693 = vpop.f32.mrf.mxu0
  %v1694 = vadd.f32 0.0, %v1693
  %v1695 = vpop.f32.mrf.mxu0
  %1696 = vmatprep.mubr.f32.mxu0 0.0
  %1697 = vmatmul.mubr.f32.gmra.mxu0 %v1625
  %v1698 = vpop.f32.mrf.mxu0
  %v1699 = vadd.f32 0.0, %v1698
  %v1700 = vpop.f32.mrf.mxu0
  %1701 = vdwg.mxu0
  %v1702 = vadd.f32 %v1613, %v1694
  %v1703 = vadd.f32 %v1614, %v1699
  %v1704 = vld [vmem:[#allocation2 + $0xd0] sm:$0xff]
  %v1705 = vld [vmem:[#allocation2 + $0xd8] sm:$0xff]
  %v1706 = vld [vmem:[%s2 + $0x1a0] sm:$0xff]
  %v1707 = vld [vmem:[%s2 + $0x1a8] sm:$0xff]
  %v1708 = vld [vmem:[%s2 + $0x1b0] sm:$0xff]
  %v1709 = vld [vmem:[%s2 + $0x1b8] sm:$0xff]
  %v1711 = vsel %vm496, %v1704, 0
  %v1714 = vsel %vm496, %v1705, 0
  %1716 = vmatprep.subr.mxu0 0.0
  %1717 = vmatpush1.msra.mxu0 0.0
  %1718 = vmatprep.subr.mxu0 0.0
  %1719 = vmatpush1.msra.mxu0 0.0
  %1720 = vmatprep.subr.mxu0 0.0
  %1721 = vmatpush1.msra.mxu0 0.0
  %1722 = vmatprep.subr.mxu0 0.0
  %1723 = vmatpush1.msra.mxu0 0.0
  %1724 = vmatprep.subr.mxu0 0.0
  %1725 = vmatpush1.msra.mxu0 0.0
  %1726 = vmatprep.subr.mxu0 0.0
  %1727 = vmatpush1.msra.mxu0 0.0
  %1728 = vmatprep.subr.mxu0 0.0
  %1729 = vmatpush1.msra.mxu0 0.0
  %1730 = vmatprep.subr.mxu0 0.0
  %1731 = vmatpush1.msra.mxu0 0.0
  %1732 = vmatprep.subr.mxu0 0.0
  %1733 = vmatpush1.msra.mxu0 0.0
  %1734 = vmatprep.subr.mxu0 0.0
  %1735 = vmatpush1.msra.mxu0 0.0
  %1736 = vmatprep.subr.mxu0 0.0
  %1737 = vmatpush1.msra.mxu0 0.0
  %1738 = vmatprep.subr.mxu0 0.0
  %1739 = vmatpush1.msra.mxu0 0.0
  %1740 = vmatprep.subr.mxu0 0.0
  %1741 = vmatpush1.msra.mxu0 %v1709
  %1742 = vmatprep.subr.mxu0 0.0
  %1743 = vmatpush1.msra.mxu0 %v1708
  %1744 = vmatprep.subr.mxu0 0.0
  %1745 = vmatpush1.msra.mxu0 %v1707
  %1746 = vmatprep.subr.mxu0 0.0
  %1747 = vmatpush1.msra.mxu0 %v1706
  %1748 = vmatprep.subr.mxu0 0.0
  %1749 = vmatpush2.msra.mxu0 0.0
  %1750 = vmatprep.subr.mxu0 0.0
  %1751 = vmatpush2.msra.mxu0 0.0
  %1752 = vmatprep.subr.mxu0 0.0
  %1753 = vmatpush2.msra.mxu0 0.0
  %1754 = vmatprep.subr.mxu0 0.0
  %1755 = vmatpush2.msra.mxu0 0.0
  %1756 = vmatprep.subr.mxu0 0.0
  %1757 = vmatpush2.msra.mxu0 0.0
  %1758 = vmatprep.subr.mxu0 0.0
  %1759 = vmatpush2.msra.mxu0 0.0
  %1760 = vmatprep.subr.mxu0 0.0
  %1761 = vmatpush2.msra.mxu0 0.0
  %1762 = vmatprep.subr.mxu0 0.0
  %1763 = vmatpush2.msra.mxu0 0.0
  %1764 = vmatprep.subr.mxu0 0.0
  %1765 = vmatpush2.msra.mxu0 0.0
  %1766 = vmatprep.subr.mxu0 0.0
  %1767 = vmatpush2.msra.mxu0 0.0
  %1768 = vmatprep.subr.mxu0 0.0
  %1769 = vmatpush2.msra.mxu0 0.0
  %1770 = vmatprep.subr.mxu0 0.0
  %1771 = vmatpush2.msra.mxu0 0.0
  %1772 = vmatprep.subr.mxu0 0.0
  %1773 = vmatpush2.msra.mxu0 0.0
  %1774 = vmatprep.subr.mxu0 0.0
  %1775 = vmatpush2.msra.mxu0 0.0
  %1776 = vmatprep.subr.mxu0 0.0
  %1777 = vmatpush2.msra.mxu0 0.0
  %1778 = vmatprep.subr.mxu0 0.0
  %1779 = vmatpush2.msra.mxu0 0.0
  %1780 = vmatprep.mubr.f32.mxu0 0.0
  %1781 = vmatmul.mubr.f32.gmra.mxu0 %v1711
  %v1782 = vpop.f32.mrf.mxu0
  %v1783 = vadd.f32 0.0, %v1782
  %v1784 = vpop.f32.mrf.mxu0
  %1785 = vmatprep.mubr.f32.mxu0 0.0
  %1786 = vmatmul.mubr.f32.gmra.mxu0 %v1714
  %v1787 = vpop.f32.mrf.mxu0
  %v1788 = vadd.f32 0.0, %v1787
  %v1789 = vpop.f32.mrf.mxu0
  %1790 = vdwg.mxu0
  %v1791 = vadd.f32 %v1702, %v1783
  %v1792 = vadd.f32 %v1703, %v1788
  %v1793 = vld [vmem:[#allocation2 + $0xe0] sm:$0xff]
  %v1794 = vld [vmem:[#allocation2 + $0xe8] sm:$0xff]
  %v1795 = vld [vmem:[%s2 + $0x1c0] sm:$0xff]
  %v1796 = vld [vmem:[%s2 + $0x1c8] sm:$0xff]
  %v1797 = vld [vmem:[%s2 + $0x1d0] sm:$0xff]
  %v1798 = vld [vmem:[%s2 + $0x1d8] sm:$0xff]
  %v1800 = vsel %vm496, %v1793, 0
  %v1803 = vsel %vm496, %v1794, 0
  %1805 = vmatprep.subr.mxu0 0.0
  %1806 = vmatpush1.msra.mxu0 0.0
  %1807 = vmatprep.subr.mxu0 0.0
  %1808 = vmatpush1.msra.mxu0 0.0
  %1809 = vmatprep.subr.mxu0 0.0
  %1810 = vmatpush1.msra.mxu0 0.0
  %1811 = vmatprep.subr.mxu0 0.0
  %1812 = vmatpush1.msra.mxu0 0.0
  %1813 = vmatprep.subr.mxu0 0.0
  %1814 = vmatpush1.msra.mxu0 0.0
  %1815 = vmatprep.subr.mxu0 0.0
  %1816 = vmatpush1.msra.mxu0 0.0
  %1817 = vmatprep.subr.mxu0 0.0
  %1818 = vmatpush1.msra.mxu0 0.0
  %1819 = vmatprep.subr.mxu0 0.0
  %1820 = vmatpush1.msra.mxu0 0.0
  %1821 = vmatprep.subr.mxu0 0.0
  %1822 = vmatpush1.msra.mxu0 0.0
  %1823 = vmatprep.subr.mxu0 0.0
  %1824 = vmatpush1.msra.mxu0 0.0
  %1825 = vmatprep.subr.mxu0 0.0
  %1826 = vmatpush1.msra.mxu0 0.0
  %1827 = vmatprep.subr.mxu0 0.0
  %1828 = vmatpush1.msra.mxu0 0.0
  %1829 = vmatprep.subr.mxu0 0.0
  %1830 = vmatpush1.msra.mxu0 %v1798
  %1831 = vmatprep.subr.mxu0 0.0
  %1832 = vmatpush1.msra.mxu0 %v1797
  %1833 = vmatprep.subr.mxu0 0.0
  %1834 = vmatpush1.msra.mxu0 %v1796
  %1835 = vmatprep.subr.mxu0 0.0
  %1836 = vmatpush1.msra.mxu0 %v1795
  %1837 = vmatprep.subr.mxu0 0.0
  %1838 = vmatpush2.msra.mxu0 0.0
  %1839 = vmatprep.subr.mxu0 0.0
  %1840 = vmatpush2.msra.mxu0 0.0
  %1841 = vmatprep.subr.mxu0 0.0
  %1842 = vmatpush2.msra.mxu0 0.0
  %1843 = vmatprep.subr.mxu0 0.0
  %1844 = vmatpush2.msra.mxu0 0.0
  %1845 = vmatprep.subr.mxu0 0.0
  %1846 = vmatpush2.msra.mxu0 0.0
  %1847 = vmatprep.subr.mxu0 0.0
  %1848 = vmatpush2.msra.mxu0 0.0
  %1849 = vmatprep.subr.mxu0 0.0
  %1850 = vmatpush2.msra.mxu0 0.0
  %1851 = vmatprep.subr.mxu0 0.0
  %1852 = vmatpush2.msra.mxu0 0.0
  %1853 = vmatprep.subr.mxu0 0.0
  %1854 = vmatpush2.msra.mxu0 0.0
  %1855 = vmatprep.subr.mxu0 0.0
  %1856 = vmatpush2.msra.mxu0 0.0
  %1857 = vmatprep.subr.mxu0 0.0
  %1858 = vmatpush2.msra.mxu0 0.0
  %1859 = vmatprep.subr.mxu0 0.0
  %1860 = vmatpush2.msra.mxu0 0.0
  %1861 = vmatprep.subr.mxu0 0.0
  %1862 = vmatpush2.msra.mxu0 0.0
  %1863 = vmatprep.subr.mxu0 0.0
  %1864 = vmatpush2.msra.mxu0 0.0
  %1865 = vmatprep.subr.mxu0 0.0
  %1866 = vmatpush2.msra.mxu0 0.0
  %1867 = vmatprep.subr.mxu0 0.0
  %1868 = vmatpush2.msra.mxu0 0.0
  %1869 = vmatprep.mubr.f32.mxu0 0.0
  %1870 = vmatmul.mubr.f32.gmra.mxu0 %v1800
  %v1871 = vpop.f32.mrf.mxu0
  %v1872 = vadd.f32 0.0, %v1871
  %v1873 = vpop.f32.mrf.mxu0
  %1874 = vmatprep.mubr.f32.mxu0 0.0
  %1875 = vmatmul.mubr.f32.gmra.mxu0 %v1803
  %v1876 = vpop.f32.mrf.mxu0
  %v1877 = vadd.f32 0.0, %v1876
  %v1878 = vpop.f32.mrf.mxu0
  %1879 = vdwg.mxu0
  %v1880 = vadd.f32 %v1791, %v1872
  %v1881 = vadd.f32 %v1792, %v1877
  %v1882 = vld [vmem:[#allocation2 + $0xf0] sm:$0xff]
  %v1883 = vld [vmem:[#allocation2 + $0xf8] sm:$0xff]
  %v1884 = vld [vmem:[%s2 + $0x1e0] sm:$0xff]
  %v1885 = vld [vmem:[%s2 + $0x1e8] sm:$0xff]
  %v1886 = vld [vmem:[%s2 + $0x1f0] sm:$0xff]
  %v1887 = vld [vmem:[%s2 + $0x1f8] sm:$0xff]
  %v1889 = vsel %vm496, %v1882, 0
  %v1892 = vsel %vm496, %v1883, 0
  %1894 = vmatprep.subr.mxu0 0.0
  %1895 = vmatpush1.msra.mxu0 0.0
  %1896 = vmatprep.subr.mxu0 0.0
  %1897 = vmatpush1.msra.mxu0 0.0
  %1898 = vmatprep.subr.mxu0 0.0
  %1899 = vmatpush1.msra.mxu0 0.0
  %1900 = vmatprep.subr.mxu0 0.0
  %1901 = vmatpush1.msra.mxu0 0.0
  %1902 = vmatprep.subr.mxu0 0.0
  %1903 = vmatpush1.msra.mxu0 0.0
  %1904 = vmatprep.subr.mxu0 0.0
  %1905 = vmatpush1.msra.mxu0 0.0
  %1906 = vmatprep.subr.mxu0 0.0
  %1907 = vmatpush1.msra.mxu0 0.0
  %1908 = vmatprep.subr.mxu0 0.0
  %1909 = vmatpush1.msra.mxu0 0.0
  %1910 = vmatprep.subr.mxu0 0.0
  %1911 = vmatpush1.msra.mxu0 0.0
  %1912 = vmatprep.subr.mxu0 0.0
  %1913 = vmatpush1.msra.mxu0 0.0
  %1914 = vmatprep.subr.mxu0 0.0
  %1915 = vmatpush1.msra.mxu0 0.0
  %1916 = vmatprep.subr.mxu0 0.0
  %1917 = vmatpush1.msra.mxu0 0.0
  %1918 = vmatprep.subr.mxu0 0.0
  %1919 = vmatpush1.msra.mxu0 %v1887
  %1920 = vmatprep.subr.mxu0 0.0
  %1921 = vmatpush1.msra.mxu0 %v1886
  %1922 = vmatprep.subr.mxu0 0.0
  %1923 = vmatpush1.msra.mxu0 %v1885
  %1924 = vmatprep.subr.mxu0 0.0
  %1925 = vmatpush1.msra.mxu0 %v1884
  %1926 = vmatprep.subr.mxu0 0.0
  %1927 = vmatpush2.msra.mxu0 0.0
  %1928 = vmatprep.subr.mxu0 0.0
  %1929 = vmatpush2.msra.mxu0 0.0
  %1930 = vmatprep.subr.mxu0 0.0
  %1931 = vmatpush2.msra.mxu0 0.0
  %1932 = vmatprep.subr.mxu0 0.0
  %1933 = vmatpush2.msra.mxu0 0.0
  %1934 = vmatprep.subr.mxu0 0.0
  %1935 = vmatpush2.msra.mxu0 0.0
  %1936 = vmatprep.subr.mxu0 0.0
  %1937 = vmatpush2.msra.mxu0 0.0
  %1938 = vmatprep.subr.mxu0 0.0
  %1939 = vmatpush2.msra.mxu0 0.0
  %1940 = vmatprep.subr.mxu0 0.0
  %1941 = vmatpush2.msra.mxu0 0.0
  %1942 = vmatprep.subr.mxu0 0.0
  %1943 = vmatpush2.msra.mxu0 0.0
  %1944 = vmatprep.subr.mxu0 0.0
  %1945 = vmatpush2.msra.mxu0 0.0
  %1946 = vmatprep.subr.mxu0 0.0
  %1947 = vmatpush2.msra.mxu0 0.0
  %1948 = vmatprep.subr.mxu0 0.0
  %1949 = vmatpush2.msra.mxu0 0.0
  %1950 = vmatprep.subr.mxu0 0.0
  %1951 = vmatpush2.msra.mxu0 0.0
  %1952 = vmatprep.subr.mxu0 0.0
  %1953 = vmatpush2.msra.mxu0 0.0
  %1954 = vmatprep.subr.mxu0 0.0
  %1955 = vmatpush2.msra.mxu0 0.0
  %1956 = vmatprep.subr.mxu0 0.0
  %1957 = vmatpush2.msra.mxu0 0.0
  %1958 = vmatprep.mubr.f32.mxu0 0.0
  %1959 = vmatmul.mubr.f32.gmra.mxu0 %v1889
  %v1960 = vpop.f32.mrf.mxu0
  %v1961 = vadd.f32 0.0, %v1960
  %v1962 = vpop.f32.mrf.mxu0
  %1963 = vmatprep.mubr.f32.mxu0 0.0
  %1964 = vmatmul.mubr.f32.gmra.mxu0 %v1892
  %v1965 = vpop.f32.mrf.mxu0
  %v1966 = vadd.f32 0.0, %v1965
  %v1967 = vpop.f32.mrf.mxu0
  %1968 = vdwg.mxu0
  %v1969 = vadd.f32 %v1880, %v1961
  %v1970 = vadd.f32 %v1881, %v1966
  %v1971 = vld [vmem:[#allocation2 + $0x100] sm:$0xff]
  %v1972 = vld [vmem:[#allocation2 + $0x108] sm:$0xff]
  %v1973 = vld [vmem:[%s2 + $0x200] sm:$0xff]
  %v1974 = vld [vmem:[%s2 + $0x208] sm:$0xff]
  %v1975 = vld [vmem:[%s2 + $0x210] sm:$0xff]
  %v1976 = vld [vmem:[%s2 + $0x218] sm:$0xff]
  %v1978 = vsel %vm496, %v1971, 0
  %v1981 = vsel %vm496, %v1972, 0
  %1983 = vmatprep.subr.mxu0 0.0
  %1984 = vmatpush1.msra.mxu0 0.0
  %1985 = vmatprep.subr.mxu0 0.0
  %1986 = vmatpush1.msra.mxu0 0.0
  %1987 = vmatprep.subr.mxu0 0.0
  %1988 = vmatpush1.msra.mxu0 0.0
  %1989 = vmatprep.subr.mxu0 0.0
  %1990 = vmatpush1.msra.mxu0 0.0
  %1991 = vmatprep.subr.mxu0 0.0
  %1992 = vmatpush1.msra.mxu0 0.0
  %1993 = vmatprep.subr.mxu0 0.0
  %1994 = vmatpush1.msra.mxu0 0.0
  %1995 = vmatprep.subr.mxu0 0.0
  %1996 = vmatpush1.msra.mxu0 0.0
  %1997 = vmatprep.subr.mxu0 0.0
  %1998 = vmatpush1.msra.mxu0 0.0
  %1999 = vmatprep.subr.mxu0 0.0
  %2000 = vmatpush1.msra.mxu0 0.0
  %2001 = vmatprep.subr.mxu0 0.0
  %2002 = vmatpush1.msra.mxu0 0.0
  %2003 = vmatprep.subr.mxu0 0.0
  %2004 = vmatpush1.msra.mxu0 0.0
  %2005 = vmatprep.subr.mxu0 0.0
  %2006 = vmatpush1.msra.mxu0 0.0
  %2007 = vmatprep.subr.mxu0 0.0
  %2008 = vmatpush1.msra.mxu0 %v1976
  %2009 = vmatprep.subr.mxu0 0.0
  %2010 = vmatpush1.msra.mxu0 %v1975
  %2011 = vmatprep.subr.mxu0 0.0
  %2012 = vmatpush1.msra.mxu0 %v1974
  %2013 = vmatprep.subr.mxu0 0.0
  %2014 = vmatpush1.msra.mxu0 %v1973
  %2015 = vmatprep.subr.mxu0 0.0
  %2016 = vmatpush2.msra.mxu0 0.0
  %2017 = vmatprep.subr.mxu0 0.0
  %2018 = vmatpush2.msra.mxu0 0.0
  %2019 = vmatprep.subr.mxu0 0.0
  %2020 = vmatpush2.msra.mxu0 0.0
  %2021 = vmatprep.subr.mxu0 0.0
  %2022 = vmatpush2.msra.mxu0 0.0
  %2023 = vmatprep.subr.mxu0 0.0
  %2024 = vmatpush2.msra.mxu0 0.0
  %2025 = vmatprep.subr.mxu0 0.0
  %2026 = vmatpush2.msra.mxu0 0.0
  %2027 = vmatprep.subr.mxu0 0.0
  %2028 = vmatpush2.msra.mxu0 0.0
  %2029 = vmatprep.subr.mxu0 0.0
  %2030 = vmatpush2.msra.mxu0 0.0
  %2031 = vmatprep.subr.mxu0 0.0
  %2032 = vmatpush2.msra.mxu0 0.0
  %2033 = vmatprep.subr.mxu0 0.0
  %2034 = vmatpush2.msra.mxu0 0.0
  %2035 = vmatprep.subr.mxu0 0.0
  %2036 = vmatpush2.msra.mxu0 0.0
  %2037 = vmatprep.subr.mxu0 0.0
  %2038 = vmatpush2.msra.mxu0 0.0
  %2039 = vmatprep.subr.mxu0 0.0
  %2040 = vmatpush2.msra.mxu0 0.0
  %2041 = vmatprep.subr.mxu0 0.0
  %2042 = vmatpush2.msra.mxu0 0.0
  %2043 = vmatprep.subr.mxu0 0.0
  %2044 = vmatpush2.msra.mxu0 0.0
  %2045 = vmatprep.subr.mxu0 0.0
  %2046 = vmatpush2.msra.mxu0 0.0
  %2047 = vmatprep.mubr.f32.mxu0 0.0
  %2048 = vmatmul.mubr.f32.gmra.mxu0 %v1978
  %v2049 = vpop.f32.mrf.mxu0
  %v2050 = vadd.f32 0.0, %v2049
  %v2051 = vpop.f32.mrf.mxu0
  %2052 = vmatprep.mubr.f32.mxu0 0.0
  %2053 = vmatmul.mubr.f32.gmra.mxu0 %v1981
  %v2054 = vpop.f32.mrf.mxu0
  %v2055 = vadd.f32 0.0, %v2054
  %v2056 = vpop.f32.mrf.mxu0
  %2057 = vdwg.mxu0
  %v2058 = vadd.f32 %v1969, %v2050
  %v2059 = vadd.f32 %v1970, %v2055
  %v2060 = vld [vmem:[#allocation2 + $0x110] sm:$0xff]
  %v2061 = vld [vmem:[#allocation2 + $0x118] sm:$0xff]
  %v2062 = vld [vmem:[%s2 + $0x220] sm:$0xff]
  %v2063 = vld [vmem:[%s2 + $0x228] sm:$0xff]
  %v2064 = vld [vmem:[%s2 + $0x230] sm:$0xff]
  %v2065 = vld [vmem:[%s2 + $0x238] sm:$0xff]
  %v2067 = vsel %vm496, %v2060, 0
  %v2070 = vsel %vm496, %v2061, 0
  %2072 = vmatprep.subr.mxu0 0.0
  %2073 = vmatpush1.msra.mxu0 0.0
  %2074 = vmatprep.subr.mxu0 0.0
  %2075 = vmatpush1.msra.mxu0 0.0
  %2076 = vmatprep.subr.mxu0 0.0
  %2077 = vmatpush1.msra.mxu0 0.0
  %2078 = vmatprep.subr.mxu0 0.0
  %2079 = vmatpush1.msra.mxu0 0.0
  %2080 = vmatprep.subr.mxu0 0.0
  %2081 = vmatpush1.msra.mxu0 0.0
  %2082 = vmatprep.subr.mxu0 0.0
  %2083 = vmatpush1.msra.mxu0 0.0
  %2084 = vmatprep.subr.mxu0 0.0
  %2085 = vmatpush1.msra.mxu0 0.0
  %2086 = vmatprep.subr.mxu0 0.0
  %2087 = vmatpush1.msra.mxu0 0.0
  %2088 = vmatprep.subr.mxu0 0.0
  %2089 = vmatpush1.msra.mxu0 0.0
  %2090 = vmatprep.subr.mxu0 0.0
  %2091 = vmatpush1.msra.mxu0 0.0
  %2092 = vmatprep.subr.mxu0 0.0
  %2093 = vmatpush1.msra.mxu0 0.0
  %2094 = vmatprep.subr.mxu0 0.0
  %2095 = vmatpush1.msra.mxu0 0.0
  %2096 = vmatprep.subr.mxu0 0.0
  %2097 = vmatpush1.msra.mxu0 %v2065
  %2098 = vmatprep.subr.mxu0 0.0
  %2099 = vmatpush1.msra.mxu0 %v2064
  %2100 = vmatprep.subr.mxu0 0.0
  %2101 = vmatpush1.msra.mxu0 %v2063
  %2102 = vmatprep.subr.mxu0 0.0
  %2103 = vmatpush1.msra.mxu0 %v2062
  %2104 = vmatprep.subr.mxu0 0.0
  %2105 = vmatpush2.msra.mxu0 0.0
  %2106 = vmatprep.subr.mxu0 0.0
  %2107 = vmatpush2.msra.mxu0 0.0
  %2108 = vmatprep.subr.mxu0 0.0
  %2109 = vmatpush2.msra.mxu0 0.0
  %2110 = vmatprep.subr.mxu0 0.0
  %2111 = vmatpush2.msra.mxu0 0.0
  %2112 = vmatprep.subr.mxu0 0.0
  %2113 = vmatpush2.msra.mxu0 0.0
  %2114 = vmatprep.subr.mxu0 0.0
  %2115 = vmatpush2.msra.mxu0 0.0
  %2116 = vmatprep.subr.mxu0 0.0
  %2117 = vmatpush2.msra.mxu0 0.0
  %2118 = vmatprep.subr.mxu0 0.0
  %2119 = vmatpush2.msra.mxu0 0.0
  %2120 = vmatprep.subr.mxu0 0.0
  %2121 = vmatpush2.msra.mxu0 0.0
  %2122 = vmatprep.subr.mxu0 0.0
  %2123 = vmatpush2.msra.mxu0 0.0
  %2124 = vmatprep.subr.mxu0 0.0
  %2125 = vmatpush2.msra.mxu0 0.0
  %2126 = vmatprep.subr.mxu0 0.0
  %2127 = vmatpush2.msra.mxu0 0.0
  %2128 = vmatprep.subr.mxu0 0.0
  %2129 = vmatpush2.msra.mxu0 0.0
  %2130 = vmatprep.subr.mxu0 0.0
  %2131 = vmatpush2.msra.mxu0 0.0
  %2132 = vmatprep.subr.mxu0 0.0
  %2133 = vmatpush2.msra.mxu0 0.0
  %2134 = vmatprep.subr.mxu0 0.0
  %2135 = vmatpush2.msra.mxu0 0.0
  %2136 = vmatprep.mubr.f32.mxu0 0.0
  %2137 = vmatmul.mubr.f32.gmra.mxu0 %v2067
  %v2138 = vpop.f32.mrf.mxu0
  %v2139 = vadd.f32 0.0, %v2138
  %v2140 = vpop.f32.mrf.mxu0
  %2141 = vmatprep.mubr.f32.mxu0 0.0
  %2142 = vmatmul.mubr.f32.gmra.mxu0 %v2070
  %v2143 = vpop.f32.mrf.mxu0
  %v2144 = vadd.f32 0.0, %v2143
  %v2145 = vpop.f32.mrf.mxu0
  %2146 = vdwg.mxu0
  %v2147 = vadd.f32 %v2058, %v2139
  %v2148 = vadd.f32 %v2059, %v2144
  %v2149 = vld [vmem:[#allocation2 + $0x120] sm:$0xff]
  %v2150 = vld [vmem:[#allocation2 + $0x128] sm:$0xff]
  %v2151 = vld [vmem:[%s2 + $0x240] sm:$0xff]
  %v2152 = vld [vmem:[%s2 + $0x248] sm:$0xff]
  %v2153 = vld [vmem:[%s2 + $0x250] sm:$0xff]
  %v2154 = vld [vmem:[%s2 + $0x258] sm:$0xff]
  %v2156 = vsel %vm496, %v2149, 0
  %v2159 = vsel %vm496, %v2150, 0
  %2161 = vmatprep.subr.mxu0 0.0
  %2162 = vmatpush1.msra.mxu0 0.0
  %2163 = vmatprep.subr.mxu0 0.0
  %2164 = vmatpush1.msra.mxu0 0.0
  %2165 = vmatprep.subr.mxu0 0.0
  %2166 = vmatpush1.msra.mxu0 0.0
  %2167 = vmatprep.subr.mxu0 0.0
  %2168 = vmatpush1.msra.mxu0 0.0
  %2169 = vmatprep.subr.mxu0 0.0
  %2170 = vmatpush1.msra.mxu0 0.0
  %2171 = vmatprep.subr.mxu0 0.0
  %2172 = vmatpush1.msra.mxu0 0.0
  %2173 = vmatprep.subr.mxu0 0.0
  %2174 = vmatpush1.msra.mxu0 0.0
  %2175 = vmatprep.subr.mxu0 0.0
  %2176 = vmatpush1.msra.mxu0 0.0
  %2177 = vmatprep.subr.mxu0 0.0
  %2178 = vmatpush1.msra.mxu0 0.0
  %2179 = vmatprep.subr.mxu0 0.0
  %2180 = vmatpush1.msra.mxu0 0.0
  %2181 = vmatprep.subr.mxu0 0.0
  %2182 = vmatpush1.msra.mxu0 0.0
  %2183 = vmatprep.subr.mxu0 0.0
  %2184 = vmatpush1.msra.mxu0 0.0
  %2185 = vmatprep.subr.mxu0 0.0
  %2186 = vmatpush1.msra.mxu0 %v2154
  %2187 = vmatprep.subr.mxu0 0.0
  %2188 = vmatpush1.msra.mxu0 %v2153
  %2189 = vmatprep.subr.mxu0 0.0
  %2190 = vmatpush1.msra.mxu0 %v2152
  %2191 = vmatprep.subr.mxu0 0.0
  %2192 = vmatpush1.msra.mxu0 %v2151
  %2193 = vmatprep.subr.mxu0 0.0
  %2194 = vmatpush2.msra.mxu0 0.0
  %2195 = vmatprep.subr.mxu0 0.0
  %2196 = vmatpush2.msra.mxu0 0.0
  %2197 = vmatprep.subr.mxu0 0.0
  %2198 = vmatpush2.msra.mxu0 0.0
  %2199 = vmatprep.subr.mxu0 0.0
  %2200 = vmatpush2.msra.mxu0 0.0
  %2201 = vmatprep.subr.mxu0 0.0
  %2202 = vmatpush2.msra.mxu0 0.0
  %2203 = vmatprep.subr.mxu0 0.0
  %2204 = vmatpush2.msra.mxu0 0.0
  %2205 = vmatprep.subr.mxu0 0.0
  %2206 = vmatpush2.msra.mxu0 0.0
  %2207 = vmatprep.subr.mxu0 0.0
  %2208 = vmatpush2.msra.mxu0 0.0
  %2209 = vmatprep.subr.mxu0 0.0
  %2210 = vmatpush2.msra.mxu0 0.0
  %2211 = vmatprep.subr.mxu0 0.0
  %2212 = vmatpush2.msra.mxu0 0.0
  %2213 = vmatprep.subr.mxu0 0.0
  %2214 = vmatpush2.msra.mxu0 0.0
  %2215 = vmatprep.subr.mxu0 0.0
  %2216 = vmatpush2.msra.mxu0 0.0
  %2217 = vmatprep.subr.mxu0 0.0
  %2218 = vmatpush2.msra.mxu0 0.0
  %2219 = vmatprep.subr.mxu0 0.0
  %2220 = vmatpush2.msra.mxu0 0.0
  %2221 = vmatprep.subr.mxu0 0.0
  %2222 = vmatpush2.msra.mxu0 0.0
  %2223 = vmatprep.subr.mxu0 0.0
  %2224 = vmatpush2.msra.mxu0 0.0
  %2225 = vmatprep.mubr.f32.mxu0 0.0
  %2226 = vmatmul.mubr.f32.gmra.mxu0 %v2156
  %v2227 = vpop.f32.mrf.mxu0
  %v2228 = vadd.f32 0.0, %v2227
  %v2229 = vpop.f32.mrf.mxu0
  %2230 = vmatprep.mubr.f32.mxu0 0.0
  %2231 = vmatmul.mubr.f32.gmra.mxu0 %v2159
  %v2232 = vpop.f32.mrf.mxu0
  %v2233 = vadd.f32 0.0, %v2232
  %v2234 = vpop.f32.mrf.mxu0
  %2235 = vdwg.mxu0
  %v2236 = vadd.f32 %v2147, %v2228
  %v2237 = vadd.f32 %v2148, %v2233
  %v2238 = vld [vmem:[#allocation2 + $0x130] sm:$0xff]
  %v2239 = vld [vmem:[#allocation2 + $0x138] sm:$0xff]
  %v2240 = vld [vmem:[%s2 + $0x260] sm:$0xff]
  %v2241 = vld [vmem:[%s2 + $0x268] sm:$0xff]
  %v2242 = vld [vmem:[%s2 + $0x270] sm:$0xff]
  %v2243 = vld [vmem:[%s2 + $0x278] sm:$0xff]
  %v2245 = vsel %vm496, %v2238, 0
  %v2248 = vsel %vm496, %v2239, 0
  %2250 = vmatprep.subr.mxu0 0.0
  %2251 = vmatpush1.msra.mxu0 0.0
  %2252 = vmatprep.subr.mxu0 0.0
  %2253 = vmatpush1.msra.mxu0 0.0
  %2254 = vmatprep.subr.mxu0 0.0
  %2255 = vmatpush1.msra.mxu0 0.0
  %2256 = vmatprep.subr.mxu0 0.0
  %2257 = vmatpush1.msra.mxu0 0.0
  %2258 = vmatprep.subr.mxu0 0.0
  %2259 = vmatpush1.msra.mxu0 0.0
  %2260 = vmatprep.subr.mxu0 0.0
  %2261 = vmatpush1.msra.mxu0 0.0
  %2262 = vmatprep.subr.mxu0 0.0
  %2263 = vmatpush1.msra.mxu0 0.0
  %2264 = vmatprep.subr.mxu0 0.0
  %2265 = vmatpush1.msra.mxu0 0.0
  %2266 = vmatprep.subr.mxu0 0.0
  %2267 = vmatpush1.msra.mxu0 0.0
  %2268 = vmatprep.subr.mxu0 0.0
  %2269 = vmatpush1.msra.mxu0 0.0
  %2270 = vmatprep.subr.mxu0 0.0
  %2271 = vmatpush1.msra.mxu0 0.0
  %2272 = vmatprep.subr.mxu0 0.0
  %2273 = vmatpush1.msra.mxu0 0.0
  %2274 = vmatprep.subr.mxu0 0.0
  %2275 = vmatpush1.msra.mxu0 %v2243
  %2276 = vmatprep.subr.mxu0 0.0
  %2277 = vmatpush1.msra.mxu0 %v2242
  %2278 = vmatprep.subr.mxu0 0.0
  %2279 = vmatpush1.msra.mxu0 %v2241
  %2280 = vmatprep.subr.mxu0 0.0
  %2281 = vmatpush1.msra.mxu0 %v2240
  %2282 = vmatprep.subr.mxu0 0.0
  %2283 = vmatpush2.msra.mxu0 0.0
  %2284 = vmatprep.subr.mxu0 0.0
  %2285 = vmatpush2.msra.mxu0 0.0
  %2286 = vmatprep.subr.mxu0 0.0
  %2287 = vmatpush2.msra.mxu0 0.0
  %2288 = vmatprep.subr.mxu0 0.0
  %2289 = vmatpush2.msra.mxu0 0.0
  %2290 = vmatprep.subr.mxu0 0.0
  %2291 = vmatpush2.msra.mxu0 0.0
  %2292 = vmatprep.subr.mxu0 0.0
  %2293 = vmatpush2.msra.mxu0 0.0
  %2294 = vmatprep.subr.mxu0 0.0
  %2295 = vmatpush2.msra.mxu0 0.0
  %2296 = vmatprep.subr.mxu0 0.0
  %2297 = vmatpush2.msra.mxu0 0.0
  %2298 = vmatprep.subr.mxu0 0.0
  %2299 = vmatpush2.msra.mxu0 0.0
  %2300 = vmatprep.subr.mxu0 0.0
  %2301 = vmatpush2.msra.mxu0 0.0
  %2302 = vmatprep.subr.mxu0 0.0
  %2303 = vmatpush2.msra.mxu0 0.0
  %2304 = vmatprep.subr.mxu0 0.0
  %2305 = vmatpush2.msra.mxu0 0.0
  %2306 = vmatprep.subr.mxu0 0.0
  %2307 = vmatpush2.msra.mxu0 0.0
  %2308 = vmatprep.subr.mxu0 0.0
  %2309 = vmatpush2.msra.mxu0 0.0
  %2310 = vmatprep.subr.mxu0 0.0
  %2311 = vmatpush2.msra.mxu0 0.0
  %2312 = vmatprep.subr.mxu0 0.0
  %2313 = vmatpush2.msra.mxu0 0.0
  %2314 = vmatprep.mubr.f32.mxu0 0.0
  %2315 = vmatmul.mubr.f32.gmra.mxu0 %v2245
  %v2316 = vpop.f32.mrf.mxu0
  %v2317 = vadd.f32 0.0, %v2316
  %v2318 = vpop.f32.mrf.mxu0
  %2319 = vmatprep.mubr.f32.mxu0 0.0
  %2320 = vmatmul.mubr.f32.gmra.mxu0 %v2248
  %v2321 = vpop.f32.mrf.mxu0
  %v2322 = vadd.f32 0.0, %v2321
  %v2323 = vpop.f32.mrf.mxu0
  %2324 = vdwg.mxu0
  %v2325 = vadd.f32 %v2236, %v2317
  %v2326 = vadd.f32 %v2237, %v2322
  %v2327 = vld [vmem:[#allocation2 + $0x140] sm:$0xff]
  %v2328 = vld [vmem:[#allocation2 + $0x148] sm:$0xff]
  %v2329 = vld [vmem:[%s2 + $0x280] sm:$0xff]
  %v2330 = vld [vmem:[%s2 + $0x288] sm:$0xff]
  %v2331 = vld [vmem:[%s2 + $0x290] sm:$0xff]
  %v2332 = vld [vmem:[%s2 + $0x298] sm:$0xff]
  %v2334 = vsel %vm496, %v2327, 0
  %v2337 = vsel %vm496, %v2328, 0
  %2339 = vmatprep.subr.mxu0 0.0
  %2340 = vmatpush1.msra.mxu0 0.0
  %2341 = vmatprep.subr.mxu0 0.0
  %2342 = vmatpush1.msra.mxu0 0.0
  %2343 = vmatprep.subr.mxu0 0.0
  %2344 = vmatpush1.msra.mxu0 0.0
  %2345 = vmatprep.subr.mxu0 0.0
  %2346 = vmatpush1.msra.mxu0 0.0
  %2347 = vmatprep.subr.mxu0 0.0
  %2348 = vmatpush1.msra.mxu0 0.0
  %2349 = vmatprep.subr.mxu0 0.0
  %2350 = vmatpush1.msra.mxu0 0.0
  %2351 = vmatprep.subr.mxu0 0.0
  %2352 = vmatpush1.msra.mxu0 0.0
  %2353 = vmatprep.subr.mxu0 0.0
  %2354 = vmatpush1.msra.mxu0 0.0
  %2355 = vmatprep.subr.mxu0 0.0
  %2356 = vmatpush1.msra.mxu0 0.0
  %2357 = vmatprep.subr.mxu0 0.0
  %2358 = vmatpush1.msra.mxu0 0.0
  %2359 = vmatprep.subr.mxu0 0.0
  %2360 = vmatpush1.msra.mxu0 0.0
  %2361 = vmatprep.subr.mxu0 0.0
  %2362 = vmatpush1.msra.mxu0 0.0
  %2363 = vmatprep.subr.mxu0 0.0
  %2364 = vmatpush1.msra.mxu0 %v2332
  %2365 = vmatprep.subr.mxu0 0.0
  %2366 = vmatpush1.msra.mxu0 %v2331
  %2367 = vmatprep.subr.mxu0 0.0
  %2368 = vmatpush1.msra.mxu0 %v2330
  %2369 = vmatprep.subr.mxu0 0.0
  %2370 = vmatpush1.msra.mxu0 %v2329
  %2371 = vmatprep.subr.mxu0 0.0
  %2372 = vmatpush2.msra.mxu0 0.0
  %2373 = vmatprep.subr.mxu0 0.0
  %2374 = vmatpush2.msra.mxu0 0.0
  %2375 = vmatprep.subr.mxu0 0.0
  %2376 = vmatpush2.msra.mxu0 0.0
  %2377 = vmatprep.subr.mxu0 0.0
  %2378 = vmatpush2.msra.mxu0 0.0
  %2379 = vmatprep.subr.mxu0 0.0
  %2380 = vmatpush2.msra.mxu0 0.0
  %2381 = vmatprep.subr.mxu0 0.0
  %2382 = vmatpush2.msra.mxu0 0.0
  %2383 = vmatprep.subr.mxu0 0.0
  %2384 = vmatpush2.msra.mxu0 0.0
  %2385 = vmatprep.subr.mxu0 0.0
  %2386 = vmatpush2.msra.mxu0 0.0
  %2387 = vmatprep.subr.mxu0 0.0
  %2388 = vmatpush2.msra.mxu0 0.0
  %2389 = vmatprep.subr.mxu0 0.0
  %2390 = vmatpush2.msra.mxu0 0.0
  %2391 = vmatprep.subr.mxu0 0.0
  %2392 = vmatpush2.msra.mxu0 0.0
  %2393 = vmatprep.subr.mxu0 0.0
  %2394 = vmatpush2.msra.mxu0 0.0
  %2395 = vmatprep.subr.mxu0 0.0
  %2396 = vmatpush2.msra.mxu0 0.0
  %2397 = vmatprep.subr.mxu0 0.0
  %2398 = vmatpush2.msra.mxu0 0.0
  %2399 = vmatprep.subr.mxu0 0.0
  %2400 = vmatpush2.msra.mxu0 0.0
  %2401 = vmatprep.subr.mxu0 0.0
  %2402 = vmatpush2.msra.mxu0 0.0
  %2403 = vmatprep.mubr.f32.mxu0 0.0
  %2404 = vmatmul.mubr.f32.gmra.mxu0 %v2334
  %v2405 = vpop.f32.mrf.mxu0
  %v2406 = vadd.f32 0.0, %v2405
  %v2407 = vpop.f32.mrf.mxu0
  %2408 = vmatprep.mubr.f32.mxu0 0.0
  %2409 = vmatmul.mubr.f32.gmra.mxu0 %v2337
  %v2410 = vpop.f32.mrf.mxu0
  %v2411 = vadd.f32 0.0, %v2410
  %v2412 = vpop.f32.mrf.mxu0
  %2413 = vdwg.mxu0
  %v2414 = vadd.f32 %v2325, %v2406
  %v2415 = vadd.f32 %v2326, %v2411
  %v2416 = vld [vmem:[#allocation2 + $0x150] sm:$0xff]
  %v2417 = vld [vmem:[#allocation2 + $0x158] sm:$0xff]
  %v2418 = vld [vmem:[%s2 + $0x2a0] sm:$0xff]
  %v2419 = vld [vmem:[%s2 + $0x2a8] sm:$0xff]
  %v2420 = vld [vmem:[%s2 + $0x2b0] sm:$0xff]
  %v2421 = vld [vmem:[%s2 + $0x2b8] sm:$0xff]
  %v2423 = vsel %vm496, %v2416, 0
  %v2426 = vsel %vm496, %v2417, 0
  %2428 = vmatprep.subr.mxu0 0.0
  %2429 = vmatpush1.msra.mxu0 0.0
  %2430 = vmatprep.subr.mxu0 0.0
  %2431 = vmatpush1.msra.mxu0 0.0
  %2432 = vmatprep.subr.mxu0 0.0
  %2433 = vmatpush1.msra.mxu0 0.0
  %2434 = vmatprep.subr.mxu0 0.0
  %2435 = vmatpush1.msra.mxu0 0.0
  %2436 = vmatprep.subr.mxu0 0.0
  %2437 = vmatpush1.msra.mxu0 0.0
  %2438 = vmatprep.subr.mxu0 0.0
  %2439 = vmatpush1.msra.mxu0 0.0
  %2440 = vmatprep.subr.mxu0 0.0
  %2441 = vmatpush1.msra.mxu0 0.0
  %2442 = vmatprep.subr.mxu0 0.0
  %2443 = vmatpush1.msra.mxu0 0.0
  %2444 = vmatprep.subr.mxu0 0.0
  %2445 = vmatpush1.msra.mxu0 0.0
  %2446 = vmatprep.subr.mxu0 0.0
  %2447 = vmatpush1.msra.mxu0 0.0
  %2448 = vmatprep.subr.mxu0 0.0
  %2449 = vmatpush1.msra.mxu0 0.0
  %2450 = vmatprep.subr.mxu0 0.0
  %2451 = vmatpush1.msra.mxu0 0.0
  %2452 = vmatprep.subr.mxu0 0.0
  %2453 = vmatpush1.msra.mxu0 %v2421
  %2454 = vmatprep.subr.mxu0 0.0
  %2455 = vmatpush1.msra.mxu0 %v2420
  %2456 = vmatprep.subr.mxu0 0.0
  %2457 = vmatpush1.msra.mxu0 %v2419
  %2458 = vmatprep.subr.mxu0 0.0
  %2459 = vmatpush1.msra.mxu0 %v2418
  %2460 = vmatprep.subr.mxu0 0.0
  %2461 = vmatpush2.msra.mxu0 0.0
  %2462 = vmatprep.subr.mxu0 0.0
  %2463 = vmatpush2.msra.mxu0 0.0
  %2464 = vmatprep.subr.mxu0 0.0
  %2465 = vmatpush2.msra.mxu0 0.0
  %2466 = vmatprep.subr.mxu0 0.0
  %2467 = vmatpush2.msra.mxu0 0.0
  %2468 = vmatprep.subr.mxu0 0.0
  %2469 = vmatpush2.msra.mxu0 0.0
  %2470 = vmatprep.subr.mxu0 0.0
  %2471 = vmatpush2.msra.mxu0 0.0
  %2472 = vmatprep.subr.mxu0 0.0
  %2473 = vmatpush2.msra.mxu0 0.0
  %2474 = vmatprep.subr.mxu0 0.0
  %2475 = vmatpush2.msra.mxu0 0.0
  %2476 = vmatprep.subr.mxu0 0.0
  %2477 = vmatpush2.msra.mxu0 0.0
  %2478 = vmatprep.subr.mxu0 0.0
  %2479 = vmatpush2.msra.mxu0 0.0
  %2480 = vmatprep.subr.mxu0 0.0
  %2481 = vmatpush2.msra.mxu0 0.0
  %2482 = vmatprep.subr.mxu0 0.0
  %2483 = vmatpush2.msra.mxu0 0.0
  %2484 = vmatprep.subr.mxu0 0.0
  %2485 = vmatpush2.msra.mxu0 0.0
  %2486 = vmatprep.subr.mxu0 0.0
  %2487 = vmatpush2.msra.mxu0 0.0
  %2488 = vmatprep.subr.mxu0 0.0
  %2489 = vmatpush2.msra.mxu0 0.0
  %2490 = vmatprep.subr.mxu0 0.0
  %2491 = vmatpush2.msra.mxu0 0.0
  %2492 = vmatprep.mubr.f32.mxu0 0.0
  %2493 = vmatmul.mubr.f32.gmra.mxu0 %v2423
  %v2494 = vpop.f32.mrf.mxu0
  %v2495 = vadd.f32 0.0, %v2494
  %v2496 = vpop.f32.mrf.mxu0
  %2497 = vmatprep.mubr.f32.mxu0 0.0
  %2498 = vmatmul.mubr.f32.gmra.mxu0 %v2426
  %v2499 = vpop.f32.mrf.mxu0
  %v2500 = vadd.f32 0.0, %v2499
  %v2501 = vpop.f32.mrf.mxu0
  %2502 = vdwg.mxu0
  %v2503 = vadd.f32 %v2414, %v2495
  %v2504 = vadd.f32 %v2415, %v2500
  %v2505 = vld [vmem:[#allocation2 + $0x160] sm:$0xff]
  %v2506 = vld [vmem:[#allocation2 + $0x168] sm:$0xff]
  %v2507 = vld [vmem:[%s2 + $0x2c0] sm:$0xff]
  %v2508 = vld [vmem:[%s2 + $0x2c8] sm:$0xff]
  %v2509 = vld [vmem:[%s2 + $0x2d0] sm:$0xff]
  %v2510 = vld [vmem:[%s2 + $0x2d8] sm:$0xff]
  %v2512 = vsel %vm496, %v2505, 0
  %v2515 = vsel %vm496, %v2506, 0
  %2517 = vmatprep.subr.mxu0 0.0
  %2518 = vmatpush1.msra.mxu0 0.0
  %2519 = vmatprep.subr.mxu0 0.0
  %2520 = vmatpush1.msra.mxu0 0.0
  %2521 = vmatprep.subr.mxu0 0.0
  %2522 = vmatpush1.msra.mxu0 0.0
  %2523 = vmatprep.subr.mxu0 0.0
  %2524 = vmatpush1.msra.mxu0 0.0
  %2525 = vmatprep.subr.mxu0 0.0
  %2526 = vmatpush1.msra.mxu0 0.0
  %2527 = vmatprep.subr.mxu0 0.0
  %2528 = vmatpush1.msra.mxu0 0.0
  %2529 = vmatprep.subr.mxu0 0.0
  %2530 = vmatpush1.msra.mxu0 0.0
  %2531 = vmatprep.subr.mxu0 0.0
  %2532 = vmatpush1.msra.mxu0 0.0
  %2533 = vmatprep.subr.mxu0 0.0
  %2534 = vmatpush1.msra.mxu0 0.0
  %2535 = vmatprep.subr.mxu0 0.0
  %2536 = vmatpush1.msra.mxu0 0.0
  %2537 = vmatprep.subr.mxu0 0.0
  %2538 = vmatpush1.msra.mxu0 0.0
  %2539 = vmatprep.subr.mxu0 0.0
  %2540 = vmatpush1.msra.mxu0 0.0
  %2541 = vmatprep.subr.mxu0 0.0
  %2542 = vmatpush1.msra.mxu0 %v2510
  %2543 = vmatprep.subr.mxu0 0.0
  %2544 = vmatpush1.msra.mxu0 %v2509
  %2545 = vmatprep.subr.mxu0 0.0
  %2546 = vmatpush1.msra.mxu0 %v2508
  %2547 = vmatprep.subr.mxu0 0.0
  %2548 = vmatpush1.msra.mxu0 %v2507
  %2549 = vmatprep.subr.mxu0 0.0
  %2550 = vmatpush2.msra.mxu0 0.0
  %2551 = vmatprep.subr.mxu0 0.0
  %2552 = vmatpush2.msra.mxu0 0.0
  %2553 = vmatprep.subr.mxu0 0.0
  %2554 = vmatpush2.msra.mxu0 0.0
  %2555 = vmatprep.subr.mxu0 0.0
  %2556 = vmatpush2.msra.mxu0 0.0
  %2557 = vmatprep.subr.mxu0 0.0
  %2558 = vmatpush2.msra.mxu0 0.0
  %2559 = vmatprep.subr.mxu0 0.0
  %2560 = vmatpush2.msra.mxu0 0.0
  %2561 = vmatprep.subr.mxu0 0.0
  %2562 = vmatpush2.msra.mxu0 0.0
  %2563 = vmatprep.subr.mxu0 0.0
  %2564 = vmatpush2.msra.mxu0 0.0
  %2565 = vmatprep.subr.mxu0 0.0
  %2566 = vmatpush2.msra.mxu0 0.0
  %2567 = vmatprep.subr.mxu0 0.0
  %2568 = vmatpush2.msra.mxu0 0.0
  %2569 = vmatprep.subr.mxu0 0.0
  %2570 = vmatpush2.msra.mxu0 0.0
  %2571 = vmatprep.subr.mxu0 0.0
  %2572 = vmatpush2.msra.mxu0 0.0
  %2573 = vmatprep.subr.mxu0 0.0
  %2574 = vmatpush2.msra.mxu0 0.0
  %2575 = vmatprep.subr.mxu0 0.0
  %2576 = vmatpush2.msra.mxu0 0.0
  %2577 = vmatprep.subr.mxu0 0.0
  %2578 = vmatpush2.msra.mxu0 0.0
  %2579 = vmatprep.subr.mxu0 0.0
  %2580 = vmatpush2.msra.mxu0 0.0
  %2581 = vmatprep.mubr.f32.mxu0 0.0
  %2582 = vmatmul.mubr.f32.gmra.mxu0 %v2512
  %v2583 = vpop.f32.mrf.mxu0
  %v2584 = vadd.f32 0.0, %v2583
  %v2585 = vpop.f32.mrf.mxu0
  %2586 = vmatprep.mubr.f32.mxu0 0.0
  %2587 = vmatmul.mubr.f32.gmra.mxu0 %v2515
  %v2588 = vpop.f32.mrf.mxu0
  %v2589 = vadd.f32 0.0, %v2588
  %v2590 = vpop.f32.mrf.mxu0
  %2591 = vdwg.mxu0
  %v2592 = vadd.f32 %v2503, %v2584
  %v2593 = vadd.f32 %v2504, %v2589
  %v2594 = vld [vmem:[#allocation2 + $0x170] sm:$0xff]
  %v2595 = vld [vmem:[#allocation2 + $0x178] sm:$0xff]
  %v2596 = vld [vmem:[%s2 + $0x2e0] sm:$0xff]
  %v2597 = vld [vmem:[%s2 + $0x2e8] sm:$0xff]
  %v2598 = vld [vmem:[%s2 + $0x2f0] sm:$0xff]
  %v2599 = vld [vmem:[%s2 + $0x2f8] sm:$0xff]
  %v2601 = vsel %vm496, %v2594, 0
  %v2604 = vsel %vm496, %v2595, 0
  %2606 = vmatprep.subr.mxu0 0.0
  %2607 = vmatpush1.msra.mxu0 0.0
  %2608 = vmatprep.subr.mxu0 0.0
  %2609 = vmatpush1.msra.mxu0 0.0
  %2610 = vmatprep.subr.mxu0 0.0
  %2611 = vmatpush1.msra.mxu0 0.0
  %2612 = vmatprep.subr.mxu0 0.0
  %2613 = vmatpush1.msra.mxu0 0.0
  %2614 = vmatprep.subr.mxu0 0.0
  %2615 = vmatpush1.msra.mxu0 0.0
  %2616 = vmatprep.subr.mxu0 0.0
  %2617 = vmatpush1.msra.mxu0 0.0
  %2618 = vmatprep.subr.mxu0 0.0
  %2619 = vmatpush1.msra.mxu0 0.0
  %2620 = vmatprep.subr.mxu0 0.0
  %2621 = vmatpush1.msra.mxu0 0.0
  %2622 = vmatprep.subr.mxu0 0.0
  %2623 = vmatpush1.msra.mxu0 0.0
  %2624 = vmatprep.subr.mxu0 0.0
  %2625 = vmatpush1.msra.mxu0 0.0
  %2626 = vmatprep.subr.mxu0 0.0
  %2627 = vmatpush1.msra.mxu0 0.0
  %2628 = vmatprep.subr.mxu0 0.0
  %2629 = vmatpush1.msra.mxu0 0.0
  %2630 = vmatprep.subr.mxu0 0.0
  %2631 = vmatpush1.msra.mxu0 %v2599
  %2632 = vmatprep.subr.mxu0 0.0
  %2633 = vmatpush1.msra.mxu0 %v2598
  %2634 = vmatprep.subr.mxu0 0.0
  %2635 = vmatpush1.msra.mxu0 %v2597
  %2636 = vmatprep.subr.mxu0 0.0
  %2637 = vmatpush1.msra.mxu0 %v2596
  %2638 = vmatprep.subr.mxu0 0.0
  %2639 = vmatpush2.msra.mxu0 0.0
  %2640 = vmatprep.subr.mxu0 0.0
  %2641 = vmatpush2.msra.mxu0 0.0
  %2642 = vmatprep.subr.mxu0 0.0
  %2643 = vmatpush2.msra.mxu0 0.0
  %2644 = vmatprep.subr.mxu0 0.0
  %2645 = vmatpush2.msra.mxu0 0.0
  %2646 = vmatprep.subr.mxu0 0.0
  %2647 = vmatpush2.msra.mxu0 0.0
  %2648 = vmatprep.subr.mxu0 0.0
  %2649 = vmatpush2.msra.mxu0 0.0
  %2650 = vmatprep.subr.mxu0 0.0
  %2651 = vmatpush2.msra.mxu0 0.0
  %2652 = vmatprep.subr.mxu0 0.0
  %2653 = vmatpush2.msra.mxu0 0.0
  %2654 = vmatprep.subr.mxu0 0.0
  %2655 = vmatpush2.msra.mxu0 0.0
  %2656 = vmatprep.subr.mxu0 0.0
  %2657 = vmatpush2.msra.mxu0 0.0
  %2658 = vmatprep.subr.mxu0 0.0
  %2659 = vmatpush2.msra.mxu0 0.0
  %2660 = vmatprep.subr.mxu0 0.0
  %2661 = vmatpush2.msra.mxu0 0.0
  %2662 = vmatprep.subr.mxu0 0.0
  %2663 = vmatpush2.msra.mxu0 0.0
  %2664 = vmatprep.subr.mxu0 0.0
  %2665 = vmatpush2.msra.mxu0 0.0
  %2666 = vmatprep.subr.mxu0 0.0
  %2667 = vmatpush2.msra.mxu0 0.0
  %2668 = vmatprep.subr.mxu0 0.0
  %2669 = vmatpush2.msra.mxu0 0.0
  %2670 = vmatprep.mubr.f32.mxu0 0.0
  %2671 = vmatmul.mubr.f32.gmra.mxu0 %v2601
  %v2672 = vpop.f32.mrf.mxu0
  %v2673 = vadd.f32 0.0, %v2672
  %v2674 = vpop.f32.mrf.mxu0
  %2675 = vmatprep.mubr.f32.mxu0 0.0
  %2676 = vmatmul.mubr.f32.gmra.mxu0 %v2604
  %v2677 = vpop.f32.mrf.mxu0
  %v2678 = vadd.f32 0.0, %v2677
  %v2679 = vpop.f32.mrf.mxu0
  %2680 = vdwg.mxu0
  %v2681 = vadd.f32 %v2592, %v2673
  %v2682 = vadd.f32 %v2593, %v2678
  %v2683 = vld [vmem:[#allocation2 + $0x180] sm:$0xff]
  %v2684 = vld [vmem:[#allocation2 + $0x188] sm:$0xff]
  %v2685 = vld [vmem:[%s2 + $0x300] sm:$0xff]
  %v2686 = vld [vmem:[%s2 + $0x308] sm:$0xff]
  %v2687 = vld [vmem:[%s2 + $0x310] sm:$0xff]
  %v2688 = vld [vmem:[%s2 + $0x318] sm:$0xff]
  %v2690 = vsel %vm496, %v2683, 0
  %v2693 = vsel %vm496, %v2684, 0
  %2695 = vmatprep.subr.mxu0 0.0
  %2696 = vmatpush1.msra.mxu0 0.0
  %2697 = vmatprep.subr.mxu0 0.0
  %2698 = vmatpush1.msra.mxu0 0.0
  %2699 = vmatprep.subr.mxu0 0.0
  %2700 = vmatpush1.msra.mxu0 0.0
  %2701 = vmatprep.subr.mxu0 0.0
  %2702 = vmatpush1.msra.mxu0 0.0
  %2703 = vmatprep.subr.mxu0 0.0
  %2704 = vmatpush1.msra.mxu0 0.0
  %2705 = vmatprep.subr.mxu0 0.0
  %2706 = vmatpush1.msra.mxu0 0.0
  %2707 = vmatprep.subr.mxu0 0.0
  %2708 = vmatpush1.msra.mxu0 0.0
  %2709 = vmatprep.subr.mxu0 0.0
  %2710 = vmatpush1.msra.mxu0 0.0
  %2711 = vmatprep.subr.mxu0 0.0
  %2712 = vmatpush1.msra.mxu0 0.0
  %2713 = vmatprep.subr.mxu0 0.0
  %2714 = vmatpush1.msra.mxu0 0.0
  %2715 = vmatprep.subr.mxu0 0.0
  %2716 = vmatpush1.msra.mxu0 0.0
  %2717 = vmatprep.subr.mxu0 0.0
  %2718 = vmatpush1.msra.mxu0 0.0
  %2719 = vmatprep.subr.mxu0 0.0
  %2720 = vmatpush1.msra.mxu0 %v2688
  %2721 = vmatprep.subr.mxu0 0.0
  %2722 = vmatpush1.msra.mxu0 %v2687
  %2723 = vmatprep.subr.mxu0 0.0
  %2724 = vmatpush1.msra.mxu0 %v2686
  %2725 = vmatprep.subr.mxu0 0.0
  %2726 = vmatpush1.msra.mxu0 %v2685
  %2727 = vmatprep.subr.mxu0 0.0
  %2728 = vmatpush2.msra.mxu0 0.0
  %2729 = vmatprep.subr.mxu0 0.0
  %2730 = vmatpush2.msra.mxu0 0.0
  %2731 = vmatprep.subr.mxu0 0.0
  %2732 = vmatpush2.msra.mxu0 0.0
  %2733 = vmatprep.subr.mxu0 0.0
  %2734 = vmatpush2.msra.mxu0 0.0
  %2735 = vmatprep.subr.mxu0 0.0
  %2736 = vmatpush2.msra.mxu0 0.0
  %2737 = vmatprep.subr.mxu0 0.0
  %2738 = vmatpush2.msra.mxu0 0.0
  %2739 = vmatprep.subr.mxu0 0.0
  %2740 = vmatpush2.msra.mxu0 0.0
  %2741 = vmatprep.subr.mxu0 0.0
  %2742 = vmatpush2.msra.mxu0 0.0
  %2743 = vmatprep.subr.mxu0 0.0
  %2744 = vmatpush2.msra.mxu0 0.0
  %2745 = vmatprep.subr.mxu0 0.0
  %2746 = vmatpush2.msra.mxu0 0.0
  %2747 = vmatprep.subr.mxu0 0.0
  %2748 = vmatpush2.msra.mxu0 0.0
  %2749 = vmatprep.subr.mxu0 0.0
  %2750 = vmatpush2.msra.mxu0 0.0
  %2751 = vmatprep.subr.mxu0 0.0
  %2752 = vmatpush2.msra.mxu0 0.0
  %2753 = vmatprep.subr.mxu0 0.0
  %2754 = vmatpush2.msra.mxu0 0.0
  %2755 = vmatprep.subr.mxu0 0.0
  %2756 = vmatpush2.msra.mxu0 0.0
  %2757 = vmatprep.subr.mxu0 0.0
  %2758 = vmatpush2.msra.mxu0 0.0
  %2759 = vmatprep.mubr.f32.mxu0 0.0
  %2760 = vmatmul.mubr.f32.gmra.mxu0 %v2690
  %v2761 = vpop.f32.mrf.mxu0
  %v2762 = vadd.f32 0.0, %v2761
  %v2763 = vpop.f32.mrf.mxu0
  %2764 = vmatprep.mubr.f32.mxu0 0.0
  %2765 = vmatmul.mubr.f32.gmra.mxu0 %v2693
  %v2766 = vpop.f32.mrf.mxu0
  %v2767 = vadd.f32 0.0, %v2766
  %v2768 = vpop.f32.mrf.mxu0
  %2769 = vdwg.mxu0
  %v2770 = vadd.f32 %v2681, %v2762
  %v2771 = vadd.f32 %v2682, %v2767
  %v2772 = vld [vmem:[#allocation2 + $0x190] sm:$0xff]
  %v2773 = vld [vmem:[#allocation2 + $0x198] sm:$0xff]
  %v2774 = vld [vmem:[%s2 + $0x320] sm:$0xff]
  %v2775 = vld [vmem:[%s2 + $0x328] sm:$0xff]
  %v2776 = vld [vmem:[%s2 + $0x330] sm:$0xff]
  %v2777 = vld [vmem:[%s2 + $0x338] sm:$0xff]
  %v2779 = vsel %vm496, %v2772, 0
  %v2782 = vsel %vm496, %v2773, 0
  %2784 = vmatprep.subr.mxu0 0.0
  %2785 = vmatpush1.msra.mxu0 0.0
  %2786 = vmatprep.subr.mxu0 0.0
  %2787 = vmatpush1.msra.mxu0 0.0
  %2788 = vmatprep.subr.mxu0 0.0
  %2789 = vmatpush1.msra.mxu0 0.0
  %2790 = vmatprep.subr.mxu0 0.0
  %2791 = vmatpush1.msra.mxu0 0.0
  %2792 = vmatprep.subr.mxu0 0.0
  %2793 = vmatpush1.msra.mxu0 0.0
  %2794 = vmatprep.subr.mxu0 0.0
  %2795 = vmatpush1.msra.mxu0 0.0
  %2796 = vmatprep.subr.mxu0 0.0
  %2797 = vmatpush1.msra.mxu0 0.0
  %2798 = vmatprep.subr.mxu0 0.0
  %2799 = vmatpush1.msra.mxu0 0.0
  %2800 = vmatprep.subr.mxu0 0.0
  %2801 = vmatpush1.msra.mxu0 0.0
  %2802 = vmatprep.subr.mxu0 0.0
  %2803 = vmatpush1.msra.mxu0 0.0
  %2804 = vmatprep.subr.mxu0 0.0
  %2805 = vmatpush1.msra.mxu0 0.0
  %2806 = vmatprep.subr.mxu0 0.0
  %2807 = vmatpush1.msra.mxu0 0.0
  %2808 = vmatprep.subr.mxu0 0.0
  %2809 = vmatpush1.msra.mxu0 %v2777
  %2810 = vmatprep.subr.mxu0 0.0
  %2811 = vmatpush1.msra.mxu0 %v2776
  %2812 = vmatprep.subr.mxu0 0.0
  %2813 = vmatpush1.msra.mxu0 %v2775
  %2814 = vmatprep.subr.mxu0 0.0
  %2815 = vmatpush1.msra.mxu0 %v2774
  %2816 = vmatprep.subr.mxu0 0.0
  %2817 = vmatpush2.msra.mxu0 0.0
  %2818 = vmatprep.subr.mxu0 0.0
  %2819 = vmatpush2.msra.mxu0 0.0
  %2820 = vmatprep.subr.mxu0 0.0
  %2821 = vmatpush2.msra.mxu0 0.0
  %2822 = vmatprep.subr.mxu0 0.0
  %2823 = vmatpush2.msra.mxu0 0.0
  %2824 = vmatprep.subr.mxu0 0.0
  %2825 = vmatpush2.msra.mxu0 0.0
  %2826 = vmatprep.subr.mxu0 0.0
  %2827 = vmatpush2.msra.mxu0 0.0
  %2828 = vmatprep.subr.mxu0 0.0
  %2829 = vmatpush2.msra.mxu0 0.0
  %2830 = vmatprep.subr.mxu0 0.0
  %2831 = vmatpush2.msra.mxu0 0.0
  %2832 = vmatprep.subr.mxu0 0.0
  %2833 = vmatpush2.msra.mxu0 0.0
  %2834 = vmatprep.subr.mxu0 0.0
  %2835 = vmatpush2.msra.mxu0 0.0
  %2836 = vmatprep.subr.mxu0 0.0
  %2837 = vmatpush2.msra.mxu0 0.0
  %2838 = vmatprep.subr.mxu0 0.0
  %2839 = vmatpush2.msra.mxu0 0.0
  %2840 = vmatprep.subr.mxu0 0.0
  %2841 = vmatpush2.msra.mxu0 0.0
  %2842 = vmatprep.subr.mxu0 0.0
  %2843 = vmatpush2.msra.mxu0 0.0
  %2844 = vmatprep.subr.mxu0 0.0
  %2845 = vmatpush2.msra.mxu0 0.0
  %2846 = vmatprep.subr.mxu0 0.0
  %2847 = vmatpush2.msra.mxu0 0.0
  %2848 = vmatprep.mubr.f32.mxu0 0.0
  %2849 = vmatmul.mubr.f32.gmra.mxu0 %v2779
  %v2850 = vpop.f32.mrf.mxu0
  %v2851 = vadd.f32 0.0, %v2850
  %v2852 = vpop.f32.mrf.mxu0
  %2853 = vmatprep.mubr.f32.mxu0 0.0
  %2854 = vmatmul.mubr.f32.gmra.mxu0 %v2782
  %v2855 = vpop.f32.mrf.mxu0
  %v2856 = vadd.f32 0.0, %v2855
  %v2857 = vpop.f32.mrf.mxu0
  %2858 = vdwg.mxu0
  %v2859 = vadd.f32 %v2770, %v2851
  %v2860 = vadd.f32 %v2771, %v2856
  %v2861 = vld [vmem:[#allocation2 + $0x1a0] sm:$0xff]
  %v2862 = vld [vmem:[#allocation2 + $0x1a8] sm:$0xff]
  %v2863 = vld [vmem:[%s2 + $0x340] sm:$0xff]
  %v2864 = vld [vmem:[%s2 + $0x348] sm:$0xff]
  %v2865 = vld [vmem:[%s2 + $0x350] sm:$0xff]
  %v2866 = vld [vmem:[%s2 + $0x358] sm:$0xff]
  %v2868 = vsel %vm496, %v2861, 0
  %v2871 = vsel %vm496, %v2862, 0
  %2873 = vmatprep.subr.mxu0 0.0
  %2874 = vmatpush1.msra.mxu0 0.0
  %2875 = vmatprep.subr.mxu0 0.0
  %2876 = vmatpush1.msra.mxu0 0.0
  %2877 = vmatprep.subr.mxu0 0.0
  %2878 = vmatpush1.msra.mxu0 0.0
  %2879 = vmatprep.subr.mxu0 0.0
  %2880 = vmatpush1.msra.mxu0 0.0
  %2881 = vmatprep.subr.mxu0 0.0
  %2882 = vmatpush1.msra.mxu0 0.0
  %2883 = vmatprep.subr.mxu0 0.0
  %2884 = vmatpush1.msra.mxu0 0.0
  %2885 = vmatprep.subr.mxu0 0.0
  %2886 = vmatpush1.msra.mxu0 0.0
  %2887 = vmatprep.subr.mxu0 0.0
  %2888 = vmatpush1.msra.mxu0 0.0
  %2889 = vmatprep.subr.mxu0 0.0
  %2890 = vmatpush1.msra.mxu0 0.0
  %2891 = vmatprep.subr.mxu0 0.0
  %2892 = vmatpush1.msra.mxu0 0.0
  %2893 = vmatprep.subr.mxu0 0.0
  %2894 = vmatpush1.msra.mxu0 0.0
  %2895 = vmatprep.subr.mxu0 0.0
  %2896 = vmatpush1.msra.mxu0 0.0
  %2897 = vmatprep.subr.mxu0 0.0
  %2898 = vmatpush1.msra.mxu0 %v2866
  %2899 = vmatprep.subr.mxu0 0.0
  %2900 = vmatpush1.msra.mxu0 %v2865
  %2901 = vmatprep.subr.mxu0 0.0
  %2902 = vmatpush1.msra.mxu0 %v2864
  %2903 = vmatprep.subr.mxu0 0.0
  %2904 = vmatpush1.msra.mxu0 %v2863
  %2905 = vmatprep.subr.mxu0 0.0
  %2906 = vmatpush2.msra.mxu0 0.0
  %2907 = vmatprep.subr.mxu0 0.0
  %2908 = vmatpush2.msra.mxu0 0.0
  %2909 = vmatprep.subr.mxu0 0.0
  %2910 = vmatpush2.msra.mxu0 0.0
  %2911 = vmatprep.subr.mxu0 0.0
  %2912 = vmatpush2.msra.mxu0 0.0
  %2913 = vmatprep.subr.mxu0 0.0
  %2914 = vmatpush2.msra.mxu0 0.0
  %2915 = vmatprep.subr.mxu0 0.0
  %2916 = vmatpush2.msra.mxu0 0.0
  %2917 = vmatprep.subr.mxu0 0.0
  %2918 = vmatpush2.msra.mxu0 0.0
  %2919 = vmatprep.subr.mxu0 0.0
  %2920 = vmatpush2.msra.mxu0 0.0
  %2921 = vmatprep.subr.mxu0 0.0
  %2922 = vmatpush2.msra.mxu0 0.0
  %2923 = vmatprep.subr.mxu0 0.0
  %2924 = vmatpush2.msra.mxu0 0.0
  %2925 = vmatprep.subr.mxu0 0.0
  %2926 = vmatpush2.msra.mxu0 0.0
  %2927 = vmatprep.subr.mxu0 0.0
  %2928 = vmatpush2.msra.mxu0 0.0
  %2929 = vmatprep.subr.mxu0 0.0
  %2930 = vmatpush2.msra.mxu0 0.0
  %2931 = vmatprep.subr.mxu0 0.0
  %2932 = vmatpush2.msra.mxu0 0.0
  %2933 = vmatprep.subr.mxu0 0.0
  %2934 = vmatpush2.msra.mxu0 0.0
  %2935 = vmatprep.subr.mxu0 0.0
  %2936 = vmatpush2.msra.mxu0 0.0
  %2937 = vmatprep.mubr.f32.mxu0 0.0
  %2938 = vmatmul.mubr.f32.gmra.mxu0 %v2868
  %v2939 = vpop.f32.mrf.mxu0
  %v2940 = vadd.f32 0.0, %v2939
  %v2941 = vpop.f32.mrf.mxu0
  %2942 = vmatprep.mubr.f32.mxu0 0.0
  %2943 = vmatmul.mubr.f32.gmra.mxu0 %v2871
  %v2944 = vpop.f32.mrf.mxu0
  %v2945 = vadd.f32 0.0, %v2944
  %v2946 = vpop.f32.mrf.mxu0
  %2947 = vdwg.mxu0
  %v2948 = vadd.f32 %v2859, %v2940
  %v2949 = vadd.f32 %v2860, %v2945
  %v2950 = vld [vmem:[%s3] sm:$0x1]
  %v2952 = vlaneseq
  %v2953 = vshrl.u32 %v2952, 7
  %v2954 = vsub.s32 0, %v2953
  %v2955 = vrot.slane %v2950, %v2954
  %v2957 = vadd.f32 %v2948, %v2955
  %v2958 = vadd.f32 %v2949, %v2955
  %v2959 = vmax.f32 %v2957, 0.0
  %v2960 = vmax.f32 %v2958, 0.0
  %vm2961 = vcmask 392192
  %2962 = vst.msk [vmem:[#allocation3] sm:$0xff] %vm2961, %v2959
  %2963 = vst.msk [vmem:[#allocation3 + $0x8] sm:$0xff] %vm2961, %v2960
  %v2964 = vld [vmem:[#allocation3] sm:$0x3]
  %v2965 = vld [vmem:[%s4] sm:$0xff]
  %v2966 = vld [vmem:[%s4 + $0x8] sm:$0xff]
  %v2967 = vld [vmem:[%s4 + $0x10] sm:$0xff]
  %v2968 = vld [vmem:[%s4 + $0x18] sm:$0xff]
  %v2969 = vld [vmem:[%s4 + $0x20] sm:$0xff]
  %v2970 = vld [vmem:[%s4 + $0x28] sm:$0xff]
  %v2971 = vld [vmem:[#allocation3 + $0x2] sm:$0x3]
  %v2972 = vld [vmem:[%s4 + $0x30] sm:$0xff]
  %v2973 = vld [vmem:[%s4 + $0x38] sm:$0xff]
  %v2974 = vld [vmem:[%s4 + $0x40] sm:$0xff]
  %v2975 = vld [vmem:[%s4 + $0x48] sm:$0xff]
  %v2976 = vld [vmem:[%s4 + $0x50] sm:$0xff]
  %v2977 = vld [vmem:[%s4 + $0x58] sm:$0xff]
  %v2979 = vsel %vm2961, %v2971, 0
  %2981 = vmatprep.subr.mxu0 0.0
  %2982 = vmatpush1.msra.mxu0 0.0
  %2983 = vmatprep.subr.mxu0 0.0
  %2984 = vmatpush1.msra.mxu0 0.0
  %2985 = vmatprep.subr.mxu0 0.0
  %2986 = vmatpush1.msra.mxu0 0.0
  %2987 = vmatprep.subr.mxu0 0.0
  %2988 = vmatpush1.msra.mxu0 0.0
  %2989 = vmatprep.subr.mxu0 0.0
  %2990 = vmatpush1.msra.mxu0 0.0
  %2991 = vmatprep.subr.mxu0 0.0
  %2992 = vmatpush1.msra.mxu0 0.0
  %2993 = vmatprep.subr.mxu0 0.0
  %2994 = vmatpush1.msra.mxu0 0.0
  %2995 = vmatprep.subr.mxu0 0.0
  %2996 = vmatpush1.msra.mxu0 0.0
  %2997 = vmatprep.subr.mxu0 0.0
  %2998 = vmatpush1.msra.mxu0 0.0
  %2999 = vmatprep.subr.mxu0 0.0
  %3000 = vmatpush1.msra.mxu0 0.0
  %3001 = vmatprep.subr.mxu0 0.0
  %3002 = vmatpush1.msra.mxu0 %v2977
  %3003 = vmatprep.subr.mxu0 0.0
  %3004 = vmatpush1.msra.mxu0 %v2976
  %3005 = vmatprep.subr.mxu0 0.0
  %3006 = vmatpush1.msra.mxu0 %v2975
  %3007 = vmatprep.subr.mxu0 0.0
  %3008 = vmatpush1.msra.mxu0 %v2974
  %3009 = vmatprep.subr.mxu0 0.0
  %3010 = vmatpush1.msra.mxu0 %v2973
  %3011 = vmatprep.subr.mxu0 0.0
  %3012 = vmatpush1.msra.mxu0 %v2972
  %3013 = vmatprep.subr.mxu0 0.0
  %3014 = vmatpush2.msra.mxu0 0.0
  %3015 = vmatprep.subr.mxu0 0.0
  %3016 = vmatpush2.msra.mxu0 0.0
  %3017 = vmatprep.subr.mxu0 0.0
  %3018 = vmatpush2.msra.mxu0 0.0
  %3019 = vmatprep.subr.mxu0 0.0
  %3020 = vmatpush2.msra.mxu0 0.0
  %3021 = vmatprep.subr.mxu0 0.0
  %3022 = vmatpush2.msra.mxu0 0.0
  %3023 = vmatprep.subr.mxu0 0.0
  %3024 = vmatpush2.msra.mxu0 0.0
  %3025 = vmatprep.subr.mxu0 0.0
  %3026 = vmatpush2.msra.mxu0 0.0
  %3027 = vmatprep.subr.mxu0 0.0
  %3028 = vmatpush2.msra.mxu0 0.0
  %3029 = vmatprep.subr.mxu0 0.0
  %3030 = vmatpush2.msra.mxu0 0.0
  %3031 = vmatprep.subr.mxu0 0.0
  %3032 = vmatpush2.msra.mxu0 0.0
  %3033 = vmatprep.subr.mxu0 0.0
  %3034 = vmatpush2.msra.mxu0 0.0
  %3035 = vmatprep.subr.mxu0 0.0
  %3036 = vmatpush2.msra.mxu0 0.0
  %3037 = vmatprep.subr.mxu0 0.0
  %3038 = vmatpush2.msra.mxu0 0.0
  %3039 = vmatprep.subr.mxu0 0.0
  %3040 = vmatpush2.msra.mxu0 0.0
  %3041 = vmatprep.subr.mxu0 0.0
  %3042 = vmatpush2.msra.mxu0 0.0
  %3043 = vmatprep.subr.mxu0 0.0
  %3044 = vmatpush2.msra.mxu0 0.0
  %3045 = vmatprep.mubr.f32.mxu0 0.0
  %3046 = vmatmul.mubr.f32.gmra.mxu0 %v2979
  %v3047 = vpop.f32.mrf.mxu0
  %v3048 = vadd.f32 0.0, %v3047
  %v3049 = vpop.f32.mrf.mxu0
  %3050 = vdwg.mxu0
  %v3052 = vsel %vm2961, %v2964, 0
  %3054 = vmatprep.subr.mxu0 0.0
  %3055 = vmatpush1.msra.mxu0 0.0
  %3056 = vmatprep.subr.mxu0 0.0
  %3057 = vmatpush1.msra.mxu0 0.0
  %3058 = vmatprep.subr.mxu0 0.0
  %3059 = vmatpush1.msra.mxu0 0.0
  %3060 = vmatprep.subr.mxu0 0.0
  %3061 = vmatpush1.msra.mxu0 0.0
  %3062 = vmatprep.subr.mxu0 0.0
  %3063 = vmatpush1.msra.mxu0 0.0
  %3064 = vmatprep.subr.mxu0 0.0
  %3065 = vmatpush1.msra.mxu0 0.0
  %3066 = vmatprep.subr.mxu0 0.0
  %3067 = vmatpush1.msra.mxu0 0.0
  %3068 = vmatprep.subr.mxu0 0.0
  %3069 = vmatpush1.msra.mxu0 0.0
  %3070 = vmatprep.subr.mxu0 0.0
  %3071 = vmatpush1.msra.mxu0 0.0
  %3072 = vmatprep.subr.mxu0 0.0
  %3073 = vmatpush1.msra.mxu0 0.0
  %3074 = vmatprep.subr.mxu0 0.0
  %3075 = vmatpush1.msra.mxu0 %v2970
  %3076 = vmatprep.subr.mxu0 0.0
  %3077 = vmatpush1.msra.mxu0 %v2969
  %3078 = vmatprep.subr.mxu0 0.0
  %3079 = vmatpush1.msra.mxu0 %v2968
  %3080 = vmatprep.subr.mxu0 0.0
  %3081 = vmatpush1.msra.mxu0 %v2967
  %3082 = vmatprep.subr.mxu0 0.0
  %3083 = vmatpush1.msra.mxu0 %v2966
  %3084 = vmatprep.subr.mxu0 0.0
  %3085 = vmatpush1.msra.mxu0 %v2965
  %3086 = vmatprep.subr.mxu0 0.0
  %3087 = vmatpush2.msra.mxu0 0.0
  %3088 = vmatprep.subr.mxu0 0.0
  %3089 = vmatpush2.msra.mxu0 0.0
  %3090 = vmatprep.subr.mxu0 0.0
  %3091 = vmatpush2.msra.mxu0 0.0
  %3092 = vmatprep.subr.mxu0 0.0
  %3093 = vmatpush2.msra.mxu0 0.0
  %3094 = vmatprep.subr.mxu0 0.0
  %3095 = vmatpush2.msra.mxu0 0.0
  %3096 = vmatprep.subr.mxu0 0.0
  %3097 = vmatpush2.msra.mxu0 0.0
  %3098 = vmatprep.subr.mxu0 0.0
  %3099 = vmatpush2.msra.mxu0 0.0
  %3100 = vmatprep.subr.mxu0 0.0
  %3101 = vmatpush2.msra.mxu0 0.0
  %3102 = vmatprep.subr.mxu0 0.0
  %3103 = vmatpush2.msra.mxu0 0.0
  %3104 = vmatprep.subr.mxu0 0.0
  %3105 = vmatpush2.msra.mxu0 0.0
  %3106 = vmatprep.subr.mxu0 0.0
  %3107 = vmatpush2.msra.mxu0 0.0
  %3108 = vmatprep.subr.mxu0 0.0
  %3109 = vmatpush2.msra.mxu0 0.0
  %3110 = vmatprep.subr.mxu0 0.0
  %3111 = vmatpush2.msra.mxu0 0.0
  %3112 = vmatprep.subr.mxu0 0.0
  %3113 = vmatpush2.msra.mxu0 0.0
  %3114 = vmatprep.subr.mxu0 0.0
  %3115 = vmatpush2.msra.mxu0 0.0
  %3116 = vmatprep.subr.mxu0 0.0
  %3117 = vmatpush2.msra.mxu0 0.0
  %3118 = vmatprep.mubr.f32.mxu0 0.0
  %3119 = vmatmul.mubr.f32.gmra.mxu0 %v3052
  %v3120 = vpop.f32.mrf.mxu0
  %v3121 = vadd.f32 %v3048, %v3120
  %v3122 = vpop.f32.mrf.mxu0
  %3123 = vdwg.mxu0
  %v3124 = vld [vmem:[#allocation3 + $0x4] sm:$0x3]
  %v3125 = vld [vmem:[%s4 + $0x60] sm:$0xff]
  %v3126 = vld [vmem:[%s4 + $0x68] sm:$0xff]
  %v3127 = vld [vmem:[%s4 + $0x70] sm:$0xff]
  %v3128 = vld [vmem:[%s4 + $0x78] sm:$0xff]
  %v3129 = vld [vmem:[%s4 + $0x80] sm:$0xff]
  %v3130 = vld [vmem:[%s4 + $0x88] sm:$0xff]
  %v3132 = vsel %vm2961, %v3124, 0
  %3134 = vmatprep.subr.mxu0 0.0
  %3135 = vmatpush1.msra.mxu0 0.0
  %3136 = vmatprep.subr.mxu0 0.0
  %3137 = vmatpush1.msra.mxu0 0.0
  %3138 = vmatprep.subr.mxu0 0.0
  %3139 = vmatpush1.msra.mxu0 0.0
  %3140 = vmatprep.subr.mxu0 0.0
  %3141 = vmatpush1.msra.mxu0 0.0
  %3142 = vmatprep.subr.mxu0 0.0
  %3143 = vmatpush1.msra.mxu0 0.0
  %3144 = vmatprep.subr.mxu0 0.0
  %3145 = vmatpush1.msra.mxu0 0.0
  %3146 = vmatprep.subr.mxu0 0.0
  %3147 = vmatpush1.msra.mxu0 0.0
  %3148 = vmatprep.subr.mxu0 0.0
  %3149 = vmatpush1.msra.mxu0 0.0
  %3150 = vmatprep.subr.mxu0 0.0
  %3151 = vmatpush1.msra.mxu0 0.0
  %3152 = vmatprep.subr.mxu0 0.0
  %3153 = vmatpush1.msra.mxu0 0.0
  %3154 = vmatprep.subr.mxu0 0.0
  %3155 = vmatpush1.msra.mxu0 %v3130
  %3156 = vmatprep.subr.mxu0 0.0
  %3157 = vmatpush1.msra.mxu0 %v3129
  %3158 = vmatprep.subr.mxu0 0.0
  %3159 = vmatpush1.msra.mxu0 %v3128
  %3160 = vmatprep.subr.mxu0 0.0
  %3161 = vmatpush1.msra.mxu0 %v3127
  %3162 = vmatprep.subr.mxu0 0.0
  %3163 = vmatpush1.msra.mxu0 %v3126
  %3164 = vmatprep.subr.mxu0 0.0
  %3165 = vmatpush1.msra.mxu0 %v3125
  %3166 = vmatprep.subr.mxu0 0.0
  %3167 = vmatpush2.msra.mxu0 0.0
  %3168 = vmatprep.subr.mxu0 0.0
  %3169 = vmatpush2.msra.mxu0 0.0
  %3170 = vmatprep.subr.mxu0 0.0
  %3171 = vmatpush2.msra.mxu0 0.0
  %3172 = vmatprep.subr.mxu0 0.0
  %3173 = vmatpush2.msra.mxu0 0.0
  %3174 = vmatprep.subr.mxu0 0.0
  %3175 = vmatpush2.msra.mxu0 0.0
  %3176 = vmatprep.subr.mxu0 0.0
  %3177 = vmatpush2.msra.mxu0 0.0
  %3178 = vmatprep.subr.mxu0 0.0
  %3179 = vmatpush2.msra.mxu0 0.0
  %3180 = vmatprep.subr.mxu0 0.0
  %3181 = vmatpush2.msra.mxu0 0.0
  %3182 = vmatprep.subr.mxu0 0.0
  %3183 = vmatpush2.msra.mxu0 0.0
  %3184 = vmatprep.subr.mxu0 0.0
  %3185 = vmatpush2.msra.mxu0 0.0
  %3186 = vmatprep.subr.mxu0 0.0
  %3187 = vmatpush2.msra.mxu0 0.0
  %3188 = vmatprep.subr.mxu0 0.0
  %3189 = vmatpush2.msra.mxu0 0.0
  %3190 = vmatprep.subr.mxu0 0.0
  %3191 = vmatpush2.msra.mxu0 0.0
  %3192 = vmatprep.subr.mxu0 0.0
  %3193 = vmatpush2.msra.mxu0 0.0
  %3194 = vmatprep.subr.mxu0 0.0
  %3195 = vmatpush2.msra.mxu0 0.0
  %3196 = vmatprep.subr.mxu0 0.0
  %3197 = vmatpush2.msra.mxu0 0.0
  %3198 = vmatprep.mubr.f32.mxu0 0.0
  %3199 = vmatmul.mubr.f32.gmra.mxu0 %v3132
  %v3200 = vpop.f32.mrf.mxu0
  %v3201 = vadd.f32 0.0, %v3200
  %v3202 = vpop.f32.mrf.mxu0
  %3203 = vdwg.mxu0
  %v3204 = vadd.f32 %v3121, %v3201
  %v3205 = vld [vmem:[#allocation3 + $0x6] sm:$0x3]
  %v3206 = vld [vmem:[%s4 + $0x90] sm:$0xff]
  %v3207 = vld [vmem:[%s4 + $0x98] sm:$0xff]
  %v3208 = vld [vmem:[%s4 + $0xa0] sm:$0xff]
  %v3209 = vld [vmem:[%s4 + $0xa8] sm:$0xff]
  %v3210 = vld [vmem:[%s4 + $0xb0] sm:$0xff]
  %v3211 = vld [vmem:[%s4 + $0xb8] sm:$0xff]
  %v3213 = vsel %vm2961, %v3205, 0
  %3215 = vmatprep.subr.mxu0 0.0
  %3216 = vmatpush1.msra.mxu0 0.0
  %3217 = vmatprep.subr.mxu0 0.0
  %3218 = vmatpush1.msra.mxu0 0.0
  %3219 = vmatprep.subr.mxu0 0.0
  %3220 = vmatpush1.msra.mxu0 0.0
  %3221 = vmatprep.subr.mxu0 0.0
  %3222 = vmatpush1.msra.mxu0 0.0
  %3223 = vmatprep.subr.mxu0 0.0
  %3224 = vmatpush1.msra.mxu0 0.0
  %3225 = vmatprep.subr.mxu0 0.0
  %3226 = vmatpush1.msra.mxu0 0.0
  %3227 = vmatprep.subr.mxu0 0.0
  %3228 = vmatpush1.msra.mxu0 0.0
  %3229 = vmatprep.subr.mxu0 0.0
  %3230 = vmatpush1.msra.mxu0 0.0
  %3231 = vmatprep.subr.mxu0 0.0
  %3232 = vmatpush1.msra.mxu0 0.0
  %3233 = vmatprep.subr.mxu0 0.0
  %3234 = vmatpush1.msra.mxu0 0.0
  %3235 = vmatprep.subr.mxu0 0.0
  %3236 = vmatpush1.msra.mxu0 %v3211
  %3237 = vmatprep.subr.mxu0 0.0
  %3238 = vmatpush1.msra.mxu0 %v3210
  %3239 = vmatprep.subr.mxu0 0.0
  %3240 = vmatpush1.msra.mxu0 %v3209
  %3241 = vmatprep.subr.mxu0 0.0
  %3242 = vmatpush1.msra.mxu0 %v3208
  %3243 = vmatprep.subr.mxu0 0.0
  %3244 = vmatpush1.msra.mxu0 %v3207
  %3245 = vmatprep.subr.mxu0 0.0
  %3246 = vmatpush1.msra.mxu0 %v3206
  %3247 = vmatprep.subr.mxu0 0.0
  %3248 = vmatpush2.msra.mxu0 0.0
  %3249 = vmatprep.subr.mxu0 0.0
  %3250 = vmatpush2.msra.mxu0 0.0
  %3251 = vmatprep.subr.mxu0 0.0
  %3252 = vmatpush2.msra.mxu0 0.0
  %3253 = vmatprep.subr.mxu0 0.0
  %3254 = vmatpush2.msra.mxu0 0.0
  %3255 = vmatprep.subr.mxu0 0.0
  %3256 = vmatpush2.msra.mxu0 0.0
  %3257 = vmatprep.subr.mxu0 0.0
  %3258 = vmatpush2.msra.mxu0 0.0
  %3259 = vmatprep.subr.mxu0 0.0
  %3260 = vmatpush2.msra.mxu0 0.0
  %3261 = vmatprep.subr.mxu0 0.0
  %3262 = vmatpush2.msra.mxu0 0.0
  %3263 = vmatprep.subr.mxu0 0.0
  %3264 = vmatpush2.msra.mxu0 0.0
  %3265 = vmatprep.subr.mxu0 0.0
  %3266 = vmatpush2.msra.mxu0 0.0
  %3267 = vmatprep.subr.mxu0 0.0
  %3268 = vmatpush2.msra.mxu0 0.0
  %3269 = vmatprep.subr.mxu0 0.0
  %3270 = vmatpush2.msra.mxu0 0.0
  %3271 = vmatprep.subr.mxu0 0.0
  %3272 = vmatpush2.msra.mxu0 0.0
  %3273 = vmatprep.subr.mxu0 0.0
  %3274 = vmatpush2.msra.mxu0 0.0
  %3275 = vmatprep.subr.mxu0 0.0
  %3276 = vmatpush2.msra.mxu0 0.0
  %3277 = vmatprep.subr.mxu0 0.0
  %3278 = vmatpush2.msra.mxu0 0.0
  %3279 = vmatprep.mubr.f32.mxu0 0.0
  %3280 = vmatmul.mubr.f32.gmra.mxu0 %v3213
  %v3281 = vpop.f32.mrf.mxu0
  %v3282 = vadd.f32 0.0, %v3281
  %v3283 = vpop.f32.mrf.mxu0
  %3284 = vdwg.mxu0
  %v3285 = vadd.f32 %v3204, %v3282
  %v3286 = vld [vmem:[#allocation3 + $0x8] sm:$0x3]
  %v3287 = vld [vmem:[%s4 + $0xc0] sm:$0xff]
  %v3288 = vld [vmem:[%s4 + $0xc8] sm:$0xff]
  %v3289 = vld [vmem:[%s4 + $0xd0] sm:$0xff]
  %v3290 = vld [vmem:[%s4 + $0xd8] sm:$0xff]
  %v3291 = vld [vmem:[%s4 + $0xe0] sm:$0xff]
  %v3292 = vld [vmem:[%s4 + $0xe8] sm:$0xff]
  %v3294 = vsel %vm2961, %v3286, 0
  %3296 = vmatprep.subr.mxu0 0.0
  %3297 = vmatpush1.msra.mxu0 0.0
  %3298 = vmatprep.subr.mxu0 0.0
  %3299 = vmatpush1.msra.mxu0 0.0
  %3300 = vmatprep.subr.mxu0 0.0
  %3301 = vmatpush1.msra.mxu0 0.0
  %3302 = vmatprep.subr.mxu0 0.0
  %3303 = vmatpush1.msra.mxu0 0.0
  %3304 = vmatprep.subr.mxu0 0.0
  %3305 = vmatpush1.msra.mxu0 0.0
  %3306 = vmatprep.subr.mxu0 0.0
  %3307 = vmatpush1.msra.mxu0 0.0
  %3308 = vmatprep.subr.mxu0 0.0
  %3309 = vmatpush1.msra.mxu0 0.0
  %3310 = vmatprep.subr.mxu0 0.0
  %3311 = vmatpush1.msra.mxu0 0.0
  %3312 = vmatprep.subr.mxu0 0.0
  %3313 = vmatpush1.msra.mxu0 0.0
  %3314 = vmatprep.subr.mxu0 0.0
  %3315 = vmatpush1.msra.mxu0 0.0
  %3316 = vmatprep.subr.mxu0 0.0
  %3317 = vmatpush1.msra.mxu0 %v3292
  %3318 = vmatprep.subr.mxu0 0.0
  %3319 = vmatpush1.msra.mxu0 %v3291
  %3320 = vmatprep.subr.mxu0 0.0
  %3321 = vmatpush1.msra.mxu0 %v3290
  %3322 = vmatprep.subr.mxu0 0.0
  %3323 = vmatpush1.msra.mxu0 %v3289
  %3324 = vmatprep.subr.mxu0 0.0
  %3325 = vmatpush1.msra.mxu0 %v3288
  %3326 = vmatprep.subr.mxu0 0.0
  %3327 = vmatpush1.msra.mxu0 %v3287
  %3328 = vmatprep.subr.mxu0 0.0
  %3329 = vmatpush2.msra.mxu0 0.0
  %3330 = vmatprep.subr.mxu0 0.0
  %3331 = vmatpush2.msra.mxu0 0.0
  %3332 = vmatprep.subr.mxu0 0.0
  %3333 = vmatpush2.msra.mxu0 0.0
  %3334 = vmatprep.subr.mxu0 0.0
  %3335 = vmatpush2.msra.mxu0 0.0
  %3336 = vmatprep.subr.mxu0 0.0
  %3337 = vmatpush2.msra.mxu0 0.0
  %3338 = vmatprep.subr.mxu0 0.0
  %3339 = vmatpush2.msra.mxu0 0.0
  %3340 = vmatprep.subr.mxu0 0.0
  %3341 = vmatpush2.msra.mxu0 0.0
  %3342 = vmatprep.subr.mxu0 0.0
  %3343 = vmatpush2.msra.mxu0 0.0
  %3344 = vmatprep.subr.mxu0 0.0
  %3345 = vmatpush2.msra.mxu0 0.0
  %3346 = vmatprep.subr.mxu0 0.0
  %3347 = vmatpush2.msra.mxu0 0.0
  %3348 = vmatprep.subr.mxu0 0.0
  %3349 = vmatpush2.msra.mxu0 0.0
  %3350 = vmatprep.subr.mxu0 0.0
  %3351 = vmatpush2.msra.mxu0 0.0
  %3352 = vmatprep.subr.mxu0 0.0
  %3353 = vmatpush2.msra.mxu0 0.0
  %3354 = vmatprep.subr.mxu0 0.0
  %3355 = vmatpush2.msra.mxu0 0.0
  %3356 = vmatprep.subr.mxu0 0.0
  %3357 = vmatpush2.msra.mxu0 0.0
  %3358 = vmatprep.subr.mxu0 0.0
  %3359 = vmatpush2.msra.mxu0 0.0
  %3360 = vmatprep.mubr.f32.mxu0 0.0
  %3361 = vmatmul.mubr.f32.gmra.mxu0 %v3294
  %v3362 = vpop.f32.mrf.mxu0
  %v3363 = vadd.f32 0.0, %v3362
  %v3364 = vpop.f32.mrf.mxu0
  %3365 = vdwg.mxu0
  %v3366 = vadd.f32 %v3285, %v3363
  %v3367 = vld [vmem:[#allocation3 + $0xa] sm:$0x3]
  %v3368 = vld [vmem:[%s4 + $0xf0] sm:$0xff]
  %v3369 = vld [vmem:[%s4 + $0xf8] sm:$0xff]
  %v3370 = vld [vmem:[%s4 + $0x100] sm:$0xff]
  %v3371 = vld [vmem:[%s4 + $0x108] sm:$0xff]
  %v3372 = vld [vmem:[%s4 + $0x110] sm:$0xff]
  %v3373 = vld [vmem:[%s4 + $0x118] sm:$0xff]
  %v3375 = vsel %vm2961, %v3367, 0
  %3377 = vmatprep.subr.mxu0 0.0
  %3378 = vmatpush1.msra.mxu0 0.0
  %3379 = vmatprep.subr.mxu0 0.0
  %3380 = vmatpush1.msra.mxu0 0.0
  %3381 = vmatprep.subr.mxu0 0.0
  %3382 = vmatpush1.msra.mxu0 0.0
  %3383 = vmatprep.subr.mxu0 0.0
  %3384 = vmatpush1.msra.mxu0 0.0
  %3385 = vmatprep.subr.mxu0 0.0
  %3386 = vmatpush1.msra.mxu0 0.0
  %3387 = vmatprep.subr.mxu0 0.0
  %3388 = vmatpush1.msra.mxu0 0.0
  %3389 = vmatprep.subr.mxu0 0.0
  %3390 = vmatpush1.msra.mxu0 0.0
  %3391 = vmatprep.subr.mxu0 0.0
  %3392 = vmatpush1.msra.mxu0 0.0
  %3393 = vmatprep.subr.mxu0 0.0
  %3394 = vmatpush1.msra.mxu0 0.0
  %3395 = vmatprep.subr.mxu0 0.0
  %3396 = vmatpush1.msra.mxu0 0.0
  %3397 = vmatprep.subr.mxu0 0.0
  %3398 = vmatpush1.msra.mxu0 %v3373
  %3399 = vmatprep.subr.mxu0 0.0
  %3400 = vmatpush1.msra.mxu0 %v3372
  %3401 = vmatprep.subr.mxu0 0.0
  %3402 = vmatpush1.msra.mxu0 %v3371
  %3403 = vmatprep.subr.mxu0 0.0
  %3404 = vmatpush1.msra.mxu0 %v3370
  %3405 = vmatprep.subr.mxu0 0.0
  %3406 = vmatpush1.msra.mxu0 %v3369
  %3407 = vmatprep.subr.mxu0 0.0
  %3408 = vmatpush1.msra.mxu0 %v3368
  %3409 = vmatprep.subr.mxu0 0.0
  %3410 = vmatpush2.msra.mxu0 0.0
  %3411 = vmatprep.subr.mxu0 0.0
  %3412 = vmatpush2.msra.mxu0 0.0
  %3413 = vmatprep.subr.mxu0 0.0
  %3414 = vmatpush2.msra.mxu0 0.0
  %3415 = vmatprep.subr.mxu0 0.0
  %3416 = vmatpush2.msra.mxu0 0.0
  %3417 = vmatprep.subr.mxu0 0.0
  %3418 = vmatpush2.msra.mxu0 0.0
  %3419 = vmatprep.subr.mxu0 0.0
  %3420 = vmatpush2.msra.mxu0 0.0
  %3421 = vmatprep.subr.mxu0 0.0
  %3422 = vmatpush2.msra.mxu0 0.0
  %3423 = vmatprep.subr.mxu0 0.0
  %3424 = vmatpush2.msra.mxu0 0.0
  %3425 = vmatprep.subr.mxu0 0.0
  %3426 = vmatpush2.msra.mxu0 0.0
  %3427 = vmatprep.subr.mxu0 0.0
  %3428 = vmatpush2.msra.mxu0 0.0
  %3429 = vmatprep.subr.mxu0 0.0
  %3430 = vmatpush2.msra.mxu0 0.0
  %3431 = vmatprep.subr.mxu0 0.0
  %3432 = vmatpush2.msra.mxu0 0.0
  %3433 = vmatprep.subr.mxu0 0.0
  %3434 = vmatpush2.msra.mxu0 0.0
  %3435 = vmatprep.subr.mxu0 0.0
  %3436 = vmatpush2.msra.mxu0 0.0
  %3437 = vmatprep.subr.mxu0 0.0
  %3438 = vmatpush2.msra.mxu0 0.0
  %3439 = vmatprep.subr.mxu0 0.0
  %3440 = vmatpush2.msra.mxu0 0.0
  %3441 = vmatprep.mubr.f32.mxu0 0.0
  %3442 = vmatmul.mubr.f32.gmra.mxu0 %v3375
  %v3443 = vpop.f32.mrf.mxu0
  %v3444 = vadd.f32 0.0, %v3443
  %v3445 = vpop.f32.mrf.mxu0
  %3446 = vdwg.mxu0
  %v3447 = vadd.f32 %v3366, %v3444
  %v3448 = vld [vmem:[#allocation3 + $0xc] sm:$0x3]
  %v3449 = vld [vmem:[%s4 + $0x120] sm:$0xff]
  %v3450 = vld [vmem:[%s4 + $0x128] sm:$0xff]
  %v3451 = vld [vmem:[%s4 + $0x130] sm:$0xff]
  %v3452 = vld [vmem:[%s4 + $0x138] sm:$0xff]
  %v3453 = vld [vmem:[%s4 + $0x140] sm:$0xff]
  %v3454 = vld [vmem:[%s4 + $0x148] sm:$0xff]
  %v3456 = vsel %vm2961, %v3448, 0
  %3458 = vmatprep.subr.mxu0 0.0
  %3459 = vmatpush1.msra.mxu0 0.0
  %3460 = vmatprep.subr.mxu0 0.0
  %3461 = vmatpush1.msra.mxu0 0.0
  %3462 = vmatprep.subr.mxu0 0.0
  %3463 = vmatpush1.msra.mxu0 0.0
  %3464 = vmatprep.subr.mxu0 0.0
  %3465 = vmatpush1.msra.mxu0 0.0
  %3466 = vmatprep.subr.mxu0 0.0
  %3467 = vmatpush1.msra.mxu0 0.0
  %3468 = vmatprep.subr.mxu0 0.0
  %3469 = vmatpush1.msra.mxu0 0.0
  %3470 = vmatprep.subr.mxu0 0.0
  %3471 = vmatpush1.msra.mxu0 0.0
  %3472 = vmatprep.subr.mxu0 0.0
  %3473 = vmatpush1.msra.mxu0 0.0
  %3474 = vmatprep.subr.mxu0 0.0
  %3475 = vmatpush1.msra.mxu0 0.0
  %3476 = vmatprep.subr.mxu0 0.0
  %3477 = vmatpush1.msra.mxu0 0.0
  %3478 = vmatprep.subr.mxu0 0.0
  %3479 = vmatpush1.msra.mxu0 %v3454
  %3480 = vmatprep.subr.mxu0 0.0
  %3481 = vmatpush1.msra.mxu0 %v3453
  %3482 = vmatprep.subr.mxu0 0.0
  %3483 = vmatpush1.msra.mxu0 %v3452
  %3484 = vmatprep.subr.mxu0 0.0
  %3485 = vmatpush1.msra.mxu0 %v3451
  %3486 = vmatprep.subr.mxu0 0.0
  %3487 = vmatpush1.msra.mxu0 %v3450
  %3488 = vmatprep.subr.mxu0 0.0
  %3489 = vmatpush1.msra.mxu0 %v3449
  %3490 = vmatprep.subr.mxu0 0.0
  %3491 = vmatpush2.msra.mxu0 0.0
  %3492 = vmatprep.subr.mxu0 0.0
  %3493 = vmatpush2.msra.mxu0 0.0
  %3494 = vmatprep.subr.mxu0 0.0
  %3495 = vmatpush2.msra.mxu0 0.0
  %3496 = vmatprep.subr.mxu0 0.0
  %3497 = vmatpush2.msra.mxu0 0.0
  %3498 = vmatprep.subr.mxu0 0.0
  %3499 = vmatpush2.msra.mxu0 0.0
  %3500 = vmatprep.subr.mxu0 0.0
  %3501 = vmatpush2.msra.mxu0 0.0
  %3502 = vmatprep.subr.mxu0 0.0
  %3503 = vmatpush2.msra.mxu0 0.0
  %3504 = vmatprep.subr.mxu0 0.0
  %3505 = vmatpush2.msra.mxu0 0.0
  %3506 = vmatprep.subr.mxu0 0.0
  %3507 = vmatpush2.msra.mxu0 0.0
  %3508 = vmatprep.subr.mxu0 0.0
  %3509 = vmatpush2.msra.mxu0 0.0
  %3510 = vmatprep.subr.mxu0 0.0
  %3511 = vmatpush2.msra.mxu0 0.0
  %3512 = vmatprep.subr.mxu0 0.0
  %3513 = vmatpush2.msra.mxu0 0.0
  %3514 = vmatprep.subr.mxu0 0.0
  %3515 = vmatpush2.msra.mxu0 0.0
  %3516 = vmatprep.subr.mxu0 0.0
  %3517 = vmatpush2.msra.mxu0 0.0
  %3518 = vmatprep.subr.mxu0 0.0
  %3519 = vmatpush2.msra.mxu0 0.0
  %3520 = vmatprep.subr.mxu0 0.0
  %3521 = vmatpush2.msra.mxu0 0.0
  %3522 = vmatprep.mubr.f32.mxu0 0.0
  %3523 = vmatmul.mubr.f32.gmra.mxu0 %v3456
  %v3524 = vpop.f32.mrf.mxu0
  %v3525 = vadd.f32 0.0, %v3524
  %v3526 = vpop.f32.mrf.mxu0
  %3527 = vdwg.mxu0
  %v3528 = vadd.f32 %v3447, %v3525
  %v3529 = vld [vmem:[#allocation3 + $0xe] sm:$0x3]
  %v3530 = vld [vmem:[%s4 + $0x150] sm:$0xff]
  %v3531 = vld [vmem:[%s4 + $0x158] sm:$0xff]
  %v3532 = vld [vmem:[%s4 + $0x160] sm:$0xff]
  %v3533 = vld [vmem:[%s4 + $0x168] sm:$0xff]
  %v3534 = vld [vmem:[%s4 + $0x170] sm:$0xff]
  %v3535 = vld [vmem:[%s4 + $0x178] sm:$0xff]
  %v3537 = vsel %vm2961, %v3529, 0
  %3539 = vmatprep.subr.mxu0 0.0
  %3540 = vmatpush1.msra.mxu0 0.0
  %3541 = vmatprep.subr.mxu0 0.0
  %3542 = vmatpush1.msra.mxu0 0.0
  %3543 = vmatprep.subr.mxu0 0.0
  %3544 = vmatpush1.msra.mxu0 0.0
  %3545 = vmatprep.subr.mxu0 0.0
  %3546 = vmatpush1.msra.mxu0 0.0
  %3547 = vmatprep.subr.mxu0 0.0
  %3548 = vmatpush1.msra.mxu0 0.0
  %3549 = vmatprep.subr.mxu0 0.0
  %3550 = vmatpush1.msra.mxu0 0.0
  %3551 = vmatprep.subr.mxu0 0.0
  %3552 = vmatpush1.msra.mxu0 0.0
  %3553 = vmatprep.subr.mxu0 0.0
  %3554 = vmatpush1.msra.mxu0 0.0
  %3555 = vmatprep.subr.mxu0 0.0
  %3556 = vmatpush1.msra.mxu0 0.0
  %3557 = vmatprep.subr.mxu0 0.0
  %3558 = vmatpush1.msra.mxu0 0.0
  %3559 = vmatprep.subr.mxu0 0.0
  %3560 = vmatpush1.msra.mxu0 %v3535
  %3561 = vmatprep.subr.mxu0 0.0
  %3562 = vmatpush1.msra.mxu0 %v3534
  %3563 = vmatprep.subr.mxu0 0.0
  %3564 = vmatpush1.msra.mxu0 %v3533
  %3565 = vmatprep.subr.mxu0 0.0
  %3566 = vmatpush1.msra.mxu0 %v3532
  %3567 = vmatprep.subr.mxu0 0.0
  %3568 = vmatpush1.msra.mxu0 %v3531
  %3569 = vmatprep.subr.mxu0 0.0
  %3570 = vmatpush1.msra.mxu0 %v3530
  %3571 = vmatprep.subr.mxu0 0.0
  %3572 = vmatpush2.msra.mxu0 0.0
  %3573 = vmatprep.subr.mxu0 0.0
  %3574 = vmatpush2.msra.mxu0 0.0
  %3575 = vmatprep.subr.mxu0 0.0
  %3576 = vmatpush2.msra.mxu0 0.0
  %3577 = vmatprep.subr.mxu0 0.0
  %3578 = vmatpush2.msra.mxu0 0.0
  %3579 = vmatprep.subr.mxu0 0.0
  %3580 = vmatpush2.msra.mxu0 0.0
  %3581 = vmatprep.subr.mxu0 0.0
  %3582 = vmatpush2.msra.mxu0 0.0
  %3583 = vmatprep.subr.mxu0 0.0
  %3584 = vmatpush2.msra.mxu0 0.0
  %3585 = vmatprep.subr.mxu0 0.0
  %3586 = vmatpush2.msra.mxu0 0.0
  %3587 = vmatprep.subr.mxu0 0.0
  %3588 = vmatpush2.msra.mxu0 0.0
  %3589 = vmatprep.subr.mxu0 0.0
  %3590 = vmatpush2.msra.mxu0 0.0
  %3591 = vmatprep.subr.mxu0 0.0
  %3592 = vmatpush2.msra.mxu0 0.0
  %3593 = vmatprep.subr.mxu0 0.0
  %3594 = vmatpush2.msra.mxu0 0.0
  %3595 = vmatprep.subr.mxu0 0.0
  %3596 = vmatpush2.msra.mxu0 0.0
  %3597 = vmatprep.subr.mxu0 0.0
  %3598 = vmatpush2.msra.mxu0 0.0
  %3599 = vmatprep.subr.mxu0 0.0
  %3600 = vmatpush2.msra.mxu0 0.0
  %3601 = vmatprep.subr.mxu0 0.0
  %3602 = vmatpush2.msra.mxu0 0.0
  %3603 = vmatprep.mubr.f32.mxu0 0.0
  %3604 = vmatmul.mubr.f32.gmra.mxu0 %v3537
  %v3605 = vpop.f32.mrf.mxu0
  %v3606 = vadd.f32 0.0, %v3605
  %v3607 = vpop.f32.mrf.mxu0
  %3608 = vdwg.mxu0
  %v3609 = vadd.f32 %v3528, %v3606
  %v3610 = vld [vmem:[%s5] sm:$0x1]
  %v3612 = vlaneseq
  %v3613 = vshrl.u32 %v3612, 7
  %v3614 = vsub.s32 0, %v3613
  %v3615 = vrot.slane %v3610, %v3614
  %v3617 = vadd.f32 %v3609, %v3615
  %v3618 = vmax.f32 %v3617, 0.0
  %v3619 = vld [vmem:[%s6] sm:$0xff]
  %v3620 = vld [vmem:[%s6 + $0x8] sm:$0xff]
  %v3621 = vld [vmem:[%s6 + $0x10] sm:$0xff]
  %v3622 = vld [vmem:[%s6 + $0x18] sm:$0xff]
  %v3623 = vld [vmem:[%s7] sm:$0x1]
  %v3625 = vlaneseq
  %v3626 = vshrl.u32 %v3625, 7
  %v3627 = vsub.s32 0, %v3626
  %v3628 = vrot.slane %v3623, %v3627
  %v3631 = vsel %vm496, %v3618, 0
  %3633 = vmatprep.subr.mxu0 0.0
  %3634 = vmatpush1.msra.mxu0 0.0
  %3635 = vmatprep.subr.mxu0 0.0
  %3636 = vmatpush1.msra.mxu0 0.0
  %3637 = vmatprep.subr.mxu0 0.0
  %3638 = vmatpush1.msra.mxu0 0.0
  %3639 = vmatprep.subr.mxu0 0.0
  %3640 = vmatpush1.msra.mxu0 0.0
  %3641 = vmatprep.subr.mxu0 0.0
  %3642 = vmatpush1.msra.mxu0 0.0
  %3643 = vmatprep.subr.mxu0 0.0
  %3644 = vmatpush1.msra.mxu0 0.0
  %3645 = vmatprep.subr.mxu0 0.0
  %3646 = vmatpush1.msra.mxu0 0.0
  %3647 = vmatprep.subr.mxu0 0.0
  %3648 = vmatpush1.msra.mxu0 0.0
  %3649 = vmatprep.subr.mxu0 0.0
  %3650 = vmatpush1.msra.mxu0 0.0
  %3651 = vmatprep.subr.mxu0 0.0
  %3652 = vmatpush1.msra.mxu0 0.0
  %3653 = vmatprep.subr.mxu0 0.0
  %3654 = vmatpush1.msra.mxu0 0.0
  %3655 = vmatprep.subr.mxu0 0.0
  %3656 = vmatpush1.msra.mxu0 0.0
  %3657 = vmatprep.subr.mxu0 0.0
  %3658 = vmatpush1.msra.mxu0 %v3622
  %3659 = vmatprep.subr.mxu0 0.0
  %3660 = vmatpush1.msra.mxu0 %v3621
  %3661 = vmatprep.subr.mxu0 0.0
  %3662 = vmatpush1.msra.mxu0 %v3620
  %3663 = vmatprep.subr.mxu0 0.0
  %3664 = vmatpush1.msra.mxu0 %v3619
  %3665 = vmatprep.subr.mxu0 0.0
  %3666 = vmatpush2.msra.mxu0 0.0
  %3667 = vmatprep.subr.mxu0 0.0
  %3668 = vmatpush2.msra.mxu0 0.0
  %3669 = vmatprep.subr.mxu0 0.0
  %3670 = vmatpush2.msra.mxu0 0.0
  %3671 = vmatprep.subr.mxu0 0.0
  %3672 = vmatpush2.msra.mxu0 0.0
  %3673 = vmatprep.subr.mxu0 0.0
  %3674 = vmatpush2.msra.mxu0 0.0
  %3675 = vmatprep.subr.mxu0 0.0
  %3676 = vmatpush2.msra.mxu0 0.0
  %3677 = vmatprep.subr.mxu0 0.0
  %3678 = vmatpush2.msra.mxu0 0.0
  %3679 = vmatprep.subr.mxu0 0.0
  %3680 = vmatpush2.msra.mxu0 0.0
  %3681 = vmatprep.subr.mxu0 0.0
  %3682 = vmatpush2.msra.mxu0 0.0
  %3683 = vmatprep.subr.mxu0 0.0
  %3684 = vmatpush2.msra.mxu0 0.0
  %3685 = vmatprep.subr.mxu0 0.0
  %3686 = vmatpush2.msra.mxu0 0.0
  %3687 = vmatprep.subr.mxu0 0.0
  %3688 = vmatpush2.msra.mxu0 0.0
  %3689 = vmatprep.subr.mxu0 0.0
  %3690 = vmatpush2.msra.mxu0 0.0
  %3691 = vmatprep.subr.mxu0 0.0
  %3692 = vmatpush2.msra.mxu0 0.0
  %3693 = vmatprep.subr.mxu0 0.0
  %3694 = vmatpush2.msra.mxu0 0.0
  %3695 = vmatprep.subr.mxu0 0.0
  %3696 = vmatpush2.msra.mxu0 0.0
  %3697 = vmatprep.mubr.f32.mxu0 0.0
  %3698 = vmatmul.mubr.f32.gmra.mxu0 %v3631
  %v3699 = vpop.f32.mrf.mxu0
  %v3700 = vadd.f32 %v3628, %v3699
  %v3701 = vpop.f32.mrf.mxu0
  %3702 = vdwg.mxu0
  %v3703 = vmax.f32 %v3700, 0.0
  %v3704 = vld [vmem:[%s8] sm:$0x1]
  %v3706 = vlaneseq
  %v3707 = vshrl.u32 %v3706, 7
  %v3708 = vsub.s32 0, %v3707
  %v3709 = vrot.slane %v3704, %v3708
  %v3711 = vmul.f32 %v3703, %v3709
  %vm3712 = vcmask 254976
  %v3713 = vsel %vm3712, %v3711, 0.0
  %3714 = vadd.xlane.f32.xlu0 %v3713
  %v3715 = vpop.xlane.xlu0 %3714
  %v3716 = vld [vmem:[#allocation4] sm:$0x1]
  %v3718 = vlaneseq
  %v3719 = vshrl.u32 %v3718, 7
  %v3720 = vsub.s32 0, %v3719
  %v3721 = vrot.slane %v3716, %v3720
  %v3723 = vadd.f32 %v3715, %v3721
  %3725 = vset.pattern.permute.xlu0 0
  %3726 = vperm.xlu0 %3725, %v3723
  %v3727 = vpop.permute.xlu0 %3726
  %3729 = vst [vmem:[%s10] sm:$0x3] %v3727
  // Predicated region
  $region42: #{cnn3d_regression_forward.1} parent=0 // pred_check
    _
  $region43: #{cnn3d_regression_forward.1} parent=0 // pred_check_branch
    %3731 = sbr.rel (0) target = $region45
  $region44: #{cnn3d_regression_forward.1} parent=0 // pred_region
    _
  $region45: #{cnn3d_regression_forward.1} parent=0 // pred_fallthru
    _
  // Predicated region
  $region46: #{cnn3d_regression_forward.1} parent=0 // pred_check
    _
  $region47: #{cnn3d_regression_forward.1} parent=0 // pred_check_branch
    %3733 = sbr.rel (0) target = $region49
  $region48: #{cnn3d_regression_forward.1} parent=0 // pred_region
    _
  $region49: #{cnn3d_regression_forward.1} parent=0 // pred_fallthru
    _

</llo_original>
